<compile_context>
chip_gen: v7x
topology: tpu7x:2x2x1
jax: 0.10.0
libtpu: 0.0.40
codegen_flags: <defaults>
</compile_context>

<pallas_src>
import functools

import jax
import jax.numpy as jnp
import numpy as np
from jax.experimental import pallas as pl
from jax.experimental.pallas import tpu as pltpu


def _cat_embed_kernel(x_ref, w_ref, b_ref, o_ref, *, patch_size, stride, d_in, n_pad):
    """R series per step: out[r, n, :] = bias + sum_k x[r, n*S + k, :] @ W[k]."""
    r_blk = x_ref.shape[0]                       # R series in this grid step
    d_model = w_ref.shape[2]

    # Bias folded into the accumulator init (single write of the output tile later).
    acc = jnp.broadcast_to(b_ref[...].astype(jnp.float32), (r_blk * n_pad, d_model))

    for k in range(patch_size):                  # K is small -> static unroll
        g0 = k // stride                         # group offset of this tap
        p = k % stride                           # phase inside a group
        # Contiguous static slice: rows[r, n, :] == x_series[r, n*stride + k, :]
        rows = x_ref[:, g0:g0 + n_pad, p * d_in:(p + 1) * d_in]   # (R, n_pad, D_in)
        rows = rows.reshape(r_blk * n_pad, d_in)                  # sublane-aligned merge
        acc = acc + jnp.dot(rows, w_ref[k], preferred_element_type=jnp.float32)

    o_ref[...] = acc.reshape(r_blk, n_pad, d_model).astype(o_ref.dtype)


def cat_embedding_forward(x, weight, bias, *, patch_size, stride_size,
                          compute_dtype=jnp.bfloat16):
    """x: (B, T, M, D_in); weight: (d_model, D_in, K); bias: (d_model,).

    Returns (B, M, N, d_model), N = (T - K)//S + 1, matching the PyTorch module.
    """
    B, T, M, D_in = x.shape
    d_model, D_in_w, K = weight.shape
    assert D_in == D_in_w and K == patch_size
    S = stride_size
    N = (T - K) // S + 1
    assert N >= 1

    n_pad = max(8, ((N + 7) // 8) * 8)               # sublane-aligned output rows
    # Groups of S time steps; enough groups so padded output rows stay in bounds.
    G = max(pl.cdiv(T, S), n_pad + (K - 1) // S)
    T_pad = G * S

    BM = B * M
    # Cheap XLA glue: (B,T,M,D) -> (B*M, T, D), zero-pad time, regroup as (G, S*D_in).
    x2 = jnp.transpose(x, (0, 2, 1, 3)).reshape(BM, T, D_in)
    if T_pad > T:
        x2 = jnp.pad(x2, ((0, 0), (0, T_pad - T), (0, 0)))
    x2 = x2.reshape(BM, G, S * D_in).astype(compute_dtype)

    itemsize = jnp.dtype(compute_dtype).itemsize
    # Series per grid step: target ~2 MiB activation block, bounded stacked-GEMM rows.
    per_series_bytes = G * S * D_in * itemsize
    R = max(1, min(BM, (2 * 1024 * 1024) // max(1, per_series_bytes)))
    R = min(R, max(1, 1024 // n_pad))
    BM_pad = pl.cdiv(BM, R) * R
    if BM_pad > BM:
        x2 = jnp.pad(x2, ((0, BM_pad - BM), (0, 0), (0, 0)))

    # Conv1d weight (O, C, K) -> (K, C, O) so w[k] is the (D_in, d_model) tap matrix.
    w_r = jnp.transpose(weight, (2, 1, 0)).astype(compute_dtype)
    b2 = bias.reshape(1, d_model).astype(jnp.float32)

    kernel = functools.partial(_cat_embed_kernel, patch_size=K, stride=S,
                               d_in=D_in, n_pad=n_pad)

    out_dtype = x.dtype
    bytes_accessed = (BM_pad * G * S * D_in * itemsize        # activations (read once)
                      + K * D_in * d_model * itemsize         # resident weight
                      + d_model * 4                           # bias
                      + BM_pad * n_pad * d_model * jnp.dtype(out_dtype).itemsize)

    out = pl.pallas_call(
        kernel,
        out_shape=jax.ShapeDtypeStruct((BM_pad, n_pad, d_model), out_dtype),
        grid_spec=pltpu.PrefetchScalarGridSpec(
            num_scalar_prefetch=0,
            grid=(BM_pad // R,),
            in_specs=[
                pl.BlockSpec((R, G, S * D_in), lambda i: (i, 0, 0)),        # series slab
                pl.BlockSpec((K, D_in, d_model), lambda i: (0, 0, 0)),      # resident W
                pl.BlockSpec((1, d_model), lambda i: (0, 0)),               # resident b
            ],
            out_specs=pl.BlockSpec((R, n_pad, d_model), lambda i: (i, 0, 0)),
        ),
        compiler_params=pltpu.CompilerParams(
            dimension_semantics=("parallel",),   # shard series blocks across TCs on v7x
        ),
        cost_estimate=pl.CostEstimate(
            flops=2 * BM_pad * n_pad * K * D_in * d_model,
            transcendentals=0,
            bytes_accessed=bytes_accessed,
        ),
    )(x2, w_r, b2)

    return out[:BM, :N, :].reshape(B, M, N, d_model)


if __name__ == "__main__":
    # Small shapes consistent with the module (D_in fixed to 1024 by the Conv1d).
    B, T, M, D_in = 2, 8, 3, 1024
    d_model, patch_size, stride_size = 128, 4, 2

    key = jax.random.PRNGKey(0)
    kx, kw, kb = jax.random.split(key, 3)

    x = jax.random.normal(kx, (B, T, M, D_in), dtype=jnp.float32)
    weight = jax.random.normal(kw, (d_model, D_in, patch_size), dtype=jnp.float32) * 0.02
    bias = jax.random.normal(kb, (d_model,), dtype=jnp.float32) * 0.02

    fwd = jax.jit(
        functools.partial(
            cat_embedding_forward, patch_size=patch_size, stride_size=stride_size
        )
    )
    out = jax.block_until_ready(fwd(x, weight, bias))

    # Pure-JAX reference of the same math (conv1d as K tap-GEMMs), using the same
    # bf16-rounded operands as the kernel with f32 accumulation.
    N = (T - patch_size) // stride_size + 1
    x2 = jnp.transpose(x, (0, 2, 1, 3)).reshape(B * M, T, D_in)
    xb = x2.astype(jnp.bfloat16).astype(jnp.float32)
    wb = (jnp.transpose(weight, (2, 1, 0))
          .astype(jnp.bfloat16).astype(jnp.float32))            # (K, D_in, d_model)
    t_idx = jnp.arange(N)[:, None] * stride_size + jnp.arange(patch_size)[None, :]
    patches = xb[:, t_idx, :]                                   # (BM, N, K, D_in)
    ref = jnp.einsum("bnkd,kdo->bno", patches, wb,
                     precision=jax.lax.Precision.HIGHEST) + bias[None, None, :]
    ref = ref.reshape(B, M, N, d_model)

    assert out.shape == (B, M, N, d_model), out.shape
    np.testing.assert_allclose(np.asarray(out), np.asarray(ref), rtol=1e-3, atol=1e-3)
    print("KERNEL_OK")
</pallas_src>

<mosaic_0001>
module attributes {stable_mosaic.version = 11 : i64} {
  func.func @_cat_embed_kernel(%arg0: i32, %arg1: memref<6x9x2048xbf16, #tpu.memory_space<vmem>>, %arg2: memref<4x1024x128xbf16, #tpu.memory_space<vmem>>, %arg3: memref<1x128xf32, #tpu.memory_space<vmem>>, %arg4: memref<6x8x128xf32, #tpu.memory_space<vmem>>) attributes {dimension_semantics = [#tpu.dimension_semantics<parallel>], iteration_bounds = array<i64: 1>, scalar_prefetch = 0 : i64, scratch_operands = 0 : i64, tpu.core_type = #tpu.core_type<tc>, window_params = [{transform_indices = @transform_0, window_bounds = array<i64: 6, 9, 2048>}, {pipeline_mode = #tpu.pipeline_mode<synchronous>, transform_indices = @transform_1, window_bounds = array<i64: 4, 1024, 128>}, {pipeline_mode = #tpu.pipeline_mode<synchronous>, transform_indices = @transform_2, window_bounds = array<i64: 1, 128>}, {transform_indices = @transform_3, window_bounds = array<i64: 6, 8, 128>}]} {
    %c0 = arith.constant 0 : index
    %c0_0 = arith.constant 0 : index
    %0 = vector.load %arg3[%c0, %c0_0] : memref<1x128xf32, #tpu.memory_space<vmem>>, vector<1x128xf32>
    %1 = vector.shape_cast %0 : vector<1x128xf32> to vector<1x128xf32>
    %2 = vector.broadcast %1 : vector<1x128xf32> to vector<48x128xf32>
    %c0_1 = arith.constant 0 : index
    %c0_2 = arith.constant 0 : index
    %c0_3 = arith.constant 0 : index
    %3 = vector.load %arg1[%c0_1, %c0_2, %c0_3] : memref<6x9x2048xbf16, #tpu.memory_space<vmem>>, vector<6x8x1024xbf16>
    %4 = vector.shape_cast %3 : vector<6x8x1024xbf16> to vector<48x1024xbf16>
    %c0_4 = arith.constant 0 : index
    %c0_5 = arith.constant 0 : index
    %c0_6 = arith.constant 0 : index
    %5 = vector.load %arg2[%c0_4, %c0_5, %c0_6] : memref<4x1024x128xbf16, #tpu.memory_space<vmem>>, vector<1x1024x128xbf16>
    %6 = vector.shape_cast %5 : vector<1x1024x128xbf16> to vector<1024x128xbf16>
    %cst = arith.constant dense<0.000000e+00> : vector<48x128xf32>
    %7 = tpu.matmul %4, %6, %cst {dimension_numbers = #tpu.dot_dimension_numbers<[1], [0], [0], [1], [0, 0, 1, 1], [], []>} : vector<48x1024xbf16>, vector<1024x128xbf16>, vector<48x128xf32> -> vector<48x128xf32>
    %8 = arith.addf %2, %7 : vector<48x128xf32>
    %c0_7 = arith.constant 0 : index
    %c0_8 = arith.constant 0 : index
    %c1024 = arith.constant 1024 : index
    %9 = vector.load %arg1[%c0_7, %c0_8, %c1024] : memref<6x9x2048xbf16, #tpu.memory_space<vmem>>, vector<6x8x1024xbf16>
    %10 = vector.shape_cast %9 : vector<6x8x1024xbf16> to vector<48x1024xbf16>
    %c1 = arith.constant 1 : index
    %c0_9 = arith.constant 0 : index
    %c0_10 = arith.constant 0 : index
    %11 = vector.load %arg2[%c1, %c0_9, %c0_10] : memref<4x1024x128xbf16, #tpu.memory_space<vmem>>, vector<1x1024x128xbf16>
    %12 = vector.shape_cast %11 : vector<1x1024x128xbf16> to vector<1024x128xbf16>
    %cst_11 = arith.constant dense<0.000000e+00> : vector<48x128xf32>
    %13 = tpu.matmul %10, %12, %cst_11 {dimension_numbers = #tpu.dot_dimension_numbers<[1], [0], [0], [1], [0, 0, 1, 1], [], []>} : vector<48x1024xbf16>, vector<1024x128xbf16>, vector<48x128xf32> -> vector<48x128xf32>
    %14 = arith.addf %8, %13 : vector<48x128xf32>
    %c0_12 = arith.constant 0 : index
    %c1_13 = arith.constant 1 : index
    %c0_14 = arith.constant 0 : index
    %15 = vector.load %arg1[%c0_12, %c1_13, %c0_14] : memref<6x9x2048xbf16, #tpu.memory_space<vmem>>, vector<6x8x1024xbf16>
    %16 = vector.shape_cast %15 : vector<6x8x1024xbf16> to vector<48x1024xbf16>
    %c2 = arith.constant 2 : index
    %c0_15 = arith.constant 0 : index
    %c0_16 = arith.constant 0 : index
    %17 = vector.load %arg2[%c2, %c0_15, %c0_16] : memref<4x1024x128xbf16, #tpu.memory_space<vmem>>, vector<1x1024x128xbf16>
    %18 = vector.shape_cast %17 : vector<1x1024x128xbf16> to vector<1024x128xbf16>
    %cst_17 = arith.constant dense<0.000000e+00> : vector<48x128xf32>
    %19 = tpu.matmul %16, %18, %cst_17 {dimension_numbers = #tpu.dot_dimension_numbers<[1], [0], [0], [1], [0, 0, 1, 1], [], []>} : vector<48x1024xbf16>, vector<1024x128xbf16>, vector<48x128xf32> -> vector<48x128xf32>
    %20 = arith.addf %14, %19 : vector<48x128xf32>
    %c0_18 = arith.constant 0 : index
    %c1_19 = arith.constant 1 : index
    %c1024_20 = arith.constant 1024 : index
    %21 = vector.load %arg1[%c0_18, %c1_19, %c1024_20] : memref<6x9x2048xbf16, #tpu.memory_space<vmem>>, vector<6x8x1024xbf16>
    %22 = vector.shape_cast %21 : vector<6x8x1024xbf16> to vector<48x1024xbf16>
    %c3 = arith.constant 3 : index
    %c0_21 = arith.constant 0 : index
    %c0_22 = arith.constant 0 : index
    %23 = vector.load %arg2[%c3, %c0_21, %c0_22] : memref<4x1024x128xbf16, #tpu.memory_space<vmem>>, vector<1x1024x128xbf16>
    %24 = vector.shape_cast %23 : vector<1x1024x128xbf16> to vector<1024x128xbf16>
    %cst_23 = arith.constant dense<0.000000e+00> : vector<48x128xf32>
    %25 = tpu.matmul %22, %24, %cst_23 {dimension_numbers = #tpu.dot_dimension_numbers<[1], [0], [0], [1], [0, 0, 1, 1], [], []>} : vector<48x1024xbf16>, vector<1024x128xbf16>, vector<48x128xf32> -> vector<48x128xf32>
    %26 = arith.addf %20, %25 : vector<48x128xf32>
    %27 = vector.shape_cast %26 : vector<48x128xf32> to vector<6x8x128xf32>
    %c0_24 = arith.constant 0 : index
    %c0_25 = arith.constant 0 : index
    %c0_26 = arith.constant 0 : index
    %28 = vector.load %arg4[%c0_24, %c0_25, %c0_26] : memref<6x8x128xf32, #tpu.memory_space<vmem>>, vector<6x8x128xf32>
    tpu.vector_store %arg4[%c0_24, %c0_25, %c0_26], %27 {strides = array<i32>} : memref<6x8x128xf32, #tpu.memory_space<vmem>>, vector<6x8x128xf32>,
    return
  }
  func.func @transform_0(%arg0: i32) -> (i32, i32, i32) {
    %c0_i32 = arith.constant 0 : i32
    %c0_i32_0 = arith.constant 0 : i32
    %c0_i32_1 = arith.constant 0 : i32
    return %arg0, %c0_i32, %c0_i32_0 : i32, i32, i32
  }
  func.func @transform_1(%arg0: i32) -> (i32, i32, i32) {
    %c0_i32 = arith.constant 0 : i32
    %c0_i32_0 = arith.constant 0 : i32
    %c0_i32_1 = arith.constant 0 : i32
    %c0_i32_2 = arith.constant 0 : i32
    return %c0_i32, %c0_i32_0, %c0_i32_1 : i32, i32, i32
  }
  func.func @transform_2(%arg0: i32) -> (i32, i32) {
    %c0_i32 = arith.constant 0 : i32
    %c0_i32_0 = arith.constant 0 : i32
    %c0_i32_1 = arith.constant 0 : i32
    return %c0_i32, %c0_i32_0 : i32, i32
  }
  func.func @transform_3(%arg0: i32) -> (i32, i32, i32) {
    %c0_i32 = arith.constant 0 : i32
    %c0_i32_0 = arith.constant 0 : i32
    %c0_i32_1 = arith.constant 0 : i32
    return %arg0, %c0_i32, %c0_i32_0 : i32, i32, i32
  }
}

</mosaic_0001>

<llo_original>
// kernel: cat_embedding_forward.1
$region0: #{cat_embedding_forward.1}
  #allocation0 [shape = 'u32[]', space=smem, size = 0x4, offset = 0x4, fixed_abs, tag = 'smem constant byte address 0x4 - core index']
  #allocation1 [shape = 'u32[144,128]{1,0:T(1,128)}', space=vmem, size = 0x12000, scoped, tag = 'internal scratch']
  %s0 = inlined_call_operand.vmem [shape: bf16[6,9,2048], index: 0, kind: input, shape index: {}]
  %s1 = inlined_call_operand.vmem [shape: bf16[4,1024,128], index: 1, kind: input, shape index: {}]
  %s2 = inlined_call_operand.vmem [shape: f32[1,128], index: 2, kind: input, shape index: {}]
  %s3 = inlined_call_operand.vmem [shape: f32[6,8,128], index: 3, kind: output, shape index: {}]
  %s4 = sld [smem:[#allocation0]]
  $region22: #{cat_embedding_forward.1} parent=0
    _
  %s6 = ssub.s32 1, %s4
  %s7 = scalar_select 0, %s6, %s4
  // Predicated region
  $region2: #{cat_embedding_forward.1} parent=0 // pred_check
    _
  $region3: #{cat_embedding_forward.1} parent=0 // pred_check_branch
    %9 = sbr.rel (0) target = $region5
  $region4: #{cat_embedding_forward.1} parent=0 // pred_region
    _
  $region5: #{cat_embedding_forward.1} parent=0 // pred_fallthru
    _
  // Predicated region
  $region6: #{cat_embedding_forward.1} parent=0 // pred_check
    _
  $region7: #{cat_embedding_forward.1} parent=0 // pred_check_branch
    %11 = sbr.rel (0) target = $region9
  $region8: #{cat_embedding_forward.1} parent=0 // pred_region
    _
  $region9: #{cat_embedding_forward.1} parent=0 // pred_fallthru
    _
  // Predicated region
  $region10: #{cat_embedding_forward.1} parent=0 // pred_check
    _
  $region11: #{cat_embedding_forward.1} parent=0 // pred_check_branch
    %13 = sbr.rel (0) target = $region13
  $region12: #{cat_embedding_forward.1} parent=0 // pred_region
    _
  $region13: #{cat_embedding_forward.1} parent=0 // pred_fallthru
    _
  %v15 = vld [vmem:[%s2] sm:$0x1]
  %v17 = vlaneseq
  %v18 = vshrl.u32 %v17, 7
  %v19 = vsub.s32 0, %v18
  %v20 = vrot.slane %v15, %v19
  %v22 = vld [vmem:[%s0] sm:$0xff]
  %v23 = vld [vmem:[%s0 + $0x8] sm:$0xff]
  %v24 = vld [vmem:[%s0 + $0x10] sm:$0xff]
  %v25 = vld [vmem:[%s0 + $0x18] sm:$0xff]
  %v26 = vld [vmem:[%s0 + $0x80] sm:$0xff]
  %v27 = vld [vmem:[%s0 + $0x88] sm:$0xff]
  %v28 = vld [vmem:[%s0 + $0x90] sm:$0xff]
  %v29 = vld [vmem:[%s0 + $0x98] sm:$0xff]
  %v30 = vld [vmem:[%s0 + $0x100] sm:$0xff]
  %v31 = vld [vmem:[%s0 + $0x108] sm:$0xff]
  %v32 = vld [vmem:[%s0 + $0x110] sm:$0xff]
  %v33 = vld [vmem:[%s0 + $0x118] sm:$0xff]
  %v34 = vld [vmem:[%s0 + $0x180] sm:$0xff]
  %v35 = vld [vmem:[%s0 + $0x188] sm:$0xff]
  %v36 = vld [vmem:[%s0 + $0x190] sm:$0xff]
  %v37 = vld [vmem:[%s0 + $0x198] sm:$0xff]
  %v38 = vld [vmem:[%s0 + $0x200] sm:$0xff]
  %v39 = vld [vmem:[%s0 + $0x208] sm:$0xff]
  %v40 = vld [vmem:[%s0 + $0x210] sm:$0xff]
  %v41 = vld [vmem:[%s0 + $0x218] sm:$0xff]
  %v42 = vld [vmem:[%s0 + $0x280] sm:$0xff]
  %v43 = vld [vmem:[%s0 + $0x288] sm:$0xff]
  %v44 = vld [vmem:[%s0 + $0x290] sm:$0xff]
  %v45 = vld [vmem:[%s0 + $0x298] sm:$0xff]
  %v46 = vld [vmem:[%s1] sm:$0xf]
  %v47 = vld [vmem:[%s1 + $0x4] sm:$0xf]
  %v48 = vld [vmem:[%s1 + $0x8] sm:$0xf]
  %v49 = vld [vmem:[%s1 + $0xc] sm:$0xf]
  %v50 = vld [vmem:[%s1 + $0x10] sm:$0xf]
  %v51 = vld [vmem:[%s1 + $0x14] sm:$0xf]
  %v52 = vld [vmem:[%s1 + $0x18] sm:$0xf]
  %v53 = vld [vmem:[%s1 + $0x1c] sm:$0xf]
  %v54 = vld [vmem:[%s1 + $0x20] sm:$0xf]
  %v55 = vld [vmem:[%s1 + $0x24] sm:$0xf]
  %v56 = vld [vmem:[%s1 + $0x28] sm:$0xf]
  %v57 = vld [vmem:[%s1 + $0x2c] sm:$0xf]
  %v58 = vld [vmem:[%s1 + $0x30] sm:$0xf]
  %v59 = vld [vmem:[%s1 + $0x34] sm:$0xf]
  %v60 = vld [vmem:[%s1 + $0x38] sm:$0xf]
  %v61 = vld [vmem:[%s1 + $0x3c] sm:$0xf]
  %v62 = vld [vmem:[%s1 + $0x40] sm:$0xf]
  %v63 = vld [vmem:[%s1 + $0x44] sm:$0xf]
  %v64 = vld [vmem:[%s1 + $0x48] sm:$0xf]
  %v65 = vld [vmem:[%s1 + $0x4c] sm:$0xf]
  %v66 = vld [vmem:[%s1 + $0x50] sm:$0xf]
  %v67 = vld [vmem:[%s1 + $0x54] sm:$0xf]
  %v68 = vld [vmem:[%s1 + $0x58] sm:$0xf]
  %v69 = vld [vmem:[%s1 + $0x5c] sm:$0xf]
  %v70 = vld [vmem:[%s1 + $0x60] sm:$0xf]
  %v71 = vld [vmem:[%s1 + $0x64] sm:$0xf]
  %v72 = vld [vmem:[%s1 + $0x68] sm:$0xf]
  %v73 = vld [vmem:[%s1 + $0x6c] sm:$0xf]
  %v74 = vld [vmem:[%s1 + $0x70] sm:$0xf]
  %v75 = vld [vmem:[%s1 + $0x74] sm:$0xf]
  %v76 = vld [vmem:[%s1 + $0x78] sm:$0xf]
  %v77 = vld [vmem:[%s1 + $0x7c] sm:$0xf]
  %v78 = vld [vmem:[%s1 + $0x80] sm:$0xf]
  %v79 = vld [vmem:[%s1 + $0x84] sm:$0xf]
  %v80 = vld [vmem:[%s1 + $0x88] sm:$0xf]
  %v81 = vld [vmem:[%s1 + $0x8c] sm:$0xf]
  %v82 = vld [vmem:[%s1 + $0x90] sm:$0xf]
  %v83 = vld [vmem:[%s1 + $0x94] sm:$0xf]
  %v84 = vld [vmem:[%s1 + $0x98] sm:$0xf]
  %v85 = vld [vmem:[%s1 + $0x9c] sm:$0xf]
  %v86 = vld [vmem:[%s1 + $0xa0] sm:$0xf]
  %v87 = vld [vmem:[%s1 + $0xa4] sm:$0xf]
  %v88 = vld [vmem:[%s1 + $0xa8] sm:$0xf]
  %v89 = vld [vmem:[%s1 + $0xac] sm:$0xf]
  %v90 = vld [vmem:[%s1 + $0xb0] sm:$0xf]
  %v91 = vld [vmem:[%s1 + $0xb4] sm:$0xf]
  %v92 = vld [vmem:[%s1 + $0xb8] sm:$0xf]
  %v93 = vld [vmem:[%s1 + $0xbc] sm:$0xf]
  %v94 = vld [vmem:[%s1 + $0xc0] sm:$0xf]
  %v95 = vld [vmem:[%s1 + $0xc4] sm:$0xf]
  %v96 = vld [vmem:[%s1 + $0xc8] sm:$0xf]
  %v97 = vld [vmem:[%s1 + $0xcc] sm:$0xf]
  %v98 = vld [vmem:[%s1 + $0xd0] sm:$0xf]
  %v99 = vld [vmem:[%s1 + $0xd4] sm:$0xf]
  %v100 = vld [vmem:[%s1 + $0xd8] sm:$0xf]
  %v101 = vld [vmem:[%s1 + $0xdc] sm:$0xf]
  %v102 = vld [vmem:[%s1 + $0xe0] sm:$0xf]
  %v103 = vld [vmem:[%s1 + $0xe4] sm:$0xf]
  %v104 = vld [vmem:[%s1 + $0xe8] sm:$0xf]
  %v105 = vld [vmem:[%s1 + $0xec] sm:$0xf]
  %v106 = vld [vmem:[%s1 + $0xf0] sm:$0xf]
  %v107 = vld [vmem:[%s1 + $0xf4] sm:$0xf]
  %v108 = vld [vmem:[%s1 + $0xf8] sm:$0xf]
  %v109 = vld [vmem:[%s1 + $0xfc] sm:$0xf]
  %v110 = vld [vmem:[%s1 + $0x100] sm:$0xf]
  %v111 = vld [vmem:[%s1 + $0x104] sm:$0xf]
  %v112 = vld [vmem:[%s1 + $0x108] sm:$0xf]
  %v113 = vld [vmem:[%s1 + $0x10c] sm:$0xf]
  %v114 = vld [vmem:[%s1 + $0x110] sm:$0xf]
  %v115 = vld [vmem:[%s1 + $0x114] sm:$0xf]
  %v116 = vld [vmem:[%s1 + $0x118] sm:$0xf]
  %v117 = vld [vmem:[%s1 + $0x11c] sm:$0xf]
  %v118 = vld [vmem:[%s1 + $0x120] sm:$0xf]
  %v119 = vld [vmem:[%s1 + $0x124] sm:$0xf]
  %v120 = vld [vmem:[%s1 + $0x128] sm:$0xf]
  %v121 = vld [vmem:[%s1 + $0x12c] sm:$0xf]
  %v122 = vld [vmem:[%s1 + $0x130] sm:$0xf]
  %v123 = vld [vmem:[%s1 + $0x134] sm:$0xf]
  %v124 = vld [vmem:[%s1 + $0x138] sm:$0xf]
  %v125 = vld [vmem:[%s1 + $0x13c] sm:$0xf]
  %v126 = vld [vmem:[%s1 + $0x140] sm:$0xf]
  %v127 = vld [vmem:[%s1 + $0x144] sm:$0xf]
  %v128 = vld [vmem:[%s1 + $0x148] sm:$0xf]
  %v129 = vld [vmem:[%s1 + $0x14c] sm:$0xf]
  %v130 = vld [vmem:[%s1 + $0x150] sm:$0xf]
  %v131 = vld [vmem:[%s1 + $0x154] sm:$0xf]
  %v132 = vld [vmem:[%s1 + $0x158] sm:$0xf]
  %v133 = vld [vmem:[%s1 + $0x15c] sm:$0xf]
  %v134 = vld [vmem:[%s1 + $0x160] sm:$0xf]
  %v135 = vld [vmem:[%s1 + $0x164] sm:$0xf]
  %v136 = vld [vmem:[%s1 + $0x168] sm:$0xf]
  %v137 = vld [vmem:[%s1 + $0x16c] sm:$0xf]
  %v138 = vld [vmem:[%s1 + $0x170] sm:$0xf]
  %v139 = vld [vmem:[%s1 + $0x174] sm:$0xf]
  %v140 = vld [vmem:[%s1 + $0x178] sm:$0xf]
  %v141 = vld [vmem:[%s1 + $0x17c] sm:$0xf]
  %v142 = vld [vmem:[%s1 + $0x180] sm:$0xf]
  %v143 = vld [vmem:[%s1 + $0x184] sm:$0xf]
  %v144 = vld [vmem:[%s1 + $0x188] sm:$0xf]
  %v145 = vld [vmem:[%s1 + $0x18c] sm:$0xf]
  %v146 = vld [vmem:[%s1 + $0x190] sm:$0xf]
  %v147 = vld [vmem:[%s1 + $0x194] sm:$0xf]
  %v148 = vld [vmem:[%s1 + $0x198] sm:$0xf]
  %v149 = vld [vmem:[%s1 + $0x19c] sm:$0xf]
  %v150 = vld [vmem:[%s1 + $0x1a0] sm:$0xf]
  %v151 = vld [vmem:[%s1 + $0x1a4] sm:$0xf]
  %v152 = vld [vmem:[%s1 + $0x1a8] sm:$0xf]
  %v153 = vld [vmem:[%s1 + $0x1ac] sm:$0xf]
  %v154 = vld [vmem:[%s1 + $0x1b0] sm:$0xf]
  %v155 = vld [vmem:[%s1 + $0x1b4] sm:$0xf]
  %v156 = vld [vmem:[%s1 + $0x1b8] sm:$0xf]
  %v157 = vld [vmem:[%s1 + $0x1bc] sm:$0xf]
  %v158 = vld [vmem:[%s1 + $0x1c0] sm:$0xf]
  %v159 = vld [vmem:[%s1 + $0x1c4] sm:$0xf]
  %v160 = vld [vmem:[%s1 + $0x1c8] sm:$0xf]
  %v161 = vld [vmem:[%s1 + $0x1cc] sm:$0xf]
  %v162 = vld [vmem:[%s1 + $0x1d0] sm:$0xf]
  %v163 = vld [vmem:[%s1 + $0x1d4] sm:$0xf]
  %v164 = vld [vmem:[%s1 + $0x1d8] sm:$0xf]
  %v165 = vld [vmem:[%s1 + $0x1dc] sm:$0xf]
  %v166 = vld [vmem:[%s1 + $0x1e0] sm:$0xf]
  %v167 = vld [vmem:[%s1 + $0x1e4] sm:$0xf]
  %v168 = vld [vmem:[%s1 + $0x1e8] sm:$0xf]
  %v169 = vld [vmem:[%s1 + $0x1ec] sm:$0xf]
  %v170 = vld [vmem:[%s1 + $0x1f0] sm:$0xf]
  %v171 = vld [vmem:[%s1 + $0x1f4] sm:$0xf]
  %v172 = vld [vmem:[%s1 + $0x1f8] sm:$0xf]
  %v173 = vld [vmem:[%s1 + $0x1fc] sm:$0xf]
  %v198 = vunpack.c.l.b16 %v22
  %v199 = vunpack.c.h.b16 %v22
  %v200 = vunpack.c.l.b16 %v23
  %v201 = vunpack.c.h.b16 %v23
  %v202 = vunpack.c.l.b16 %v24
  %v203 = vunpack.c.h.b16 %v24
  %v204 = vunpack.c.l.b16 %v25
  %v205 = vunpack.c.h.b16 %v25
  %v206 = vunpack.c.l.b16 %v26
  %v207 = vunpack.c.h.b16 %v26
  %v208 = vunpack.c.l.b16 %v27
  %v209 = vunpack.c.h.b16 %v27
  %v210 = vunpack.c.l.b16 %v28
  %v211 = vunpack.c.h.b16 %v28
  %v212 = vunpack.c.l.b16 %v29
  %v213 = vunpack.c.h.b16 %v29
  %v214 = vunpack.c.l.b16 %v30
  %v215 = vunpack.c.h.b16 %v30
  %v216 = vunpack.c.l.b16 %v31
  %v217 = vunpack.c.h.b16 %v31
  %v218 = vunpack.c.l.b16 %v32
  %v219 = vunpack.c.h.b16 %v32
  %v220 = vunpack.c.l.b16 %v33
  %v221 = vunpack.c.h.b16 %v33
  %v222 = vunpack.c.l.b16 %v34
  %v223 = vunpack.c.h.b16 %v34
  %v224 = vunpack.c.l.b16 %v35
  %v225 = vunpack.c.h.b16 %v35
  %v226 = vunpack.c.l.b16 %v36
  %v227 = vunpack.c.h.b16 %v36
  %v228 = vunpack.c.l.b16 %v37
  %v229 = vunpack.c.h.b16 %v37
  %v230 = vunpack.c.l.b16 %v38
  %v231 = vunpack.c.h.b16 %v38
  %v232 = vunpack.c.l.b16 %v39
  %v233 = vunpack.c.h.b16 %v39
  %v234 = vunpack.c.l.b16 %v40
  %v235 = vunpack.c.h.b16 %v40
  %v236 = vunpack.c.l.b16 %v41
  %v237 = vunpack.c.h.b16 %v41
  %v238 = vunpack.c.l.b16 %v42
  %v239 = vunpack.c.h.b16 %v42
  %v240 = vunpack.c.l.b16 %v43
  %v241 = vunpack.c.h.b16 %v43
  %v242 = vunpack.c.l.b16 %v44
  %v243 = vunpack.c.h.b16 %v44
  %v244 = vunpack.c.l.b16 %v45
  %v245 = vunpack.c.h.b16 %v45
  %v246 = vpack.c.b16 %v206, %v198
  %v247 = vpack.c.b16 %v207, %v199
  %v248 = vpack.c.b16 %v208, %v200
  %v249 = vpack.c.b16 %v209, %v201
  %v250 = vpack.c.b16 %v210, %v202
  %v251 = vpack.c.b16 %v211, %v203
  %v252 = vpack.c.b16 %v212, %v204
  %v253 = vpack.c.b16 %v213, %v205
  %v254 = vpack.c.b16 %v222, %v214
  %v255 = vpack.c.b16 %v223, %v215
  %v256 = vpack.c.b16 %v224, %v216
  %v257 = vpack.c.b16 %v225, %v217
  %v258 = vpack.c.b16 %v226, %v218
  %v259 = vpack.c.b16 %v227, %v219
  %v260 = vpack.c.b16 %v228, %v220
  %v261 = vpack.c.b16 %v229, %v221
  %v262 = vpack.c.b16 %v238, %v230
  %v263 = vpack.c.b16 %v239, %v231
  %v264 = vpack.c.b16 %v240, %v232
  %v265 = vpack.c.b16 %v241, %v233
  %v266 = vpack.c.b16 %v242, %v234
  %v267 = vpack.c.b16 %v243, %v235
  %v268 = vpack.c.b16 %v244, %v236
  %v269 = vpack.c.b16 %v245, %v237
  %v422 = vunpack.c.l.b16 %v46
  %v423 = vunpack.c.l.b16 %v47
  %v424 = vunpack.c.l.b16 %v48
  %v425 = vunpack.c.l.b16 %v49
  %v426 = vunpack.c.l.b16 %v50
  %v427 = vunpack.c.l.b16 %v51
  %v428 = vunpack.c.l.b16 %v52
  %v429 = vunpack.c.l.b16 %v53
  %v430 = vunpack.c.l.b16 %v54
  %v431 = vunpack.c.l.b16 %v55
  %v432 = vunpack.c.l.b16 %v56
  %v433 = vunpack.c.l.b16 %v57
  %v434 = vunpack.c.l.b16 %v58
  %v435 = vunpack.c.l.b16 %v59
  %v436 = vunpack.c.l.b16 %v60
  %v437 = vunpack.c.l.b16 %v61
  %v438 = vunpack.c.l.b16 %v62
  %v439 = vunpack.c.l.b16 %v63
  %v440 = vunpack.c.l.b16 %v64
  %v441 = vunpack.c.l.b16 %v65
  %v442 = vunpack.c.l.b16 %v66
  %v443 = vunpack.c.l.b16 %v67
  %v444 = vunpack.c.l.b16 %v68
  %v445 = vunpack.c.l.b16 %v69
  %v446 = vunpack.c.l.b16 %v70
  %v447 = vunpack.c.l.b16 %v71
  %v448 = vunpack.c.l.b16 %v72
  %v449 = vunpack.c.l.b16 %v73
  %v450 = vunpack.c.l.b16 %v74
  %v451 = vunpack.c.l.b16 %v75
  %v452 = vunpack.c.l.b16 %v76
  %v453 = vunpack.c.l.b16 %v77
  %v454 = vunpack.c.l.b16 %v78
  %v455 = vunpack.c.l.b16 %v79
  %v456 = vunpack.c.l.b16 %v80
  %v457 = vunpack.c.l.b16 %v81
  %v458 = vunpack.c.l.b16 %v82
  %v459 = vunpack.c.l.b16 %v83
  %v460 = vunpack.c.l.b16 %v84
  %v461 = vunpack.c.l.b16 %v85
  %v462 = vunpack.c.l.b16 %v86
  %v463 = vunpack.c.l.b16 %v87
  %v464 = vunpack.c.l.b16 %v88
  %v465 = vunpack.c.l.b16 %v89
  %v466 = vunpack.c.l.b16 %v90
  %v467 = vunpack.c.l.b16 %v91
  %v468 = vunpack.c.l.b16 %v92
  %v469 = vunpack.c.l.b16 %v93
  %v470 = vunpack.c.l.b16 %v94
  %v471 = vunpack.c.l.b16 %v95
  %v472 = vunpack.c.l.b16 %v96
  %v473 = vunpack.c.l.b16 %v97
  %v474 = vunpack.c.l.b16 %v98
  %v475 = vunpack.c.l.b16 %v99
  %v476 = vunpack.c.l.b16 %v100
  %v477 = vunpack.c.l.b16 %v101
  %v478 = vunpack.c.l.b16 %v102
  %v479 = vunpack.c.l.b16 %v103
  %v480 = vunpack.c.l.b16 %v104
  %v481 = vunpack.c.l.b16 %v105
  %v482 = vunpack.c.l.b16 %v106
  %v483 = vunpack.c.l.b16 %v107
  %v484 = vunpack.c.l.b16 %v108
  %v485 = vunpack.c.l.b16 %v109
  %v486 = vunpack.c.l.b16 %v110
  %v487 = vunpack.c.l.b16 %v111
  %v488 = vunpack.c.l.b16 %v112
  %v489 = vunpack.c.l.b16 %v113
  %v490 = vunpack.c.l.b16 %v114
  %v491 = vunpack.c.l.b16 %v115
  %v492 = vunpack.c.l.b16 %v116
  %v493 = vunpack.c.l.b16 %v117
  %v494 = vunpack.c.l.b16 %v118
  %v495 = vunpack.c.l.b16 %v119
  %v496 = vunpack.c.l.b16 %v120
  %v497 = vunpack.c.l.b16 %v121
  %v498 = vunpack.c.l.b16 %v122
  %v499 = vunpack.c.l.b16 %v123
  %v500 = vunpack.c.l.b16 %v124
  %v501 = vunpack.c.l.b16 %v125
  %v502 = vunpack.c.l.b16 %v126
  %v503 = vunpack.c.l.b16 %v127
  %v504 = vunpack.c.l.b16 %v128
  %v505 = vunpack.c.l.b16 %v129
  %v506 = vunpack.c.l.b16 %v130
  %v507 = vunpack.c.l.b16 %v131
  %v508 = vunpack.c.l.b16 %v132
  %v509 = vunpack.c.l.b16 %v133
  %v510 = vunpack.c.l.b16 %v134
  %v511 = vunpack.c.l.b16 %v135
  %v512 = vunpack.c.l.b16 %v136
  %v513 = vunpack.c.l.b16 %v137
  %v514 = vunpack.c.l.b16 %v138
  %v515 = vunpack.c.l.b16 %v139
  %v516 = vunpack.c.l.b16 %v140
  %v517 = vunpack.c.l.b16 %v141
  %v518 = vunpack.c.l.b16 %v142
  %v519 = vunpack.c.l.b16 %v143
  %v520 = vunpack.c.l.b16 %v144
  %v521 = vunpack.c.l.b16 %v145
  %v522 = vunpack.c.l.b16 %v146
  %v523 = vunpack.c.l.b16 %v147
  %v524 = vunpack.c.l.b16 %v148
  %v525 = vunpack.c.l.b16 %v149
  %v526 = vunpack.c.l.b16 %v150
  %v527 = vunpack.c.l.b16 %v151
  %v528 = vunpack.c.l.b16 %v152
  %v529 = vunpack.c.l.b16 %v153
  %v530 = vunpack.c.l.b16 %v154
  %v531 = vunpack.c.l.b16 %v155
  %v532 = vunpack.c.l.b16 %v156
  %v533 = vunpack.c.l.b16 %v157
  %v534 = vunpack.c.l.b16 %v158
  %v535 = vunpack.c.l.b16 %v159
  %v536 = vunpack.c.l.b16 %v160
  %v537 = vunpack.c.l.b16 %v161
  %v538 = vunpack.c.l.b16 %v162
  %v539 = vunpack.c.l.b16 %v163
  %v540 = vunpack.c.l.b16 %v164
  %v541 = vunpack.c.l.b16 %v165
  %v542 = vunpack.c.l.b16 %v166
  %v543 = vunpack.c.l.b16 %v167
  %v544 = vunpack.c.l.b16 %v168
  %v545 = vunpack.c.l.b16 %v169
  %v546 = vunpack.c.l.b16 %v170
  %v547 = vunpack.c.l.b16 %v171
  %v548 = vunpack.c.l.b16 %v172
  %v549 = vunpack.c.l.b16 %v173
  %v550 = vpack.c.b16 %v423, %v422
  %v551 = vpack.c.b16 %v425, %v424
  %v552 = vpack.c.b16 %v427, %v426
  %v553 = vpack.c.b16 %v429, %v428
  %v554 = vpack.c.b16 %v431, %v430
  %v555 = vpack.c.b16 %v433, %v432
  %v556 = vpack.c.b16 %v435, %v434
  %v557 = vpack.c.b16 %v437, %v436
  %v558 = vpack.c.b16 %v439, %v438
  %v559 = vpack.c.b16 %v441, %v440
  %v560 = vpack.c.b16 %v443, %v442
  %v561 = vpack.c.b16 %v445, %v444
  %v562 = vpack.c.b16 %v447, %v446
  %v563 = vpack.c.b16 %v449, %v448
  %v564 = vpack.c.b16 %v451, %v450
  %v565 = vpack.c.b16 %v453, %v452
  %v566 = vpack.c.b16 %v455, %v454
  %v567 = vpack.c.b16 %v457, %v456
  %v568 = vpack.c.b16 %v459, %v458
  %v569 = vpack.c.b16 %v461, %v460
  %v570 = vpack.c.b16 %v463, %v462
  %v571 = vpack.c.b16 %v465, %v464
  %v572 = vpack.c.b16 %v467, %v466
  %v573 = vpack.c.b16 %v469, %v468
  %v574 = vpack.c.b16 %v471, %v470
  %v575 = vpack.c.b16 %v473, %v472
  %v576 = vpack.c.b16 %v475, %v474
  %v577 = vpack.c.b16 %v477, %v476
  %v578 = vpack.c.b16 %v479, %v478
  %v579 = vpack.c.b16 %v481, %v480
  %v580 = vpack.c.b16 %v483, %v482
  %v581 = vpack.c.b16 %v485, %v484
  %v582 = vpack.c.b16 %v487, %v486
  %v583 = vpack.c.b16 %v489, %v488
  %v584 = vpack.c.b16 %v491, %v490
  %v585 = vpack.c.b16 %v493, %v492
  %v586 = vpack.c.b16 %v495, %v494
  %v587 = vpack.c.b16 %v497, %v496
  %v588 = vpack.c.b16 %v499, %v498
  %v589 = vpack.c.b16 %v501, %v500
  %v590 = vpack.c.b16 %v503, %v502
  %v591 = vpack.c.b16 %v505, %v504
  %v592 = vpack.c.b16 %v507, %v506
  %v593 = vpack.c.b16 %v509, %v508
  %v594 = vpack.c.b16 %v511, %v510
  %v595 = vpack.c.b16 %v513, %v512
  %v596 = vpack.c.b16 %v515, %v514
  %v597 = vpack.c.b16 %v517, %v516
  %v598 = vpack.c.b16 %v519, %v518
  %v599 = vpack.c.b16 %v521, %v520
  %v600 = vpack.c.b16 %v523, %v522
  %v601 = vpack.c.b16 %v525, %v524
  %v602 = vpack.c.b16 %v527, %v526
  %v603 = vpack.c.b16 %v529, %v528
  %v604 = vpack.c.b16 %v531, %v530
  %v605 = vpack.c.b16 %v533, %v532
  %v606 = vpack.c.b16 %v535, %v534
  %v607 = vpack.c.b16 %v537, %v536
  %v608 = vpack.c.b16 %v539, %v538
  %v609 = vpack.c.b16 %v541, %v540
  %v610 = vpack.c.b16 %v543, %v542
  %v611 = vpack.c.b16 %v545, %v544
  %v612 = vpack.c.b16 %v547, %v546
  %v613 = vpack.c.b16 %v549, %v548
  %678 = vmatprep.subr.bf16.mxu0 0
  %679 = vmatpush1.bf16.msra.mxu0 %v550
  %680 = vmatprep.subr.bf16.mxu0 0
  %681 = vmatpush1.bf16.msra.mxu0 %v551
  %682 = vmatprep.subr.bf16.mxu0 0
  %683 = vmatpush1.bf16.msra.mxu0 %v552
  %684 = vmatprep.subr.bf16.mxu0 0
  %685 = vmatpush1.bf16.msra.mxu0 %v553
  %686 = vmatprep.subr.bf16.mxu0 0
  %687 = vmatpush1.bf16.msra.mxu0 %v554
  %688 = vmatprep.subr.bf16.mxu0 0
  %689 = vmatpush1.bf16.msra.mxu0 %v555
  %690 = vmatprep.subr.bf16.mxu0 0
  %691 = vmatpush1.bf16.msra.mxu0 %v556
  %692 = vmatprep.subr.bf16.mxu0 0
  %693 = vmatpush1.bf16.msra.mxu0 %v557
  %694 = vmatprep.subr.bf16.mxu0 0
  %695 = vmatpush1.bf16.msra.mxu0 %v558
  %696 = vmatprep.subr.bf16.mxu0 0
  %697 = vmatpush1.bf16.msra.mxu0 %v559
  %698 = vmatprep.subr.bf16.mxu0 0
  %699 = vmatpush1.bf16.msra.mxu0 %v560
  %700 = vmatprep.subr.bf16.mxu0 0
  %701 = vmatpush1.bf16.msra.mxu0 %v561
  %702 = vmatprep.subr.bf16.mxu0 0
  %703 = vmatpush1.bf16.msra.mxu0 %v562
  %704 = vmatprep.subr.bf16.mxu0 0
  %705 = vmatpush1.bf16.msra.mxu0 %v563
  %706 = vmatprep.subr.bf16.mxu0 0
  %707 = vmatpush1.bf16.msra.mxu0 %v564
  %708 = vmatprep.subr.bf16.mxu0 0
  %709 = vmatpush1.bf16.msra.mxu0 %v565
  %710 = vmatprep.mubr.bf16.mxu0 %v247
  %711 = vmatmul.mubr.bf16.gmra.mrb[0].mxu0 %v246
  %v712 = vpop.f32.mrb[0].mxu0
  %v713 = vadd.f32 0.0, %v712
  %v714 = vpop.f32.mrb[0].mxu0
  %v715 = vpop.f32.mrb[0].mxu0
  %v716 = vadd.f32 0.0, %v715
  %v717 = vpop.f32.mrb[0].mxu0
  %718 = vmatprep.mubr.bf16.mxu0 %v255
  %719 = vmatmul.mubr.bf16.gmra.mrb[0].mxu0 %v254
  %v720 = vpop.f32.mrb[0].mxu0
  %v721 = vadd.f32 0.0, %v720
  %v722 = vpop.f32.mrb[0].mxu0
  %v723 = vpop.f32.mrb[0].mxu0
  %v724 = vadd.f32 0.0, %v723
  %v725 = vpop.f32.mrb[0].mxu0
  %726 = vmatprep.mubr.bf16.mxu0 %v263
  %727 = vmatmul.mubr.bf16.gmra.mrb[0].mxu0 %v262
  %v728 = vpop.f32.mrb[0].mxu0
  %v729 = vadd.f32 0.0, %v728
  %v730 = vpop.f32.mrb[0].mxu0
  %v731 = vpop.f32.mrb[0].mxu0
  %v732 = vadd.f32 0.0, %v731
  %v733 = vpop.f32.mrb[0].mxu0
  %734 = vdwg.mxu0
  %735 = vmatprep.subr.bf16.mxu0 0
  %736 = vmatpush1.bf16.msra.mxu0 %v566
  %737 = vmatprep.subr.bf16.mxu0 0
  %738 = vmatpush1.bf16.msra.mxu0 %v567
  %739 = vmatprep.subr.bf16.mxu0 0
  %740 = vmatpush1.bf16.msra.mxu0 %v568
  %741 = vmatprep.subr.bf16.mxu0 0
  %742 = vmatpush1.bf16.msra.mxu0 %v569
  %743 = vmatprep.subr.bf16.mxu0 0
  %744 = vmatpush1.bf16.msra.mxu0 %v570
  %745 = vmatprep.subr.bf16.mxu0 0
  %746 = vmatpush1.bf16.msra.mxu0 %v571
  %747 = vmatprep.subr.bf16.mxu0 0
  %748 = vmatpush1.bf16.msra.mxu0 %v572
  %749 = vmatprep.subr.bf16.mxu0 0
  %750 = vmatpush1.bf16.msra.mxu0 %v573
  %751 = vmatprep.subr.bf16.mxu0 0
  %752 = vmatpush1.bf16.msra.mxu0 %v574
  %753 = vmatprep.subr.bf16.mxu0 0
  %754 = vmatpush1.bf16.msra.mxu0 %v575
  %755 = vmatprep.subr.bf16.mxu0 0
  %756 = vmatpush1.bf16.msra.mxu0 %v576
  %757 = vmatprep.subr.bf16.mxu0 0
  %758 = vmatpush1.bf16.msra.mxu0 %v577
  %759 = vmatprep.subr.bf16.mxu0 0
  %760 = vmatpush1.bf16.msra.mxu0 %v578
  %761 = vmatprep.subr.bf16.mxu0 0
  %762 = vmatpush1.bf16.msra.mxu0 %v579
  %763 = vmatprep.subr.bf16.mxu0 0
  %764 = vmatpush1.bf16.msra.mxu0 %v580
  %765 = vmatprep.subr.bf16.mxu0 0
  %766 = vmatpush1.bf16.msra.mxu0 %v581
  %767 = vmatprep.mubr.bf16.mxu0 %v249
  %768 = vmatmul.mubr.bf16.gmra.mrb[0].mxu0 %v248
  %v769 = vpop.f32.mrb[0].mxu0
  %v770 = vadd.f32 %v713, %v769
  %v771 = vpop.f32.mrb[0].mxu0
  %v772 = vpop.f32.mrb[0].mxu0
  %v773 = vadd.f32 %v716, %v772
  %v774 = vpop.f32.mrb[0].mxu0
  %775 = vmatprep.mubr.bf16.mxu0 %v257
  %776 = vmatmul.mubr.bf16.gmra.mrb[0].mxu0 %v256
  %v777 = vpop.f32.mrb[0].mxu0
  %v778 = vadd.f32 %v721, %v777
  %v779 = vpop.f32.mrb[0].mxu0
  %v780 = vpop.f32.mrb[0].mxu0
  %v781 = vadd.f32 %v724, %v780
  %v782 = vpop.f32.mrb[0].mxu0
  %783 = vmatprep.mubr.bf16.mxu0 %v265
  %784 = vmatmul.mubr.bf16.gmra.mrb[0].mxu0 %v264
  %v785 = vpop.f32.mrb[0].mxu0
  %v786 = vadd.f32 %v729, %v785
  %v787 = vpop.f32.mrb[0].mxu0
  %v788 = vpop.f32.mrb[0].mxu0
  %v789 = vadd.f32 %v732, %v788
  %v790 = vpop.f32.mrb[0].mxu0
  %791 = vdwg.mxu0
  %792 = vmatprep.subr.bf16.mxu0 0
  %793 = vmatpush1.bf16.msra.mxu0 %v582
  %794 = vmatprep.subr.bf16.mxu0 0
  %795 = vmatpush1.bf16.msra.mxu0 %v583
  %796 = vmatprep.subr.bf16.mxu0 0
  %797 = vmatpush1.bf16.msra.mxu0 %v584
  %798 = vmatprep.subr.bf16.mxu0 0
  %799 = vmatpush1.bf16.msra.mxu0 %v585
  %800 = vmatprep.subr.bf16.mxu0 0
  %801 = vmatpush1.bf16.msra.mxu0 %v586
  %802 = vmatprep.subr.bf16.mxu0 0
  %803 = vmatpush1.bf16.msra.mxu0 %v587
  %804 = vmatprep.subr.bf16.mxu0 0
  %805 = vmatpush1.bf16.msra.mxu0 %v588
  %806 = vmatprep.subr.bf16.mxu0 0
  %807 = vmatpush1.bf16.msra.mxu0 %v589
  %808 = vmatprep.subr.bf16.mxu0 0
  %809 = vmatpush1.bf16.msra.mxu0 %v590
  %810 = vmatprep.subr.bf16.mxu0 0
  %811 = vmatpush1.bf16.msra.mxu0 %v591
  %812 = vmatprep.subr.bf16.mxu0 0
  %813 = vmatpush1.bf16.msra.mxu0 %v592
  %814 = vmatprep.subr.bf16.mxu0 0
  %815 = vmatpush1.bf16.msra.mxu0 %v593
  %816 = vmatprep.subr.bf16.mxu0 0
  %817 = vmatpush1.bf16.msra.mxu0 %v594
  %818 = vmatprep.subr.bf16.mxu0 0
  %819 = vmatpush1.bf16.msra.mxu0 %v595
  %820 = vmatprep.subr.bf16.mxu0 0
  %821 = vmatpush1.bf16.msra.mxu0 %v596
  %822 = vmatprep.subr.bf16.mxu0 0
  %823 = vmatpush1.bf16.msra.mxu0 %v597
  %824 = vmatprep.mubr.bf16.mxu0 %v251
  %825 = vmatmul.mubr.bf16.gmra.mrb[0].mxu0 %v250
  %v826 = vpop.f32.mrb[0].mxu0
  %v827 = vadd.f32 %v770, %v826
  %v828 = vpop.f32.mrb[0].mxu0
  %v829 = vpop.f32.mrb[0].mxu0
  %v830 = vadd.f32 %v773, %v829
  %v831 = vpop.f32.mrb[0].mxu0
  %832 = vmatprep.mubr.bf16.mxu0 %v259
  %833 = vmatmul.mubr.bf16.gmra.mrb[0].mxu0 %v258
  %v834 = vpop.f32.mrb[0].mxu0
  %v835 = vadd.f32 %v778, %v834
  %v836 = vpop.f32.mrb[0].mxu0
  %v837 = vpop.f32.mrb[0].mxu0
  %v838 = vadd.f32 %v781, %v837
  %v839 = vpop.f32.mrb[0].mxu0
  %840 = vmatprep.mubr.bf16.mxu0 %v267
  %841 = vmatmul.mubr.bf16.gmra.mrb[0].mxu0 %v266
  %v842 = vpop.f32.mrb[0].mxu0
  %v843 = vadd.f32 %v786, %v842
  %v844 = vpop.f32.mrb[0].mxu0
  %v845 = vpop.f32.mrb[0].mxu0
  %v846 = vadd.f32 %v789, %v845
  %v847 = vpop.f32.mrb[0].mxu0
  %848 = vdwg.mxu0
  %849 = vmatprep.subr.bf16.mxu0 0
  %850 = vmatpush1.bf16.msra.mxu0 %v598
  %851 = vmatprep.subr.bf16.mxu0 0
  %852 = vmatpush1.bf16.msra.mxu0 %v599
  %853 = vmatprep.subr.bf16.mxu0 0
  %854 = vmatpush1.bf16.msra.mxu0 %v600
  %855 = vmatprep.subr.bf16.mxu0 0
  %856 = vmatpush1.bf16.msra.mxu0 %v601
  %857 = vmatprep.subr.bf16.mxu0 0
  %858 = vmatpush1.bf16.msra.mxu0 %v602
  %859 = vmatprep.subr.bf16.mxu0 0
  %860 = vmatpush1.bf16.msra.mxu0 %v603
  %861 = vmatprep.subr.bf16.mxu0 0
  %862 = vmatpush1.bf16.msra.mxu0 %v604
  %863 = vmatprep.subr.bf16.mxu0 0
  %864 = vmatpush1.bf16.msra.mxu0 %v605
  %865 = vmatprep.subr.bf16.mxu0 0
  %866 = vmatpush1.bf16.msra.mxu0 %v606
  %867 = vmatprep.subr.bf16.mxu0 0
  %868 = vmatpush1.bf16.msra.mxu0 %v607
  %869 = vmatprep.subr.bf16.mxu0 0
  %870 = vmatpush1.bf16.msra.mxu0 %v608
  %871 = vmatprep.subr.bf16.mxu0 0
  %872 = vmatpush1.bf16.msra.mxu0 %v609
  %873 = vmatprep.subr.bf16.mxu0 0
  %874 = vmatpush1.bf16.msra.mxu0 %v610
  %875 = vmatprep.subr.bf16.mxu0 0
  %876 = vmatpush1.bf16.msra.mxu0 %v611
  %877 = vmatprep.subr.bf16.mxu0 0
  %878 = vmatpush1.bf16.msra.mxu0 %v612
  %879 = vmatprep.subr.bf16.mxu0 0
  %880 = vmatpush1.bf16.msra.mxu0 %v613
  %881 = vmatprep.mubr.bf16.mxu0 %v253
  %882 = vmatmul.mubr.bf16.gmra.mrb[0].mxu0 %v252
  %v883 = vpop.f32.mrb[0].mxu0
  %v884 = vadd.f32 %v827, %v883
  %v885 = vpop.f32.mrb[0].mxu0
  %v886 = vpop.f32.mrb[0].mxu0
  %v887 = vadd.f32 %v830, %v886
  %v888 = vpop.f32.mrb[0].mxu0
  %889 = vmatprep.mubr.bf16.mxu0 %v261
  %890 = vmatmul.mubr.bf16.gmra.mrb[0].mxu0 %v260
  %v891 = vpop.f32.mrb[0].mxu0
  %v892 = vadd.f32 %v835, %v891
  %v893 = vpop.f32.mrb[0].mxu0
  %v894 = vpop.f32.mrb[0].mxu0
  %v895 = vadd.f32 %v838, %v894
  %v896 = vpop.f32.mrb[0].mxu0
  %897 = vmatprep.mubr.bf16.mxu0 %v269
  %898 = vmatmul.mubr.bf16.gmra.mrb[0].mxu0 %v268
  %v899 = vpop.f32.mrb[0].mxu0
  %v900 = vadd.f32 %v843, %v899
  %v901 = vpop.f32.mrb[0].mxu0
  %v902 = vpop.f32.mrb[0].mxu0
  %v903 = vadd.f32 %v846, %v902
  %v904 = vpop.f32.mrb[0].mxu0
  %905 = vdwg.mxu0
  %v906 = vadd.f32 %v20, %v884
  %v907 = vadd.f32 %v20, %v887
  %v908 = vadd.f32 %v20, %v892
  %v909 = vadd.f32 %v20, %v895
  %v910 = vadd.f32 %v20, %v900
  %v911 = vadd.f32 %v20, %v903
  %v912 = vld [vmem:[%s0 + $0x20] sm:$0xff]
  %v913 = vld [vmem:[%s0 + $0x28] sm:$0xff]
  %v914 = vld [vmem:[%s0 + $0x30] sm:$0xff]
  %v915 = vld [vmem:[%s0 + $0x38] sm:$0xff]
  %v916 = vld [vmem:[%s0 + $0xa0] sm:$0xff]
  %v917 = vld [vmem:[%s0 + $0xa8] sm:$0xff]
  %v918 = vld [vmem:[%s0 + $0xb0] sm:$0xff]
  %v919 = vld [vmem:[%s0 + $0xb8] sm:$0xff]
  %v920 = vld [vmem:[%s0 + $0x120] sm:$0xff]
  %v921 = vld [vmem:[%s0 + $0x128] sm:$0xff]
  %v922 = vld [vmem:[%s0 + $0x130] sm:$0xff]
  %v923 = vld [vmem:[%s0 + $0x138] sm:$0xff]
  %v924 = vld [vmem:[%s0 + $0x1a0] sm:$0xff]
  %v925 = vld [vmem:[%s0 + $0x1a8] sm:$0xff]
  %v926 = vld [vmem:[%s0 + $0x1b0] sm:$0xff]
  %v927 = vld [vmem:[%s0 + $0x1b8] sm:$0xff]
  %v928 = vld [vmem:[%s0 + $0x220] sm:$0xff]
  %v929 = vld [vmem:[%s0 + $0x228] sm:$0xff]
  %v930 = vld [vmem:[%s0 + $0x230] sm:$0xff]
  %v931 = vld [vmem:[%s0 + $0x238] sm:$0xff]
  %v932 = vld [vmem:[%s0 + $0x2a0] sm:$0xff]
  %v933 = vld [vmem:[%s0 + $0x2a8] sm:$0xff]
  %v934 = vld [vmem:[%s0 + $0x2b0] sm:$0xff]
  %v935 = vld [vmem:[%s0 + $0x2b8] sm:$0xff]
  %s936 = scalar_lea.vmem %s1, 512
  %v937 = vld [vmem:[%s936] sm:$0xf]
  %v938 = vld [vmem:[%s936 + $0x4] sm:$0xf]
  %v939 = vld [vmem:[%s936 + $0x8] sm:$0xf]
  %v940 = vld [vmem:[%s936 + $0xc] sm:$0xf]
  %v941 = vld [vmem:[%s936 + $0x10] sm:$0xf]
  %v942 = vld [vmem:[%s936 + $0x14] sm:$0xf]
  %v943 = vld [vmem:[%s936 + $0x18] sm:$0xf]
  %v944 = vld [vmem:[%s936 + $0x1c] sm:$0xf]
  %v945 = vld [vmem:[%s936 + $0x20] sm:$0xf]
  %v946 = vld [vmem:[%s936 + $0x24] sm:$0xf]
  %v947 = vld [vmem:[%s936 + $0x28] sm:$0xf]
  %v948 = vld [vmem:[%s936 + $0x2c] sm:$0xf]
  %v949 = vld [vmem:[%s936 + $0x30] sm:$0xf]
  %v950 = vld [vmem:[%s936 + $0x34] sm:$0xf]
  %v951 = vld [vmem:[%s936 + $0x38] sm:$0xf]
  %v952 = vld [vmem:[%s936 + $0x3c] sm:$0xf]
  %v953 = vld [vmem:[%s936 + $0x40] sm:$0xf]
  %v954 = vld [vmem:[%s936 + $0x44] sm:$0xf]
  %v955 = vld [vmem:[%s936 + $0x48] sm:$0xf]
  %v956 = vld [vmem:[%s936 + $0x4c] sm:$0xf]
  %v957 = vld [vmem:[%s936 + $0x50] sm:$0xf]
  %v958 = vld [vmem:[%s936 + $0x54] sm:$0xf]
  %v959 = vld [vmem:[%s936 + $0x58] sm:$0xf]
  %v960 = vld [vmem:[%s936 + $0x5c] sm:$0xf]
  %v961 = vld [vmem:[%s936 + $0x60] sm:$0xf]
  %v962 = vld [vmem:[%s936 + $0x64] sm:$0xf]
  %v963 = vld [vmem:[%s936 + $0x68] sm:$0xf]
  %v964 = vld [vmem:[%s936 + $0x6c] sm:$0xf]
  %v965 = vld [vmem:[%s936 + $0x70] sm:$0xf]
  %v966 = vld [vmem:[%s936 + $0x74] sm:$0xf]
  %v967 = vld [vmem:[%s936 + $0x78] sm:$0xf]
  %v968 = vld [vmem:[%s936 + $0x7c] sm:$0xf]
  %v969 = vld [vmem:[%s936 + $0x80] sm:$0xf]
  %v970 = vld [vmem:[%s936 + $0x84] sm:$0xf]
  %v971 = vld [vmem:[%s936 + $0x88] sm:$0xf]
  %v972 = vld [vmem:[%s936 + $0x8c] sm:$0xf]
  %v973 = vld [vmem:[%s936 + $0x90] sm:$0xf]
  %v974 = vld [vmem:[%s936 + $0x94] sm:$0xf]
  %v975 = vld [vmem:[%s936 + $0x98] sm:$0xf]
  %v976 = vld [vmem:[%s936 + $0x9c] sm:$0xf]
  %v977 = vld [vmem:[%s936 + $0xa0] sm:$0xf]
  %v978 = vld [vmem:[%s936 + $0xa4] sm:$0xf]
  %v979 = vld [vmem:[%s936 + $0xa8] sm:$0xf]
  %v980 = vld [vmem:[%s936 + $0xac] sm:$0xf]
  %v981 = vld [vmem:[%s936 + $0xb0] sm:$0xf]
  %v982 = vld [vmem:[%s936 + $0xb4] sm:$0xf]
  %v983 = vld [vmem:[%s936 + $0xb8] sm:$0xf]
  %v984 = vld [vmem:[%s936 + $0xbc] sm:$0xf]
  %v985 = vld [vmem:[%s936 + $0xc0] sm:$0xf]
  %v986 = vld [vmem:[%s936 + $0xc4] sm:$0xf]
  %v987 = vld [vmem:[%s936 + $0xc8] sm:$0xf]
  %v988 = vld [vmem:[%s936 + $0xcc] sm:$0xf]
  %v989 = vld [vmem:[%s936 + $0xd0] sm:$0xf]
  %v990 = vld [vmem:[%s936 + $0xd4] sm:$0xf]
  %v991 = vld [vmem:[%s936 + $0xd8] sm:$0xf]
  %v992 = vld [vmem:[%s936 + $0xdc] sm:$0xf]
  %v993 = vld [vmem:[%s936 + $0xe0] sm:$0xf]
  %v994 = vld [vmem:[%s936 + $0xe4] sm:$0xf]
  %v995 = vld [vmem:[%s936 + $0xe8] sm:$0xf]
  %v996 = vld [vmem:[%s936 + $0xec] sm:$0xf]
  %v997 = vld [vmem:[%s936 + $0xf0] sm:$0xf]
  %v998 = vld [vmem:[%s936 + $0xf4] sm:$0xf]
  %v999 = vld [vmem:[%s936 + $0xf8] sm:$0xf]
  %v1000 = vld [vmem:[%s936 + $0xfc] sm:$0xf]
  %v1001 = vld [vmem:[%s936 + $0x100] sm:$0xf]
  %v1002 = vld [vmem:[%s936 + $0x104] sm:$0xf]
  %v1003 = vld [vmem:[%s936 + $0x108] sm:$0xf]
  %v1004 = vld [vmem:[%s936 + $0x10c] sm:$0xf]
  %v1005 = vld [vmem:[%s936 + $0x110] sm:$0xf]
  %v1006 = vld [vmem:[%s936 + $0x114] sm:$0xf]
  %v1007 = vld [vmem:[%s936 + $0x118] sm:$0xf]
  %v1008 = vld [vmem:[%s936 + $0x11c] sm:$0xf]
  %v1009 = vld [vmem:[%s936 + $0x120] sm:$0xf]
  %v1010 = vld [vmem:[%s936 + $0x124] sm:$0xf]
  %v1011 = vld [vmem:[%s936 + $0x128] sm:$0xf]
  %v1012 = vld [vmem:[%s936 + $0x12c] sm:$0xf]
  %v1013 = vld [vmem:[%s936 + $0x130] sm:$0xf]
  %v1014 = vld [vmem:[%s936 + $0x134] sm:$0xf]
  %v1015 = vld [vmem:[%s936 + $0x138] sm:$0xf]
  %v1016 = vld [vmem:[%s936 + $0x13c] sm:$0xf]
  %v1017 = vld [vmem:[%s936 + $0x140] sm:$0xf]
  %v1018 = vld [vmem:[%s936 + $0x144] sm:$0xf]
  %v1019 = vld [vmem:[%s936 + $0x148] sm:$0xf]
  %v1020 = vld [vmem:[%s936 + $0x14c] sm:$0xf]
  %v1021 = vld [vmem:[%s936 + $0x150] sm:$0xf]
  %v1022 = vld [vmem:[%s936 + $0x154] sm:$0xf]
  %v1023 = vld [vmem:[%s936 + $0x158] sm:$0xf]
  %v1024 = vld [vmem:[%s936 + $0x15c] sm:$0xf]
  %v1025 = vld [vmem:[%s936 + $0x160] sm:$0xf]
  %v1026 = vld [vmem:[%s936 + $0x164] sm:$0xf]
  %v1027 = vld [vmem:[%s936 + $0x168] sm:$0xf]
  %v1028 = vld [vmem:[%s936 + $0x16c] sm:$0xf]
  %v1029 = vld [vmem:[%s936 + $0x170] sm:$0xf]
  %v1030 = vld [vmem:[%s936 + $0x174] sm:$0xf]
  %v1031 = vld [vmem:[%s936 + $0x178] sm:$0xf]
  %v1032 = vld [vmem:[%s936 + $0x17c] sm:$0xf]
  %v1033 = vld [vmem:[%s936 + $0x180] sm:$0xf]
  %v1034 = vld [vmem:[%s936 + $0x184] sm:$0xf]
  %v1035 = vld [vmem:[%s936 + $0x188] sm:$0xf]
  %v1036 = vld [vmem:[%s936 + $0x18c] sm:$0xf]
  %v1037 = vld [vmem:[%s936 + $0x190] sm:$0xf]
  %v1038 = vld [vmem:[%s936 + $0x194] sm:$0xf]
  %v1039 = vld [vmem:[%s936 + $0x198] sm:$0xf]
  %v1040 = vld [vmem:[%s936 + $0x19c] sm:$0xf]
  %v1041 = vld [vmem:[%s936 + $0x1a0] sm:$0xf]
  %v1042 = vld [vmem:[%s936 + $0x1a4] sm:$0xf]
  %v1043 = vld [vmem:[%s936 + $0x1a8] sm:$0xf]
  %v1044 = vld [vmem:[%s936 + $0x1ac] sm:$0xf]
  %v1045 = vld [vmem:[%s936 + $0x1b0] sm:$0xf]
  %v1046 = vld [vmem:[%s936 + $0x1b4] sm:$0xf]
  %v1047 = vld [vmem:[%s936 + $0x1b8] sm:$0xf]
  %v1048 = vld [vmem:[%s936 + $0x1bc] sm:$0xf]
  %v1049 = vld [vmem:[%s936 + $0x1c0] sm:$0xf]
  %v1050 = vld [vmem:[%s936 + $0x1c4] sm:$0xf]
  %v1051 = vld [vmem:[%s936 + $0x1c8] sm:$0xf]
  %v1052 = vld [vmem:[%s936 + $0x1cc] sm:$0xf]
  %v1053 = vld [vmem:[%s936 + $0x1d0] sm:$0xf]
  %v1054 = vld [vmem:[%s936 + $0x1d4] sm:$0xf]
  %v1055 = vld [vmem:[%s936 + $0x1d8] sm:$0xf]
  %v1056 = vld [vmem:[%s936 + $0x1dc] sm:$0xf]
  %v1057 = vld [vmem:[%s936 + $0x1e0] sm:$0xf]
  %v1058 = vld [vmem:[%s936 + $0x1e4] sm:$0xf]
  %v1059 = vld [vmem:[%s936 + $0x1e8] sm:$0xf]
  %v1060 = vld [vmem:[%s936 + $0x1ec] sm:$0xf]
  %v1061 = vld [vmem:[%s936 + $0x1f0] sm:$0xf]
  %v1062 = vld [vmem:[%s936 + $0x1f4] sm:$0xf]
  %v1063 = vld [vmem:[%s936 + $0x1f8] sm:$0xf]
  %v1064 = vld [vmem:[%s936 + $0x1fc] sm:$0xf]
  %v1089 = vunpack.c.l.b16 %v912
  %v1090 = vunpack.c.h.b16 %v912
  %v1091 = vunpack.c.l.b16 %v913
  %v1092 = vunpack.c.h.b16 %v913
  %v1093 = vunpack.c.l.b16 %v914
  %v1094 = vunpack.c.h.b16 %v914
  %v1095 = vunpack.c.l.b16 %v915
  %v1096 = vunpack.c.h.b16 %v915
  %v1097 = vunpack.c.l.b16 %v916
  %v1098 = vunpack.c.h.b16 %v916
  %v1099 = vunpack.c.l.b16 %v917
  %v1100 = vunpack.c.h.b16 %v917
  %v1101 = vunpack.c.l.b16 %v918
  %v1102 = vunpack.c.h.b16 %v918
  %v1103 = vunpack.c.l.b16 %v919
  %v1104 = vunpack.c.h.b16 %v919
  %v1105 = vunpack.c.l.b16 %v920
  %v1106 = vunpack.c.h.b16 %v920
  %v1107 = vunpack.c.l.b16 %v921
  %v1108 = vunpack.c.h.b16 %v921
  %v1109 = vunpack.c.l.b16 %v922
  %v1110 = vunpack.c.h.b16 %v922
  %v1111 = vunpack.c.l.b16 %v923
  %v1112 = vunpack.c.h.b16 %v923
  %v1113 = vunpack.c.l.b16 %v924
  %v1114 = vunpack.c.h.b16 %v924
  %v1115 = vunpack.c.l.b16 %v925
  %v1116 = vunpack.c.h.b16 %v925
  %v1117 = vunpack.c.l.b16 %v926
  %v1118 = vunpack.c.h.b16 %v926
  %v1119 = vunpack.c.l.b16 %v927
  %v1120 = vunpack.c.h.b16 %v927
  %v1121 = vunpack.c.l.b16 %v928
  %v1122 = vunpack.c.h.b16 %v928
  %v1123 = vunpack.c.l.b16 %v929
  %v1124 = vunpack.c.h.b16 %v929
  %v1125 = vunpack.c.l.b16 %v930
  %v1126 = vunpack.c.h.b16 %v930
  %v1127 = vunpack.c.l.b16 %v931
  %v1128 = vunpack.c.h.b16 %v931
  %v1129 = vunpack.c.l.b16 %v932
  %v1130 = vunpack.c.h.b16 %v932
  %v1131 = vunpack.c.l.b16 %v933
  %v1132 = vunpack.c.h.b16 %v933
  %v1133 = vunpack.c.l.b16 %v934
  %v1134 = vunpack.c.h.b16 %v934
  %v1135 = vunpack.c.l.b16 %v935
  %v1136 = vunpack.c.h.b16 %v935
  %v1137 = vpack.c.b16 %v1097, %v1089
  %v1138 = vpack.c.b16 %v1098, %v1090
  %v1139 = vpack.c.b16 %v1099, %v1091
  %v1140 = vpack.c.b16 %v1100, %v1092
  %v1141 = vpack.c.b16 %v1101, %v1093
  %v1142 = vpack.c.b16 %v1102, %v1094
  %v1143 = vpack.c.b16 %v1103, %v1095
  %v1144 = vpack.c.b16 %v1104, %v1096
  %v1145 = vpack.c.b16 %v1113, %v1105
  %v1146 = vpack.c.b16 %v1114, %v1106
  %v1147 = vpack.c.b16 %v1115, %v1107
  %v1148 = vpack.c.b16 %v1116, %v1108
  %v1149 = vpack.c.b16 %v1117, %v1109
  %v1150 = vpack.c.b16 %v1118, %v1110
  %v1151 = vpack.c.b16 %v1119, %v1111
  %v1152 = vpack.c.b16 %v1120, %v1112
  %v1153 = vpack.c.b16 %v1129, %v1121
  %v1154 = vpack.c.b16 %v1130, %v1122
  %v1155 = vpack.c.b16 %v1131, %v1123
  %v1156 = vpack.c.b16 %v1132, %v1124
  %v1157 = vpack.c.b16 %v1133, %v1125
  %v1158 = vpack.c.b16 %v1134, %v1126
  %v1159 = vpack.c.b16 %v1135, %v1127
  %v1160 = vpack.c.b16 %v1136, %v1128
  %v1313 = vunpack.c.l.b16 %v937
  %v1314 = vunpack.c.l.b16 %v938
  %v1315 = vunpack.c.l.b16 %v939
  %v1316 = vunpack.c.l.b16 %v940
  %v1317 = vunpack.c.l.b16 %v941
  %v1318 = vunpack.c.l.b16 %v942
  %v1319 = vunpack.c.l.b16 %v943
  %v1320 = vunpack.c.l.b16 %v944
  %v1321 = vunpack.c.l.b16 %v945
  %v1322 = vunpack.c.l.b16 %v946
  %v1323 = vunpack.c.l.b16 %v947
  %v1324 = vunpack.c.l.b16 %v948
  %v1325 = vunpack.c.l.b16 %v949
  %v1326 = vunpack.c.l.b16 %v950
  %v1327 = vunpack.c.l.b16 %v951
  %v1328 = vunpack.c.l.b16 %v952
  %v1329 = vunpack.c.l.b16 %v953
  %v1330 = vunpack.c.l.b16 %v954
  %v1331 = vunpack.c.l.b16 %v955
  %v1332 = vunpack.c.l.b16 %v956
  %v1333 = vunpack.c.l.b16 %v957
  %v1334 = vunpack.c.l.b16 %v958
  %v1335 = vunpack.c.l.b16 %v959
  %v1336 = vunpack.c.l.b16 %v960
  %v1337 = vunpack.c.l.b16 %v961
  %v1338 = vunpack.c.l.b16 %v962
  %v1339 = vunpack.c.l.b16 %v963
  %v1340 = vunpack.c.l.b16 %v964
  %v1341 = vunpack.c.l.b16 %v965
  %v1342 = vunpack.c.l.b16 %v966
  %v1343 = vunpack.c.l.b16 %v967
  %v1344 = vunpack.c.l.b16 %v968
  %v1345 = vunpack.c.l.b16 %v969
  %v1346 = vunpack.c.l.b16 %v970
  %v1347 = vunpack.c.l.b16 %v971
  %v1348 = vunpack.c.l.b16 %v972
  %v1349 = vunpack.c.l.b16 %v973
  %v1350 = vunpack.c.l.b16 %v974
  %v1351 = vunpack.c.l.b16 %v975
  %v1352 = vunpack.c.l.b16 %v976
  %v1353 = vunpack.c.l.b16 %v977
  %v1354 = vunpack.c.l.b16 %v978
  %v1355 = vunpack.c.l.b16 %v979
  %v1356 = vunpack.c.l.b16 %v980
  %v1357 = vunpack.c.l.b16 %v981
  %v1358 = vunpack.c.l.b16 %v982
  %v1359 = vunpack.c.l.b16 %v983
  %v1360 = vunpack.c.l.b16 %v984
  %v1361 = vunpack.c.l.b16 %v985
  %v1362 = vunpack.c.l.b16 %v986
  %v1363 = vunpack.c.l.b16 %v987
  %v1364 = vunpack.c.l.b16 %v988
  %v1365 = vunpack.c.l.b16 %v989
  %v1366 = vunpack.c.l.b16 %v990
  %v1367 = vunpack.c.l.b16 %v991
  %v1368 = vunpack.c.l.b16 %v992
  %v1369 = vunpack.c.l.b16 %v993
  %v1370 = vunpack.c.l.b16 %v994
  %v1371 = vunpack.c.l.b16 %v995
  %v1372 = vunpack.c.l.b16 %v996
  %v1373 = vunpack.c.l.b16 %v997
  %v1374 = vunpack.c.l.b16 %v998
  %v1375 = vunpack.c.l.b16 %v999
  %v1376 = vunpack.c.l.b16 %v1000
  %v1377 = vunpack.c.l.b16 %v1001
  %v1378 = vunpack.c.l.b16 %v1002
  %v1379 = vunpack.c.l.b16 %v1003
  %v1380 = vunpack.c.l.b16 %v1004
  %v1381 = vunpack.c.l.b16 %v1005
  %v1382 = vunpack.c.l.b16 %v1006
  %v1383 = vunpack.c.l.b16 %v1007
  %v1384 = vunpack.c.l.b16 %v1008
  %v1385 = vunpack.c.l.b16 %v1009
  %v1386 = vunpack.c.l.b16 %v1010
  %v1387 = vunpack.c.l.b16 %v1011
  %v1388 = vunpack.c.l.b16 %v1012
  %v1389 = vunpack.c.l.b16 %v1013
  %v1390 = vunpack.c.l.b16 %v1014
  %v1391 = vunpack.c.l.b16 %v1015
  %v1392 = vunpack.c.l.b16 %v1016
  %v1393 = vunpack.c.l.b16 %v1017
  %v1394 = vunpack.c.l.b16 %v1018
  %v1395 = vunpack.c.l.b16 %v1019
  %v1396 = vunpack.c.l.b16 %v1020
  %v1397 = vunpack.c.l.b16 %v1021
  %v1398 = vunpack.c.l.b16 %v1022
  %v1399 = vunpack.c.l.b16 %v1023
  %v1400 = vunpack.c.l.b16 %v1024
  %v1401 = vunpack.c.l.b16 %v1025
  %v1402 = vunpack.c.l.b16 %v1026
  %v1403 = vunpack.c.l.b16 %v1027
  %v1404 = vunpack.c.l.b16 %v1028
  %v1405 = vunpack.c.l.b16 %v1029
  %v1406 = vunpack.c.l.b16 %v1030
  %v1407 = vunpack.c.l.b16 %v1031
  %v1408 = vunpack.c.l.b16 %v1032
  %v1409 = vunpack.c.l.b16 %v1033
  %v1410 = vunpack.c.l.b16 %v1034
  %v1411 = vunpack.c.l.b16 %v1035
  %v1412 = vunpack.c.l.b16 %v1036
  %v1413 = vunpack.c.l.b16 %v1037
  %v1414 = vunpack.c.l.b16 %v1038
  %v1415 = vunpack.c.l.b16 %v1039
  %v1416 = vunpack.c.l.b16 %v1040
  %v1417 = vunpack.c.l.b16 %v1041
  %v1418 = vunpack.c.l.b16 %v1042
  %v1419 = vunpack.c.l.b16 %v1043
  %v1420 = vunpack.c.l.b16 %v1044
  %v1421 = vunpack.c.l.b16 %v1045
  %v1422 = vunpack.c.l.b16 %v1046
  %v1423 = vunpack.c.l.b16 %v1047
  %v1424 = vunpack.c.l.b16 %v1048
  %v1425 = vunpack.c.l.b16 %v1049
  %v1426 = vunpack.c.l.b16 %v1050
  %v1427 = vunpack.c.l.b16 %v1051
  %v1428 = vunpack.c.l.b16 %v1052
  %v1429 = vunpack.c.l.b16 %v1053
  %v1430 = vunpack.c.l.b16 %v1054
  %v1431 = vunpack.c.l.b16 %v1055
  %v1432 = vunpack.c.l.b16 %v1056
  %v1433 = vunpack.c.l.b16 %v1057
  %v1434 = vunpack.c.l.b16 %v1058
  %v1435 = vunpack.c.l.b16 %v1059
  %v1436 = vunpack.c.l.b16 %v1060
  %v1437 = vunpack.c.l.b16 %v1061
  %v1438 = vunpack.c.l.b16 %v1062
  %v1439 = vunpack.c.l.b16 %v1063
  %v1440 = vunpack.c.l.b16 %v1064
  %v1441 = vpack.c.b16 %v1314, %v1313
  %v1442 = vpack.c.b16 %v1316, %v1315
  %v1443 = vpack.c.b16 %v1318, %v1317
  %v1444 = vpack.c.b16 %v1320, %v1319
  %v1445 = vpack.c.b16 %v1322, %v1321
  %v1446 = vpack.c.b16 %v1324, %v1323
  %v1447 = vpack.c.b16 %v1326, %v1325
  %v1448 = vpack.c.b16 %v1328, %v1327
  %v1449 = vpack.c.b16 %v1330, %v1329
  %v1450 = vpack.c.b16 %v1332, %v1331
  %v1451 = vpack.c.b16 %v1334, %v1333
  %v1452 = vpack.c.b16 %v1336, %v1335
  %v1453 = vpack.c.b16 %v1338, %v1337
  %v1454 = vpack.c.b16 %v1340, %v1339
  %v1455 = vpack.c.b16 %v1342, %v1341
  %v1456 = vpack.c.b16 %v1344, %v1343
  %v1457 = vpack.c.b16 %v1346, %v1345
  %v1458 = vpack.c.b16 %v1348, %v1347
  %v1459 = vpack.c.b16 %v1350, %v1349
  %v1460 = vpack.c.b16 %v1352, %v1351
  %v1461 = vpack.c.b16 %v1354, %v1353
  %v1462 = vpack.c.b16 %v1356, %v1355
  %v1463 = vpack.c.b16 %v1358, %v1357
  %v1464 = vpack.c.b16 %v1360, %v1359
  %v1465 = vpack.c.b16 %v1362, %v1361
  %v1466 = vpack.c.b16 %v1364, %v1363
  %v1467 = vpack.c.b16 %v1366, %v1365
  %v1468 = vpack.c.b16 %v1368, %v1367
  %v1469 = vpack.c.b16 %v1370, %v1369
  %v1470 = vpack.c.b16 %v1372, %v1371
  %v1471 = vpack.c.b16 %v1374, %v1373
  %v1472 = vpack.c.b16 %v1376, %v1375
  %v1473 = vpack.c.b16 %v1378, %v1377
  %v1474 = vpack.c.b16 %v1380, %v1379
  %v1475 = vpack.c.b16 %v1382, %v1381
  %v1476 = vpack.c.b16 %v1384, %v1383
  %v1477 = vpack.c.b16 %v1386, %v1385
  %v1478 = vpack.c.b16 %v1388, %v1387
  %v1479 = vpack.c.b16 %v1390, %v1389
  %v1480 = vpack.c.b16 %v1392, %v1391
  %v1481 = vpack.c.b16 %v1394, %v1393
  %v1482 = vpack.c.b16 %v1396, %v1395
  %v1483 = vpack.c.b16 %v1398, %v1397
  %v1484 = vpack.c.b16 %v1400, %v1399
  %v1485 = vpack.c.b16 %v1402, %v1401
  %v1486 = vpack.c.b16 %v1404, %v1403
  %v1487 = vpack.c.b16 %v1406, %v1405
  %v1488 = vpack.c.b16 %v1408, %v1407
  %v1489 = vpack.c.b16 %v1410, %v1409
  %v1490 = vpack.c.b16 %v1412, %v1411
  %v1491 = vpack.c.b16 %v1414, %v1413
  %v1492 = vpack.c.b16 %v1416, %v1415
  %v1493 = vpack.c.b16 %v1418, %v1417
  %v1494 = vpack.c.b16 %v1420, %v1419
  %v1495 = vpack.c.b16 %v1422, %v1421
  %v1496 = vpack.c.b16 %v1424, %v1423
  %v1497 = vpack.c.b16 %v1426, %v1425
  %v1498 = vpack.c.b16 %v1428, %v1427
  %v1499 = vpack.c.b16 %v1430, %v1429
  %v1500 = vpack.c.b16 %v1432, %v1431
  %v1501 = vpack.c.b16 %v1434, %v1433
  %v1502 = vpack.c.b16 %v1436, %v1435
  %v1503 = vpack.c.b16 %v1438, %v1437
  %v1504 = vpack.c.b16 %v1440, %v1439
  %1569 = vmatprep.subr.bf16.mxu0 0
  %1570 = vmatpush1.bf16.msra.mxu0 %v1441
  %1571 = vmatprep.subr.bf16.mxu0 0
  %1572 = vmatpush1.bf16.msra.mxu0 %v1442
  %1573 = vmatprep.subr.bf16.mxu0 0
  %1574 = vmatpush1.bf16.msra.mxu0 %v1443
  %1575 = vmatprep.subr.bf16.mxu0 0
  %1576 = vmatpush1.bf16.msra.mxu0 %v1444
  %1577 = vmatprep.subr.bf16.mxu0 0
  %1578 = vmatpush1.bf16.msra.mxu0 %v1445
  %1579 = vmatprep.subr.bf16.mxu0 0
  %1580 = vmatpush1.bf16.msra.mxu0 %v1446
  %1581 = vmatprep.subr.bf16.mxu0 0
  %1582 = vmatpush1.bf16.msra.mxu0 %v1447
  %1583 = vmatprep.subr.bf16.mxu0 0
  %1584 = vmatpush1.bf16.msra.mxu0 %v1448
  %1585 = vmatprep.subr.bf16.mxu0 0
  %1586 = vmatpush1.bf16.msra.mxu0 %v1449
  %1587 = vmatprep.subr.bf16.mxu0 0
  %1588 = vmatpush1.bf16.msra.mxu0 %v1450
  %1589 = vmatprep.subr.bf16.mxu0 0
  %1590 = vmatpush1.bf16.msra.mxu0 %v1451
  %1591 = vmatprep.subr.bf16.mxu0 0
  %1592 = vmatpush1.bf16.msra.mxu0 %v1452
  %1593 = vmatprep.subr.bf16.mxu0 0
  %1594 = vmatpush1.bf16.msra.mxu0 %v1453
  %1595 = vmatprep.subr.bf16.mxu0 0
  %1596 = vmatpush1.bf16.msra.mxu0 %v1454
  %1597 = vmatprep.subr.bf16.mxu0 0
  %1598 = vmatpush1.bf16.msra.mxu0 %v1455
  %1599 = vmatprep.subr.bf16.mxu0 0
  %1600 = vmatpush1.bf16.msra.mxu0 %v1456
  %1601 = vmatprep.mubr.bf16.mxu0 %v1138
  %1602 = vmatmul.mubr.bf16.gmra.mrb[0].mxu0 %v1137
  %v1603 = vpop.f32.mrb[0].mxu0
  %v1604 = vadd.f32 0.0, %v1603
  %v1605 = vpop.f32.mrb[0].mxu0
  %v1606 = vpop.f32.mrb[0].mxu0
  %v1607 = vadd.f32 0.0, %v1606
  %v1608 = vpop.f32.mrb[0].mxu0
  %1609 = vmatprep.mubr.bf16.mxu0 %v1146
  %1610 = vmatmul.mubr.bf16.gmra.mrb[0].mxu0 %v1145
  %v1611 = vpop.f32.mrb[0].mxu0
  %v1612 = vadd.f32 0.0, %v1611
  %v1613 = vpop.f32.mrb[0].mxu0
  %v1614 = vpop.f32.mrb[0].mxu0
  %v1615 = vadd.f32 0.0, %v1614
  %v1616 = vpop.f32.mrb[0].mxu0
  %1617 = vmatprep.mubr.bf16.mxu0 %v1154
  %1618 = vmatmul.mubr.bf16.gmra.mrb[0].mxu0 %v1153
  %v1619 = vpop.f32.mrb[0].mxu0
  %v1620 = vadd.f32 0.0, %v1619
  %v1621 = vpop.f32.mrb[0].mxu0
  %v1622 = vpop.f32.mrb[0].mxu0
  %v1623 = vadd.f32 0.0, %v1622
  %v1624 = vpop.f32.mrb[0].mxu0
  %1625 = vdwg.mxu0
  %1626 = vmatprep.subr.bf16.mxu0 0
  %1627 = vmatpush1.bf16.msra.mxu0 %v1457
  %1628 = vmatprep.subr.bf16.mxu0 0
  %1629 = vmatpush1.bf16.msra.mxu0 %v1458
  %1630 = vmatprep.subr.bf16.mxu0 0
  %1631 = vmatpush1.bf16.msra.mxu0 %v1459
  %1632 = vmatprep.subr.bf16.mxu0 0
  %1633 = vmatpush1.bf16.msra.mxu0 %v1460
  %1634 = vmatprep.subr.bf16.mxu0 0
  %1635 = vmatpush1.bf16.msra.mxu0 %v1461
  %1636 = vmatprep.subr.bf16.mxu0 0
  %1637 = vmatpush1.bf16.msra.mxu0 %v1462
  %1638 = vmatprep.subr.bf16.mxu0 0
  %1639 = vmatpush1.bf16.msra.mxu0 %v1463
  %1640 = vmatprep.subr.bf16.mxu0 0
  %1641 = vmatpush1.bf16.msra.mxu0 %v1464
  %1642 = vmatprep.subr.bf16.mxu0 0
  %1643 = vmatpush1.bf16.msra.mxu0 %v1465
  %1644 = vmatprep.subr.bf16.mxu0 0
  %1645 = vmatpush1.bf16.msra.mxu0 %v1466
  %1646 = vmatprep.subr.bf16.mxu0 0
  %1647 = vmatpush1.bf16.msra.mxu0 %v1467
  %1648 = vmatprep.subr.bf16.mxu0 0
  %1649 = vmatpush1.bf16.msra.mxu0 %v1468
  %1650 = vmatprep.subr.bf16.mxu0 0
  %1651 = vmatpush1.bf16.msra.mxu0 %v1469
  %1652 = vmatprep.subr.bf16.mxu0 0
  %1653 = vmatpush1.bf16.msra.mxu0 %v1470
  %1654 = vmatprep.subr.bf16.mxu0 0
  %1655 = vmatpush1.bf16.msra.mxu0 %v1471
  %1656 = vmatprep.subr.bf16.mxu0 0
  %1657 = vmatpush1.bf16.msra.mxu0 %v1472
  %1658 = vmatprep.mubr.bf16.mxu0 %v1140
  %1659 = vmatmul.mubr.bf16.gmra.mrb[0].mxu0 %v1139
  %v1660 = vpop.f32.mrb[0].mxu0
  %v1661 = vadd.f32 %v1604, %v1660
  %v1662 = vpop.f32.mrb[0].mxu0
  %v1663 = vpop.f32.mrb[0].mxu0
  %v1664 = vadd.f32 %v1607, %v1663
  %v1665 = vpop.f32.mrb[0].mxu0
  %1666 = vmatprep.mubr.bf16.mxu0 %v1148
  %1667 = vmatmul.mubr.bf16.gmra.mrb[0].mxu0 %v1147
  %v1668 = vpop.f32.mrb[0].mxu0
  %v1669 = vadd.f32 %v1612, %v1668
  %v1670 = vpop.f32.mrb[0].mxu0
  %v1671 = vpop.f32.mrb[0].mxu0
  %v1672 = vadd.f32 %v1615, %v1671
  %v1673 = vpop.f32.mrb[0].mxu0
  %1674 = vmatprep.mubr.bf16.mxu0 %v1156
  %1675 = vmatmul.mubr.bf16.gmra.mrb[0].mxu0 %v1155
  %v1676 = vpop.f32.mrb[0].mxu0
  %v1677 = vadd.f32 %v1620, %v1676
  %v1678 = vpop.f32.mrb[0].mxu0
  %v1679 = vpop.f32.mrb[0].mxu0
  %v1680 = vadd.f32 %v1623, %v1679
  %v1681 = vpop.f32.mrb[0].mxu0
  %1682 = vdwg.mxu0
  %1683 = vmatprep.subr.bf16.mxu0 0
  %1684 = vmatpush1.bf16.msra.mxu0 %v1473
  %1685 = vmatprep.subr.bf16.mxu0 0
  %1686 = vmatpush1.bf16.msra.mxu0 %v1474
  %1687 = vmatprep.subr.bf16.mxu0 0
  %1688 = vmatpush1.bf16.msra.mxu0 %v1475
  %1689 = vmatprep.subr.bf16.mxu0 0
  %1690 = vmatpush1.bf16.msra.mxu0 %v1476
  %1691 = vmatprep.subr.bf16.mxu0 0
  %1692 = vmatpush1.bf16.msra.mxu0 %v1477
  %1693 = vmatprep.subr.bf16.mxu0 0
  %1694 = vmatpush1.bf16.msra.mxu0 %v1478
  %1695 = vmatprep.subr.bf16.mxu0 0
  %1696 = vmatpush1.bf16.msra.mxu0 %v1479
  %1697 = vmatprep.subr.bf16.mxu0 0
  %1698 = vmatpush1.bf16.msra.mxu0 %v1480
  %1699 = vmatprep.subr.bf16.mxu0 0
  %1700 = vmatpush1.bf16.msra.mxu0 %v1481
  %1701 = vmatprep.subr.bf16.mxu0 0
  %1702 = vmatpush1.bf16.msra.mxu0 %v1482
  %1703 = vmatprep.subr.bf16.mxu0 0
  %1704 = vmatpush1.bf16.msra.mxu0 %v1483
  %1705 = vmatprep.subr.bf16.mxu0 0
  %1706 = vmatpush1.bf16.msra.mxu0 %v1484
  %1707 = vmatprep.subr.bf16.mxu0 0
  %1708 = vmatpush1.bf16.msra.mxu0 %v1485
  %1709 = vmatprep.subr.bf16.mxu0 0
  %1710 = vmatpush1.bf16.msra.mxu0 %v1486
  %1711 = vmatprep.subr.bf16.mxu0 0
  %1712 = vmatpush1.bf16.msra.mxu0 %v1487
  %1713 = vmatprep.subr.bf16.mxu0 0
  %1714 = vmatpush1.bf16.msra.mxu0 %v1488
  %1715 = vmatprep.mubr.bf16.mxu0 %v1142
  %1716 = vmatmul.mubr.bf16.gmra.mrb[0].mxu0 %v1141
  %v1717 = vpop.f32.mrb[0].mxu0
  %v1718 = vadd.f32 %v1661, %v1717
  %v1719 = vpop.f32.mrb[0].mxu0
  %v1720 = vpop.f32.mrb[0].mxu0
  %v1721 = vadd.f32 %v1664, %v1720
  %v1722 = vpop.f32.mrb[0].mxu0
  %1723 = vmatprep.mubr.bf16.mxu0 %v1150
  %1724 = vmatmul.mubr.bf16.gmra.mrb[0].mxu0 %v1149
  %v1725 = vpop.f32.mrb[0].mxu0
  %v1726 = vadd.f32 %v1669, %v1725
  %v1727 = vpop.f32.mrb[0].mxu0
  %v1728 = vpop.f32.mrb[0].mxu0
  %v1729 = vadd.f32 %v1672, %v1728
  %v1730 = vpop.f32.mrb[0].mxu0
  %1731 = vmatprep.mubr.bf16.mxu0 %v1158
  %1732 = vmatmul.mubr.bf16.gmra.mrb[0].mxu0 %v1157
  %v1733 = vpop.f32.mrb[0].mxu0
  %v1734 = vadd.f32 %v1677, %v1733
  %v1735 = vpop.f32.mrb[0].mxu0
  %v1736 = vpop.f32.mrb[0].mxu0
  %v1737 = vadd.f32 %v1680, %v1736
  %v1738 = vpop.f32.mrb[0].mxu0
  %1739 = vdwg.mxu0
  %1740 = vmatprep.subr.bf16.mxu0 0
  %1741 = vmatpush1.bf16.msra.mxu0 %v1489
  %1742 = vmatprep.subr.bf16.mxu0 0
  %1743 = vmatpush1.bf16.msra.mxu0 %v1490
  %1744 = vmatprep.subr.bf16.mxu0 0
  %1745 = vmatpush1.bf16.msra.mxu0 %v1491
  %1746 = vmatprep.subr.bf16.mxu0 0
  %1747 = vmatpush1.bf16.msra.mxu0 %v1492
  %1748 = vmatprep.subr.bf16.mxu0 0
  %1749 = vmatpush1.bf16.msra.mxu0 %v1493
  %1750 = vmatprep.subr.bf16.mxu0 0
  %1751 = vmatpush1.bf16.msra.mxu0 %v1494
  %1752 = vmatprep.subr.bf16.mxu0 0
  %1753 = vmatpush1.bf16.msra.mxu0 %v1495
  %1754 = vmatprep.subr.bf16.mxu0 0
  %1755 = vmatpush1.bf16.msra.mxu0 %v1496
  %1756 = vmatprep.subr.bf16.mxu0 0
  %1757 = vmatpush1.bf16.msra.mxu0 %v1497
  %1758 = vmatprep.subr.bf16.mxu0 0
  %1759 = vmatpush1.bf16.msra.mxu0 %v1498
  %1760 = vmatprep.subr.bf16.mxu0 0
  %1761 = vmatpush1.bf16.msra.mxu0 %v1499
  %1762 = vmatprep.subr.bf16.mxu0 0
  %1763 = vmatpush1.bf16.msra.mxu0 %v1500
  %1764 = vmatprep.subr.bf16.mxu0 0
  %1765 = vmatpush1.bf16.msra.mxu0 %v1501
  %1766 = vmatprep.subr.bf16.mxu0 0
  %1767 = vmatpush1.bf16.msra.mxu0 %v1502
  %1768 = vmatprep.subr.bf16.mxu0 0
  %1769 = vmatpush1.bf16.msra.mxu0 %v1503
  %1770 = vmatprep.subr.bf16.mxu0 0
  %1771 = vmatpush1.bf16.msra.mxu0 %v1504
  %1772 = vmatprep.mubr.bf16.mxu0 %v1144
  %1773 = vmatmul.mubr.bf16.gmra.mrb[0].mxu0 %v1143
  %v1774 = vpop.f32.mrb[0].mxu0
  %v1775 = vadd.f32 %v1718, %v1774
  %v1776 = vpop.f32.mrb[0].mxu0
  %v1777 = vpop.f32.mrb[0].mxu0
  %v1778 = vadd.f32 %v1721, %v1777
  %v1779 = vpop.f32.mrb[0].mxu0
  %1780 = vmatprep.mubr.bf16.mxu0 %v1152
  %1781 = vmatmul.mubr.bf16.gmra.mrb[0].mxu0 %v1151
  %v1782 = vpop.f32.mrb[0].mxu0
  %v1783 = vadd.f32 %v1726, %v1782
  %v1784 = vpop.f32.mrb[0].mxu0
  %v1785 = vpop.f32.mrb[0].mxu0
  %v1786 = vadd.f32 %v1729, %v1785
  %v1787 = vpop.f32.mrb[0].mxu0
  %1788 = vmatprep.mubr.bf16.mxu0 %v1160
  %1789 = vmatmul.mubr.bf16.gmra.mrb[0].mxu0 %v1159
  %v1790 = vpop.f32.mrb[0].mxu0
  %v1791 = vadd.f32 %v1734, %v1790
  %v1792 = vpop.f32.mrb[0].mxu0
  %v1793 = vpop.f32.mrb[0].mxu0
  %v1794 = vadd.f32 %v1737, %v1793
  %v1795 = vpop.f32.mrb[0].mxu0
  %1796 = vdwg.mxu0
  %v1797 = vadd.f32 %v906, %v1775
  %v1798 = vadd.f32 %v907, %v1778
  %v1799 = vadd.f32 %v908, %v1783
  %v1800 = vadd.f32 %v909, %v1786
  %v1801 = vadd.f32 %v910, %v1791
  %v1802 = vadd.f32 %v911, %v1794
  %v1803 = vld [vmem:[%s0] sm:$0xff]
  %v1804 = vld [vmem:[%s0 + $0x8] sm:$0xff]
  %v1805 = vld [vmem:[%s0 + $0x10] sm:$0xff]
  %v1806 = vld [vmem:[%s0 + $0x18] sm:$0xff]
  %v1807 = vld [vmem:[%s0 + $0x40] sm:$0x11]
  %v1808 = vld [vmem:[%s0 + $0x48] sm:$0x11]
  %v1809 = vld [vmem:[%s0 + $0x50] sm:$0x11]
  %v1810 = vld [vmem:[%s0 + $0x58] sm:$0x11]
  %v1811 = vld [vmem:[%s0 + $0x80] sm:$0xff]
  %v1812 = vld [vmem:[%s0 + $0x88] sm:$0xff]
  %v1813 = vld [vmem:[%s0 + $0x90] sm:$0xff]
  %v1814 = vld [vmem:[%s0 + $0x98] sm:$0xff]
  %v1815 = vld [vmem:[%s0 + $0xc0] sm:$0x11]
  %v1816 = vld [vmem:[%s0 + $0xc8] sm:$0x11]
  %v1817 = vld [vmem:[%s0 + $0xd0] sm:$0x11]
  %v1818 = vld [vmem:[%s0 + $0xd8] sm:$0x11]
  %v1819 = vld [vmem:[%s0 + $0x100] sm:$0xff]
  %v1820 = vld [vmem:[%s0 + $0x108] sm:$0xff]
  %v1821 = vld [vmem:[%s0 + $0x110] sm:$0xff]
  %v1822 = vld [vmem:[%s0 + $0x118] sm:$0xff]
  %v1823 = vld [vmem:[%s0 + $0x140] sm:$0x11]
  %v1824 = vld [vmem:[%s0 + $0x148] sm:$0x11]
  %v1825 = vld [vmem:[%s0 + $0x150] sm:$0x11]
  %v1826 = vld [vmem:[%s0 + $0x158] sm:$0x11]
  %v1827 = vld [vmem:[%s0 + $0x180] sm:$0xff]
  %v1828 = vld [vmem:[%s0 + $0x188] sm:$0xff]
  %v1829 = vld [vmem:[%s0 + $0x190] sm:$0xff]
  %v1830 = vld [vmem:[%s0 + $0x198] sm:$0xff]
  %v1831 = vld [vmem:[%s0 + $0x1c0] sm:$0x11]
  %v1832 = vld [vmem:[%s0 + $0x1c8] sm:$0x11]
  %v1833 = vld [vmem:[%s0 + $0x1d0] sm:$0x11]
  %v1834 = vld [vmem:[%s0 + $0x1d8] sm:$0x11]
  %v1835 = vld [vmem:[%s0 + $0x200] sm:$0xff]
  %v1836 = vld [vmem:[%s0 + $0x208] sm:$0xff]
  %v1837 = vld [vmem:[%s0 + $0x210] sm:$0xff]
  %v1838 = vld [vmem:[%s0 + $0x218] sm:$0xff]
  %v1839 = vld [vmem:[%s0 + $0x240] sm:$0x11]
  %v1840 = vld [vmem:[%s0 + $0x248] sm:$0x11]
  %v1841 = vld [vmem:[%s0 + $0x250] sm:$0x11]
  %v1842 = vld [vmem:[%s0 + $0x258] sm:$0x11]
  %v1843 = vld [vmem:[%s0 + $0x280] sm:$0xff]
  %v1844 = vld [vmem:[%s0 + $0x288] sm:$0xff]
  %v1845 = vld [vmem:[%s0 + $0x290] sm:$0xff]
  %v1846 = vld [vmem:[%s0 + $0x298] sm:$0xff]
  %v1847 = vld [vmem:[%s0 + $0x2c0] sm:$0x11]
  %v1848 = vld [vmem:[%s0 + $0x2c8] sm:$0x11]
  %v1849 = vld [vmem:[%s0 + $0x2d0] sm:$0x11]
  %v1850 = vld [vmem:[%s0 + $0x2d8] sm:$0x11]
  %vm1851 = vsmask.f32 3328
  %vm1852 = vsmask.f32 7440
  %vm1853 = vmor %vm1851, %vm1852
  %v1855 = vshrl.u32 %v1803, 16
  %v1857 = vrot.slane %v1855, 4
  %v1858 = vshll.u32 %v1803, 16
  %v1860 = vrot.slane %v1858, 5
  %v1861 = vor.u32 %v1857, %v1860
  %v1862 = vrot.slane %v1861, 4
  %v1864 = vshll.u32 %v1807, 16
  %v1866 = vrot.slane %v1864, 5
  %v1867 = vsel %vm1853, %v1862, %v1866
  %v1869 = vshrl.u32 %v1804, 16
  %v1871 = vrot.slane %v1869, 4
  %v1872 = vshll.u32 %v1804, 16
  %v1874 = vrot.slane %v1872, 5
  %v1875 = vor.u32 %v1871, %v1874
  %v1876 = vrot.slane %v1875, 4
  %v1878 = vshll.u32 %v1808, 16
  %v1880 = vrot.slane %v1878, 5
  %v1881 = vsel %vm1853, %v1876, %v1880
  %v1883 = vshrl.u32 %v1805, 16
  %v1885 = vrot.slane %v1883, 4
  %v1886 = vshll.u32 %v1805, 16
  %v1888 = vrot.slane %v1886, 5
  %v1889 = vor.u32 %v1885, %v1888
  %v1890 = vrot.slane %v1889, 4
  %v1892 = vshll.u32 %v1809, 16
  %v1894 = vrot.slane %v1892, 5
  %v1895 = vsel %vm1853, %v1890, %v1894
  %v1897 = vshrl.u32 %v1806, 16
  %v1899 = vrot.slane %v1897, 4
  %v1900 = vshll.u32 %v1806, 16
  %v1902 = vrot.slane %v1900, 5
  %v1903 = vor.u32 %v1899, %v1902
  %v1904 = vrot.slane %v1903, 4
  %v1906 = vshll.u32 %v1810, 16
  %v1908 = vrot.slane %v1906, 5
  %v1909 = vsel %vm1853, %v1904, %v1908
  %v1911 = vshrl.u32 %v1811, 16
  %v1913 = vrot.slane %v1911, 4
  %v1914 = vshll.u32 %v1811, 16
  %v1916 = vrot.slane %v1914, 5
  %v1917 = vor.u32 %v1913, %v1916
  %v1918 = vrot.slane %v1917, 4
  %v1920 = vshll.u32 %v1815, 16
  %v1922 = vrot.slane %v1920, 5
  %v1923 = vsel %vm1853, %v1918, %v1922
  %v1925 = vshrl.u32 %v1812, 16
  %v1927 = vrot.slane %v1925, 4
  %v1928 = vshll.u32 %v1812, 16
  %v1930 = vrot.slane %v1928, 5
  %v1931 = vor.u32 %v1927, %v1930
  %v1932 = vrot.slane %v1931, 4
  %v1934 = vshll.u32 %v1816, 16
  %v1936 = vrot.slane %v1934, 5
  %v1937 = vsel %vm1853, %v1932, %v1936
  %v1939 = vshrl.u32 %v1813, 16
  %v1941 = vrot.slane %v1939, 4
  %v1942 = vshll.u32 %v1813, 16
  %v1944 = vrot.slane %v1942, 5
  %v1945 = vor.u32 %v1941, %v1944
  %v1946 = vrot.slane %v1945, 4
  %v1948 = vshll.u32 %v1817, 16
  %v1950 = vrot.slane %v1948, 5
  %v1951 = vsel %vm1853, %v1946, %v1950
  %v1953 = vshrl.u32 %v1814, 16
  %v1955 = vrot.slane %v1953, 4
  %v1956 = vshll.u32 %v1814, 16
  %v1958 = vrot.slane %v1956, 5
  %v1959 = vor.u32 %v1955, %v1958
  %v1960 = vrot.slane %v1959, 4
  %v1962 = vshll.u32 %v1818, 16
  %v1964 = vrot.slane %v1962, 5
  %v1965 = vsel %vm1853, %v1960, %v1964
  %v1967 = vshrl.u32 %v1819, 16
  %v1969 = vrot.slane %v1967, 4
  %v1970 = vshll.u32 %v1819, 16
  %v1972 = vrot.slane %v1970, 5
  %v1973 = vor.u32 %v1969, %v1972
  %v1974 = vrot.slane %v1973, 4
  %v1976 = vshll.u32 %v1823, 16
  %v1978 = vrot.slane %v1976, 5
  %v1979 = vsel %vm1853, %v1974, %v1978
  %v1981 = vshrl.u32 %v1820, 16
  %v1983 = vrot.slane %v1981, 4
  %v1984 = vshll.u32 %v1820, 16
  %v1986 = vrot.slane %v1984, 5
  %v1987 = vor.u32 %v1983, %v1986
  %v1988 = vrot.slane %v1987, 4
  %v1990 = vshll.u32 %v1824, 16
  %v1992 = vrot.slane %v1990, 5
  %v1993 = vsel %vm1853, %v1988, %v1992
  %v1995 = vshrl.u32 %v1821, 16
  %v1997 = vrot.slane %v1995, 4
  %v1998 = vshll.u32 %v1821, 16
  %v2000 = vrot.slane %v1998, 5
  %v2001 = vor.u32 %v1997, %v2000
  %v2002 = vrot.slane %v2001, 4
  %v2004 = vshll.u32 %v1825, 16
  %v2006 = vrot.slane %v2004, 5
  %v2007 = vsel %vm1853, %v2002, %v2006
  %v2009 = vshrl.u32 %v1822, 16
  %v2011 = vrot.slane %v2009, 4
  %v2012 = vshll.u32 %v1822, 16
  %v2014 = vrot.slane %v2012, 5
  %v2015 = vor.u32 %v2011, %v2014
  %v2016 = vrot.slane %v2015, 4
  %v2018 = vshll.u32 %v1826, 16
  %v2020 = vrot.slane %v2018, 5
  %v2021 = vsel %vm1853, %v2016, %v2020
  %v2023 = vshrl.u32 %v1827, 16
  %v2025 = vrot.slane %v2023, 4
  %v2026 = vshll.u32 %v1827, 16
  %v2028 = vrot.slane %v2026, 5
  %v2029 = vor.u32 %v2025, %v2028
  %v2030 = vrot.slane %v2029, 4
  %v2032 = vshll.u32 %v1831, 16
  %v2034 = vrot.slane %v2032, 5
  %v2035 = vsel %vm1853, %v2030, %v2034
  %v2037 = vshrl.u32 %v1828, 16
  %v2039 = vrot.slane %v2037, 4
  %v2040 = vshll.u32 %v1828, 16
  %v2042 = vrot.slane %v2040, 5
  %v2043 = vor.u32 %v2039, %v2042
  %v2044 = vrot.slane %v2043, 4
  %v2046 = vshll.u32 %v1832, 16
  %v2048 = vrot.slane %v2046, 5
  %v2049 = vsel %vm1853, %v2044, %v2048
  %v2051 = vshrl.u32 %v1829, 16
  %v2053 = vrot.slane %v2051, 4
  %v2054 = vshll.u32 %v1829, 16
  %v2056 = vrot.slane %v2054, 5
  %v2057 = vor.u32 %v2053, %v2056
  %v2058 = vrot.slane %v2057, 4
  %v2060 = vshll.u32 %v1833, 16
  %v2062 = vrot.slane %v2060, 5
  %v2063 = vsel %vm1853, %v2058, %v2062
  %v2065 = vshrl.u32 %v1830, 16
  %v2067 = vrot.slane %v2065, 4
  %v2068 = vshll.u32 %v1830, 16
  %v2070 = vrot.slane %v2068, 5
  %v2071 = vor.u32 %v2067, %v2070
  %v2072 = vrot.slane %v2071, 4
  %v2074 = vshll.u32 %v1834, 16
  %v2076 = vrot.slane %v2074, 5
  %v2077 = vsel %vm1853, %v2072, %v2076
  %v2079 = vshrl.u32 %v1835, 16
  %v2081 = vrot.slane %v2079, 4
  %v2082 = vshll.u32 %v1835, 16
  %v2084 = vrot.slane %v2082, 5
  %v2085 = vor.u32 %v2081, %v2084
  %v2086 = vrot.slane %v2085, 4
  %v2088 = vshll.u32 %v1839, 16
  %v2090 = vrot.slane %v2088, 5
  %v2091 = vsel %vm1853, %v2086, %v2090
  %v2093 = vshrl.u32 %v1836, 16
  %v2095 = vrot.slane %v2093, 4
  %v2096 = vshll.u32 %v1836, 16
  %v2098 = vrot.slane %v2096, 5
  %v2099 = vor.u32 %v2095, %v2098
  %v2100 = vrot.slane %v2099, 4
  %v2102 = vshll.u32 %v1840, 16
  %v2104 = vrot.slane %v2102, 5
  %v2105 = vsel %vm1853, %v2100, %v2104
  %v2107 = vshrl.u32 %v1837, 16
  %v2109 = vrot.slane %v2107, 4
  %v2110 = vshll.u32 %v1837, 16
  %v2112 = vrot.slane %v2110, 5
  %v2113 = vor.u32 %v2109, %v2112
  %v2114 = vrot.slane %v2113, 4
  %v2116 = vshll.u32 %v1841, 16
  %v2118 = vrot.slane %v2116, 5
  %v2119 = vsel %vm1853, %v2114, %v2118
  %v2121 = vshrl.u32 %v1838, 16
  %v2123 = vrot.slane %v2121, 4
  %v2124 = vshll.u32 %v1838, 16
  %v2126 = vrot.slane %v2124, 5
  %v2127 = vor.u32 %v2123, %v2126
  %v2128 = vrot.slane %v2127, 4
  %v2130 = vshll.u32 %v1842, 16
  %v2132 = vrot.slane %v2130, 5
  %v2133 = vsel %vm1853, %v2128, %v2132
  %v2135 = vshrl.u32 %v1843, 16
  %v2137 = vrot.slane %v2135, 4
  %v2138 = vshll.u32 %v1843, 16
  %v2140 = vrot.slane %v2138, 5
  %v2141 = vor.u32 %v2137, %v2140
  %v2142 = vrot.slane %v2141, 4
  %v2144 = vshll.u32 %v1847, 16
  %v2146 = vrot.slane %v2144, 5
  %v2147 = vsel %vm1853, %v2142, %v2146
  %v2149 = vshrl.u32 %v1844, 16
  %v2151 = vrot.slane %v2149, 4
  %v2152 = vshll.u32 %v1844, 16
  %v2154 = vrot.slane %v2152, 5
  %v2155 = vor.u32 %v2151, %v2154
  %v2156 = vrot.slane %v2155, 4
  %v2158 = vshll.u32 %v1848, 16
  %v2160 = vrot.slane %v2158, 5
  %v2161 = vsel %vm1853, %v2156, %v2160
  %v2163 = vshrl.u32 %v1845, 16
  %v2165 = vrot.slane %v2163, 4
  %v2166 = vshll.u32 %v1845, 16
  %v2168 = vrot.slane %v2166, 5
  %v2169 = vor.u32 %v2165, %v2168
  %v2170 = vrot.slane %v2169, 4
  %v2172 = vshll.u32 %v1849, 16
  %v2174 = vrot.slane %v2172, 5
  %v2175 = vsel %vm1853, %v2170, %v2174
  %v2177 = vshrl.u32 %v1846, 16
  %v2179 = vrot.slane %v2177, 4
  %v2180 = vshll.u32 %v1846, 16
  %v2182 = vrot.slane %v2180, 5
  %v2183 = vor.u32 %v2179, %v2182
  %v2184 = vrot.slane %v2183, 4
  %v2186 = vshll.u32 %v1850, 16
  %v2188 = vrot.slane %v2186, 5
  %v2189 = vsel %vm1853, %v2184, %v2188
  %s2190 = scalar_lea.vmem %s1, 1024
  %v2191 = vld [vmem:[%s2190] sm:$0xf]
  %v2192 = vld [vmem:[%s2190 + $0x4] sm:$0xf]
  %v2193 = vld [vmem:[%s2190 + $0x8] sm:$0xf]
  %v2194 = vld [vmem:[%s2190 + $0xc] sm:$0xf]
  %v2195 = vld [vmem:[%s2190 + $0x10] sm:$0xf]
  %v2196 = vld [vmem:[%s2190 + $0x14] sm:$0xf]
  %v2197 = vld [vmem:[%s2190 + $0x18] sm:$0xf]
  %v2198 = vld [vmem:[%s2190 + $0x1c] sm:$0xf]
  %v2199 = vld [vmem:[%s2190 + $0x20] sm:$0xf]
  %v2200 = vld [vmem:[%s2190 + $0x24] sm:$0xf]
  %v2201 = vld [vmem:[%s2190 + $0x28] sm:$0xf]
  %v2202 = vld [vmem:[%s2190 + $0x2c] sm:$0xf]
  %v2203 = vld [vmem:[%s2190 + $0x30] sm:$0xf]
  %v2204 = vld [vmem:[%s2190 + $0x34] sm:$0xf]
  %v2205 = vld [vmem:[%s2190 + $0x38] sm:$0xf]
  %v2206 = vld [vmem:[%s2190 + $0x3c] sm:$0xf]
  %v2207 = vld [vmem:[%s2190 + $0x40] sm:$0xf]
  %v2208 = vld [vmem:[%s2190 + $0x44] sm:$0xf]
  %v2209 = vld [vmem:[%s2190 + $0x48] sm:$0xf]
  %v2210 = vld [vmem:[%s2190 + $0x4c] sm:$0xf]
  %v2211 = vld [vmem:[%s2190 + $0x50] sm:$0xf]
  %v2212 = vld [vmem:[%s2190 + $0x54] sm:$0xf]
  %v2213 = vld [vmem:[%s2190 + $0x58] sm:$0xf]
  %v2214 = vld [vmem:[%s2190 + $0x5c] sm:$0xf]
  %v2215 = vld [vmem:[%s2190 + $0x60] sm:$0xf]
  %v2216 = vld [vmem:[%s2190 + $0x64] sm:$0xf]
  %v2217 = vld [vmem:[%s2190 + $0x68] sm:$0xf]
  %v2218 = vld [vmem:[%s2190 + $0x6c] sm:$0xf]
  %v2219 = vld [vmem:[%s2190 + $0x70] sm:$0xf]
  %v2220 = vld [vmem:[%s2190 + $0x74] sm:$0xf]
  %v2221 = vld [vmem:[%s2190 + $0x78] sm:$0xf]
  %v2222 = vld [vmem:[%s2190 + $0x7c] sm:$0xf]
  %v2223 = vld [vmem:[%s2190 + $0x80] sm:$0xf]
  %v2224 = vld [vmem:[%s2190 + $0x84] sm:$0xf]
  %v2225 = vld [vmem:[%s2190 + $0x88] sm:$0xf]
  %v2226 = vld [vmem:[%s2190 + $0x8c] sm:$0xf]
  %v2227 = vld [vmem:[%s2190 + $0x90] sm:$0xf]
  %v2228 = vld [vmem:[%s2190 + $0x94] sm:$0xf]
  %v2229 = vld [vmem:[%s2190 + $0x98] sm:$0xf]
  %v2230 = vld [vmem:[%s2190 + $0x9c] sm:$0xf]
  %v2231 = vld [vmem:[%s2190 + $0xa0] sm:$0xf]
  %v2232 = vld [vmem:[%s2190 + $0xa4] sm:$0xf]
  %v2233 = vld [vmem:[%s2190 + $0xa8] sm:$0xf]
  %v2234 = vld [vmem:[%s2190 + $0xac] sm:$0xf]
  %v2235 = vld [vmem:[%s2190 + $0xb0] sm:$0xf]
  %v2236 = vld [vmem:[%s2190 + $0xb4] sm:$0xf]
  %v2237 = vld [vmem:[%s2190 + $0xb8] sm:$0xf]
  %v2238 = vld [vmem:[%s2190 + $0xbc] sm:$0xf]
  %v2239 = vld [vmem:[%s2190 + $0xc0] sm:$0xf]
  %v2240 = vld [vmem:[%s2190 + $0xc4] sm:$0xf]
  %v2241 = vld [vmem:[%s2190 + $0xc8] sm:$0xf]
  %v2242 = vld [vmem:[%s2190 + $0xcc] sm:$0xf]
  %v2243 = vld [vmem:[%s2190 + $0xd0] sm:$0xf]
  %v2244 = vld [vmem:[%s2190 + $0xd4] sm:$0xf]
  %v2245 = vld [vmem:[%s2190 + $0xd8] sm:$0xf]
  %v2246 = vld [vmem:[%s2190 + $0xdc] sm:$0xf]
  %v2247 = vld [vmem:[%s2190 + $0xe0] sm:$0xf]
  %v2248 = vld [vmem:[%s2190 + $0xe4] sm:$0xf]
  %v2249 = vld [vmem:[%s2190 + $0xe8] sm:$0xf]
  %v2250 = vld [vmem:[%s2190 + $0xec] sm:$0xf]
  %v2251 = vld [vmem:[%s2190 + $0xf0] sm:$0xf]
  %v2252 = vld [vmem:[%s2190 + $0xf4] sm:$0xf]
  %v2253 = vld [vmem:[%s2190 + $0xf8] sm:$0xf]
  %v2254 = vld [vmem:[%s2190 + $0xfc] sm:$0xf]
  %v2255 = vld [vmem:[%s2190 + $0x100] sm:$0xf]
  %v2256 = vld [vmem:[%s2190 + $0x104] sm:$0xf]
  %v2257 = vld [vmem:[%s2190 + $0x108] sm:$0xf]
  %v2258 = vld [vmem:[%s2190 + $0x10c] sm:$0xf]
  %v2259 = vld [vmem:[%s2190 + $0x110] sm:$0xf]
  %v2260 = vld [vmem:[%s2190 + $0x114] sm:$0xf]
  %v2261 = vld [vmem:[%s2190 + $0x118] sm:$0xf]
  %v2262 = vld [vmem:[%s2190 + $0x11c] sm:$0xf]
  %v2263 = vld [vmem:[%s2190 + $0x120] sm:$0xf]
  %v2264 = vld [vmem:[%s2190 + $0x124] sm:$0xf]
  %v2265 = vld [vmem:[%s2190 + $0x128] sm:$0xf]
  %v2266 = vld [vmem:[%s2190 + $0x12c] sm:$0xf]
  %v2267 = vld [vmem:[%s2190 + $0x130] sm:$0xf]
  %v2268 = vld [vmem:[%s2190 + $0x134] sm:$0xf]
  %v2269 = vld [vmem:[%s2190 + $0x138] sm:$0xf]
  %v2270 = vld [vmem:[%s2190 + $0x13c] sm:$0xf]
  %v2271 = vld [vmem:[%s2190 + $0x140] sm:$0xf]
  %v2272 = vld [vmem:[%s2190 + $0x144] sm:$0xf]
  %v2273 = vld [vmem:[%s2190 + $0x148] sm:$0xf]
  %v2274 = vld [vmem:[%s2190 + $0x14c] sm:$0xf]
  %v2275 = vld [vmem:[%s2190 + $0x150] sm:$0xf]
  %v2276 = vld [vmem:[%s2190 + $0x154] sm:$0xf]
  %v2277 = vld [vmem:[%s2190 + $0x158] sm:$0xf]
  %v2278 = vld [vmem:[%s2190 + $0x15c] sm:$0xf]
  %v2279 = vld [vmem:[%s2190 + $0x160] sm:$0xf]
  %v2280 = vld [vmem:[%s2190 + $0x164] sm:$0xf]
  %v2281 = vld [vmem:[%s2190 + $0x168] sm:$0xf]
  %v2282 = vld [vmem:[%s2190 + $0x16c] sm:$0xf]
  %v2283 = vld [vmem:[%s2190 + $0x170] sm:$0xf]
  %v2284 = vld [vmem:[%s2190 + $0x174] sm:$0xf]
  %v2285 = vld [vmem:[%s2190 + $0x178] sm:$0xf]
  %v2286 = vld [vmem:[%s2190 + $0x17c] sm:$0xf]
  %v2287 = vld [vmem:[%s2190 + $0x180] sm:$0xf]
  %v2288 = vld [vmem:[%s2190 + $0x184] sm:$0xf]
  %v2289 = vld [vmem:[%s2190 + $0x188] sm:$0xf]
  %v2290 = vld [vmem:[%s2190 + $0x18c] sm:$0xf]
  %v2291 = vld [vmem:[%s2190 + $0x190] sm:$0xf]
  %v2292 = vld [vmem:[%s2190 + $0x194] sm:$0xf]
  %v2293 = vld [vmem:[%s2190 + $0x198] sm:$0xf]
  %v2294 = vld [vmem:[%s2190 + $0x19c] sm:$0xf]
  %v2295 = vld [vmem:[%s2190 + $0x1a0] sm:$0xf]
  %v2296 = vld [vmem:[%s2190 + $0x1a4] sm:$0xf]
  %v2297 = vld [vmem:[%s2190 + $0x1a8] sm:$0xf]
  %v2298 = vld [vmem:[%s2190 + $0x1ac] sm:$0xf]
  %v2299 = vld [vmem:[%s2190 + $0x1b0] sm:$0xf]
  %v2300 = vld [vmem:[%s2190 + $0x1b4] sm:$0xf]
  %v2301 = vld [vmem:[%s2190 + $0x1b8] sm:$0xf]
  %v2302 = vld [vmem:[%s2190 + $0x1bc] sm:$0xf]
  %v2303 = vld [vmem:[%s2190 + $0x1c0] sm:$0xf]
  %v2304 = vld [vmem:[%s2190 + $0x1c4] sm:$0xf]
  %v2305 = vld [vmem:[%s2190 + $0x1c8] sm:$0xf]
  %v2306 = vld [vmem:[%s2190 + $0x1cc] sm:$0xf]
  %v2307 = vld [vmem:[%s2190 + $0x1d0] sm:$0xf]
  %v2308 = vld [vmem:[%s2190 + $0x1d4] sm:$0xf]
  %v2309 = vld [vmem:[%s2190 + $0x1d8] sm:$0xf]
  %v2310 = vld [vmem:[%s2190 + $0x1dc] sm:$0xf]
  %v2311 = vld [vmem:[%s2190 + $0x1e0] sm:$0xf]
  %v2312 = vld [vmem:[%s2190 + $0x1e4] sm:$0xf]
  %v2313 = vld [vmem:[%s2190 + $0x1e8] sm:$0xf]
  %v2314 = vld [vmem:[%s2190 + $0x1ec] sm:$0xf]
  %v2315 = vld [vmem:[%s2190 + $0x1f0] sm:$0xf]
  %v2316 = vld [vmem:[%s2190 + $0x1f4] sm:$0xf]
  %v2317 = vld [vmem:[%s2190 + $0x1f8] sm:$0xf]
  %v2318 = vld [vmem:[%s2190 + $0x1fc] sm:$0xf]
  %v2319 = vunpack.c.l.b16 %v1867
  %v2320 = vunpack.c.h.b16 %v1867
  %v2321 = vunpack.c.l.b16 %v1881
  %v2322 = vunpack.c.h.b16 %v1881
  %v2323 = vunpack.c.l.b16 %v1895
  %v2324 = vunpack.c.h.b16 %v1895
  %v2325 = vunpack.c.l.b16 %v1909
  %v2326 = vunpack.c.h.b16 %v1909
  %v2327 = vunpack.c.l.b16 %v1923
  %v2328 = vunpack.c.h.b16 %v1923
  %v2329 = vunpack.c.l.b16 %v1937
  %v2330 = vunpack.c.h.b16 %v1937
  %v2331 = vunpack.c.l.b16 %v1951
  %v2332 = vunpack.c.h.b16 %v1951
  %v2333 = vunpack.c.l.b16 %v1965
  %v2334 = vunpack.c.h.b16 %v1965
  %v2335 = vunpack.c.l.b16 %v1979
  %v2336 = vunpack.c.h.b16 %v1979
  %v2337 = vunpack.c.l.b16 %v1993
  %v2338 = vunpack.c.h.b16 %v1993
  %v2339 = vunpack.c.l.b16 %v2007
  %v2340 = vunpack.c.h.b16 %v2007
  %v2341 = vunpack.c.l.b16 %v2021
  %v2342 = vunpack.c.h.b16 %v2021
  %v2343 = vunpack.c.l.b16 %v2035
  %v2344 = vunpack.c.h.b16 %v2035
  %v2345 = vunpack.c.l.b16 %v2049
  %v2346 = vunpack.c.h.b16 %v2049
  %v2347 = vunpack.c.l.b16 %v2063
  %v2348 = vunpack.c.h.b16 %v2063
  %v2349 = vunpack.c.l.b16 %v2077
  %v2350 = vunpack.c.h.b16 %v2077
  %v2351 = vunpack.c.l.b16 %v2091
  %v2352 = vunpack.c.h.b16 %v2091
  %v2353 = vunpack.c.l.b16 %v2105
  %v2354 = vunpack.c.h.b16 %v2105
  %v2355 = vunpack.c.l.b16 %v2119
  %v2356 = vunpack.c.h.b16 %v2119
  %v2357 = vunpack.c.l.b16 %v2133
  %v2358 = vunpack.c.h.b16 %v2133
  %v2359 = vunpack.c.l.b16 %v2147
  %v2360 = vunpack.c.h.b16 %v2147
  %v2361 = vunpack.c.l.b16 %v2161
  %v2362 = vunpack.c.h.b16 %v2161
  %v2363 = vunpack.c.l.b16 %v2175
  %v2364 = vunpack.c.h.b16 %v2175
  %v2365 = vunpack.c.l.b16 %v2189
  %v2366 = vunpack.c.h.b16 %v2189
  %v2367 = vpack.c.b16 %v2327, %v2319
  %v2368 = vpack.c.b16 %v2328, %v2320
  %v2369 = vpack.c.b16 %v2329, %v2321
  %v2370 = vpack.c.b16 %v2330, %v2322
  %v2371 = vpack.c.b16 %v2331, %v2323
  %v2372 = vpack.c.b16 %v2332, %v2324
  %v2373 = vpack.c.b16 %v2333, %v2325
  %v2374 = vpack.c.b16 %v2334, %v2326
  %v2375 = vpack.c.b16 %v2343, %v2335
  %v2376 = vpack.c.b16 %v2344, %v2336
  %v2377 = vpack.c.b16 %v2345, %v2337
  %v2378 = vpack.c.b16 %v2346, %v2338
  %v2379 = vpack.c.b16 %v2347, %v2339
  %v2380 = vpack.c.b16 %v2348, %v2340
  %v2381 = vpack.c.b16 %v2349, %v2341
  %v2382 = vpack.c.b16 %v2350, %v2342
  %v2383 = vpack.c.b16 %v2359, %v2351
  %v2384 = vpack.c.b16 %v2360, %v2352
  %v2385 = vpack.c.b16 %v2361, %v2353
  %v2386 = vpack.c.b16 %v2362, %v2354
  %v2387 = vpack.c.b16 %v2363, %v2355
  %v2388 = vpack.c.b16 %v2364, %v2356
  %v2389 = vpack.c.b16 %v2365, %v2357
  %v2390 = vpack.c.b16 %v2366, %v2358
  %v2543 = vunpack.c.l.b16 %v2191
  %v2544 = vunpack.c.l.b16 %v2192
  %v2545 = vunpack.c.l.b16 %v2193
  %v2546 = vunpack.c.l.b16 %v2194
  %v2547 = vunpack.c.l.b16 %v2195
  %v2548 = vunpack.c.l.b16 %v2196
  %v2549 = vunpack.c.l.b16 %v2197
  %v2550 = vunpack.c.l.b16 %v2198
  %v2551 = vunpack.c.l.b16 %v2199
  %v2552 = vunpack.c.l.b16 %v2200
  %v2553 = vunpack.c.l.b16 %v2201
  %v2554 = vunpack.c.l.b16 %v2202
  %v2555 = vunpack.c.l.b16 %v2203
  %v2556 = vunpack.c.l.b16 %v2204
  %v2557 = vunpack.c.l.b16 %v2205
  %v2558 = vunpack.c.l.b16 %v2206
  %v2559 = vunpack.c.l.b16 %v2207
  %v2560 = vunpack.c.l.b16 %v2208
  %v2561 = vunpack.c.l.b16 %v2209
  %v2562 = vunpack.c.l.b16 %v2210
  %v2563 = vunpack.c.l.b16 %v2211
  %v2564 = vunpack.c.l.b16 %v2212
  %v2565 = vunpack.c.l.b16 %v2213
  %v2566 = vunpack.c.l.b16 %v2214
  %v2567 = vunpack.c.l.b16 %v2215
  %v2568 = vunpack.c.l.b16 %v2216
  %v2569 = vunpack.c.l.b16 %v2217
  %v2570 = vunpack.c.l.b16 %v2218
  %v2571 = vunpack.c.l.b16 %v2219
  %v2572 = vunpack.c.l.b16 %v2220
  %v2573 = vunpack.c.l.b16 %v2221
  %v2574 = vunpack.c.l.b16 %v2222
  %v2575 = vunpack.c.l.b16 %v2223
  %v2576 = vunpack.c.l.b16 %v2224
  %v2577 = vunpack.c.l.b16 %v2225
  %v2578 = vunpack.c.l.b16 %v2226
  %v2579 = vunpack.c.l.b16 %v2227
  %v2580 = vunpack.c.l.b16 %v2228
  %v2581 = vunpack.c.l.b16 %v2229
  %v2582 = vunpack.c.l.b16 %v2230
  %v2583 = vunpack.c.l.b16 %v2231
  %v2584 = vunpack.c.l.b16 %v2232
  %v2585 = vunpack.c.l.b16 %v2233
  %v2586 = vunpack.c.l.b16 %v2234
  %v2587 = vunpack.c.l.b16 %v2235
  %v2588 = vunpack.c.l.b16 %v2236
  %v2589 = vunpack.c.l.b16 %v2237
  %v2590 = vunpack.c.l.b16 %v2238
  %v2591 = vunpack.c.l.b16 %v2239
  %v2592 = vunpack.c.l.b16 %v2240
  %v2593 = vunpack.c.l.b16 %v2241
  %v2594 = vunpack.c.l.b16 %v2242
  %v2595 = vunpack.c.l.b16 %v2243
  %v2596 = vunpack.c.l.b16 %v2244
  %v2597 = vunpack.c.l.b16 %v2245
  %v2598 = vunpack.c.l.b16 %v2246
  %v2599 = vunpack.c.l.b16 %v2247
  %v2600 = vunpack.c.l.b16 %v2248
  %v2601 = vunpack.c.l.b16 %v2249
  %v2602 = vunpack.c.l.b16 %v2250
  %v2603 = vunpack.c.l.b16 %v2251
  %v2604 = vunpack.c.l.b16 %v2252
  %v2605 = vunpack.c.l.b16 %v2253
  %v2606 = vunpack.c.l.b16 %v2254
  %v2607 = vunpack.c.l.b16 %v2255
  %v2608 = vunpack.c.l.b16 %v2256
  %v2609 = vunpack.c.l.b16 %v2257
  %v2610 = vunpack.c.l.b16 %v2258
  %v2611 = vunpack.c.l.b16 %v2259
  %v2612 = vunpack.c.l.b16 %v2260
  %v2613 = vunpack.c.l.b16 %v2261
  %v2614 = vunpack.c.l.b16 %v2262
  %v2615 = vunpack.c.l.b16 %v2263
  %v2616 = vunpack.c.l.b16 %v2264
  %v2617 = vunpack.c.l.b16 %v2265
  %v2618 = vunpack.c.l.b16 %v2266
  %v2619 = vunpack.c.l.b16 %v2267
  %v2620 = vunpack.c.l.b16 %v2268
  %v2621 = vunpack.c.l.b16 %v2269
  %v2622 = vunpack.c.l.b16 %v2270
  %v2623 = vunpack.c.l.b16 %v2271
  %v2624 = vunpack.c.l.b16 %v2272
  %v2625 = vunpack.c.l.b16 %v2273
  %v2626 = vunpack.c.l.b16 %v2274
  %v2627 = vunpack.c.l.b16 %v2275
  %v2628 = vunpack.c.l.b16 %v2276
  %v2629 = vunpack.c.l.b16 %v2277
  %v2630 = vunpack.c.l.b16 %v2278
  %v2631 = vunpack.c.l.b16 %v2279
  %v2632 = vunpack.c.l.b16 %v2280
  %v2633 = vunpack.c.l.b16 %v2281
  %v2634 = vunpack.c.l.b16 %v2282
  %v2635 = vunpack.c.l.b16 %v2283
  %v2636 = vunpack.c.l.b16 %v2284
  %v2637 = vunpack.c.l.b16 %v2285
  %v2638 = vunpack.c.l.b16 %v2286
  %v2639 = vunpack.c.l.b16 %v2287
  %v2640 = vunpack.c.l.b16 %v2288
  %v2641 = vunpack.c.l.b16 %v2289
  %v2642 = vunpack.c.l.b16 %v2290
  %v2643 = vunpack.c.l.b16 %v2291
  %v2644 = vunpack.c.l.b16 %v2292
  %v2645 = vunpack.c.l.b16 %v2293
  %v2646 = vunpack.c.l.b16 %v2294
  %v2647 = vunpack.c.l.b16 %v2295
  %v2648 = vunpack.c.l.b16 %v2296
  %v2649 = vunpack.c.l.b16 %v2297
  %v2650 = vunpack.c.l.b16 %v2298
  %v2651 = vunpack.c.l.b16 %v2299
  %v2652 = vunpack.c.l.b16 %v2300
  %v2653 = vunpack.c.l.b16 %v2301
  %v2654 = vunpack.c.l.b16 %v2302
  %v2655 = vunpack.c.l.b16 %v2303
  %v2656 = vunpack.c.l.b16 %v2304
  %v2657 = vunpack.c.l.b16 %v2305
  %v2658 = vunpack.c.l.b16 %v2306
  %v2659 = vunpack.c.l.b16 %v2307
  %v2660 = vunpack.c.l.b16 %v2308
  %v2661 = vunpack.c.l.b16 %v2309
  %v2662 = vunpack.c.l.b16 %v2310
  %v2663 = vunpack.c.l.b16 %v2311
  %v2664 = vunpack.c.l.b16 %v2312
  %v2665 = vunpack.c.l.b16 %v2313
  %v2666 = vunpack.c.l.b16 %v2314
  %v2667 = vunpack.c.l.b16 %v2315
  %v2668 = vunpack.c.l.b16 %v2316
  %v2669 = vunpack.c.l.b16 %v2317
  %v2670 = vunpack.c.l.b16 %v2318
  %v2671 = vpack.c.b16 %v2544, %v2543
  %v2672 = vpack.c.b16 %v2546, %v2545
  %v2673 = vpack.c.b16 %v2548, %v2547
  %v2674 = vpack.c.b16 %v2550, %v2549
  %v2675 = vpack.c.b16 %v2552, %v2551
  %v2676 = vpack.c.b16 %v2554, %v2553
  %v2677 = vpack.c.b16 %v2556, %v2555
  %v2678 = vpack.c.b16 %v2558, %v2557
  %v2679 = vpack.c.b16 %v2560, %v2559
  %v2680 = vpack.c.b16 %v2562, %v2561
  %v2681 = vpack.c.b16 %v2564, %v2563
  %v2682 = vpack.c.b16 %v2566, %v2565
  %v2683 = vpack.c.b16 %v2568, %v2567
  %v2684 = vpack.c.b16 %v2570, %v2569
  %v2685 = vpack.c.b16 %v2572, %v2571
  %v2686 = vpack.c.b16 %v2574, %v2573
  %v2687 = vpack.c.b16 %v2576, %v2575
  %v2688 = vpack.c.b16 %v2578, %v2577
  %v2689 = vpack.c.b16 %v2580, %v2579
  %v2690 = vpack.c.b16 %v2582, %v2581
  %v2691 = vpack.c.b16 %v2584, %v2583
  %v2692 = vpack.c.b16 %v2586, %v2585
  %v2693 = vpack.c.b16 %v2588, %v2587
  %v2694 = vpack.c.b16 %v2590, %v2589
  %v2695 = vpack.c.b16 %v2592, %v2591
  %v2696 = vpack.c.b16 %v2594, %v2593
  %v2697 = vpack.c.b16 %v2596, %v2595
  %v2698 = vpack.c.b16 %v2598, %v2597
  %v2699 = vpack.c.b16 %v2600, %v2599
  %v2700 = vpack.c.b16 %v2602, %v2601
  %v2701 = vpack.c.b16 %v2604, %v2603
  %v2702 = vpack.c.b16 %v2606, %v2605
  %v2703 = vpack.c.b16 %v2608, %v2607
  %v2704 = vpack.c.b16 %v2610, %v2609
  %v2705 = vpack.c.b16 %v2612, %v2611
  %v2706 = vpack.c.b16 %v2614, %v2613
  %v2707 = vpack.c.b16 %v2616, %v2615
  %v2708 = vpack.c.b16 %v2618, %v2617
  %v2709 = vpack.c.b16 %v2620, %v2619
  %v2710 = vpack.c.b16 %v2622, %v2621
  %v2711 = vpack.c.b16 %v2624, %v2623
  %v2712 = vpack.c.b16 %v2626, %v2625
  %v2713 = vpack.c.b16 %v2628, %v2627
  %v2714 = vpack.c.b16 %v2630, %v2629
  %v2715 = vpack.c.b16 %v2632, %v2631
  %v2716 = vpack.c.b16 %v2634, %v2633
  %v2717 = vpack.c.b16 %v2636, %v2635
  %v2718 = vpack.c.b16 %v2638, %v2637
  %v2719 = vpack.c.b16 %v2640, %v2639
  %v2720 = vpack.c.b16 %v2642, %v2641
  %v2721 = vpack.c.b16 %v2644, %v2643
  %v2722 = vpack.c.b16 %v2646, %v2645
  %v2723 = vpack.c.b16 %v2648, %v2647
  %v2724 = vpack.c.b16 %v2650, %v2649
  %v2725 = vpack.c.b16 %v2652, %v2651
  %v2726 = vpack.c.b16 %v2654, %v2653
  %v2727 = vpack.c.b16 %v2656, %v2655
  %v2728 = vpack.c.b16 %v2658, %v2657
  %v2729 = vpack.c.b16 %v2660, %v2659
  %v2730 = vpack.c.b16 %v2662, %v2661
  %v2731 = vpack.c.b16 %v2664, %v2663
  %v2732 = vpack.c.b16 %v2666, %v2665
  %v2733 = vpack.c.b16 %v2668, %v2667
  %v2734 = vpack.c.b16 %v2670, %v2669
  %2799 = vmatprep.subr.bf16.mxu0 0
  %2800 = vmatpush1.bf16.msra.mxu0 %v2671
  %2801 = vmatprep.subr.bf16.mxu0 0
  %2802 = vmatpush1.bf16.msra.mxu0 %v2672
  %2803 = vmatprep.subr.bf16.mxu0 0
  %2804 = vmatpush1.bf16.msra.mxu0 %v2673
  %2805 = vmatprep.subr.bf16.mxu0 0
  %2806 = vmatpush1.bf16.msra.mxu0 %v2674
  %2807 = vmatprep.subr.bf16.mxu0 0
  %2808 = vmatpush1.bf16.msra.mxu0 %v2675
  %2809 = vmatprep.subr.bf16.mxu0 0
  %2810 = vmatpush1.bf16.msra.mxu0 %v2676
  %2811 = vmatprep.subr.bf16.mxu0 0
  %2812 = vmatpush1.bf16.msra.mxu0 %v2677
  %2813 = vmatprep.subr.bf16.mxu0 0
  %2814 = vmatpush1.bf16.msra.mxu0 %v2678
  %2815 = vmatprep.subr.bf16.mxu0 0
  %2816 = vmatpush1.bf16.msra.mxu0 %v2679
  %2817 = vmatprep.subr.bf16.mxu0 0
  %2818 = vmatpush1.bf16.msra.mxu0 %v2680
  %2819 = vmatprep.subr.bf16.mxu0 0
  %2820 = vmatpush1.bf16.msra.mxu0 %v2681
  %2821 = vmatprep.subr.bf16.mxu0 0
  %2822 = vmatpush1.bf16.msra.mxu0 %v2682
  %2823 = vmatprep.subr.bf16.mxu0 0
  %2824 = vmatpush1.bf16.msra.mxu0 %v2683
  %2825 = vmatprep.subr.bf16.mxu0 0
  %2826 = vmatpush1.bf16.msra.mxu0 %v2684
  %2827 = vmatprep.subr.bf16.mxu0 0
  %2828 = vmatpush1.bf16.msra.mxu0 %v2685
  %2829 = vmatprep.subr.bf16.mxu0 0
  %2830 = vmatpush1.bf16.msra.mxu0 %v2686
  %2831 = vmatprep.mubr.bf16.mxu0 %v2368
  %2832 = vmatmul.mubr.bf16.gmra.mrb[0].mxu0 %v2367
  %v2833 = vpop.f32.mrb[0].mxu0
  %v2834 = vadd.f32 0.0, %v2833
  %v2835 = vpop.f32.mrb[0].mxu0
  %v2836 = vpop.f32.mrb[0].mxu0
  %v2837 = vadd.f32 0.0, %v2836
  %v2838 = vpop.f32.mrb[0].mxu0
  %2839 = vmatprep.mubr.bf16.mxu0 %v2376
  %2840 = vmatmul.mubr.bf16.gmra.mrb[0].mxu0 %v2375
  %v2841 = vpop.f32.mrb[0].mxu0
  %v2842 = vadd.f32 0.0, %v2841
  %v2843 = vpop.f32.mrb[0].mxu0
  %v2844 = vpop.f32.mrb[0].mxu0
  %v2845 = vadd.f32 0.0, %v2844
  %v2846 = vpop.f32.mrb[0].mxu0
  %2847 = vmatprep.mubr.bf16.mxu0 %v2384
  %2848 = vmatmul.mubr.bf16.gmra.mrb[0].mxu0 %v2383
  %v2849 = vpop.f32.mrb[0].mxu0
  %v2850 = vadd.f32 0.0, %v2849
  %v2851 = vpop.f32.mrb[0].mxu0
  %v2852 = vpop.f32.mrb[0].mxu0
  %v2853 = vadd.f32 0.0, %v2852
  %v2854 = vpop.f32.mrb[0].mxu0
  %2855 = vdwg.mxu0
  %2856 = vmatprep.subr.bf16.mxu0 0
  %2857 = vmatpush1.bf16.msra.mxu0 %v2687
  %2858 = vmatprep.subr.bf16.mxu0 0
  %2859 = vmatpush1.bf16.msra.mxu0 %v2688
  %2860 = vmatprep.subr.bf16.mxu0 0
  %2861 = vmatpush1.bf16.msra.mxu0 %v2689
  %2862 = vmatprep.subr.bf16.mxu0 0
  %2863 = vmatpush1.bf16.msra.mxu0 %v2690
  %2864 = vmatprep.subr.bf16.mxu0 0
  %2865 = vmatpush1.bf16.msra.mxu0 %v2691
  %2866 = vmatprep.subr.bf16.mxu0 0
  %2867 = vmatpush1.bf16.msra.mxu0 %v2692
  %2868 = vmatprep.subr.bf16.mxu0 0
  %2869 = vmatpush1.bf16.msra.mxu0 %v2693
  %2870 = vmatprep.subr.bf16.mxu0 0
  %2871 = vmatpush1.bf16.msra.mxu0 %v2694
  %2872 = vmatprep.subr.bf16.mxu0 0
  %2873 = vmatpush1.bf16.msra.mxu0 %v2695
  %2874 = vmatprep.subr.bf16.mxu0 0
  %2875 = vmatpush1.bf16.msra.mxu0 %v2696
  %2876 = vmatprep.subr.bf16.mxu0 0
  %2877 = vmatpush1.bf16.msra.mxu0 %v2697
  %2878 = vmatprep.subr.bf16.mxu0 0
  %2879 = vmatpush1.bf16.msra.mxu0 %v2698
  %2880 = vmatprep.subr.bf16.mxu0 0
  %2881 = vmatpush1.bf16.msra.mxu0 %v2699
  %2882 = vmatprep.subr.bf16.mxu0 0
  %2883 = vmatpush1.bf16.msra.mxu0 %v2700
  %2884 = vmatprep.subr.bf16.mxu0 0
  %2885 = vmatpush1.bf16.msra.mxu0 %v2701
  %2886 = vmatprep.subr.bf16.mxu0 0
  %2887 = vmatpush1.bf16.msra.mxu0 %v2702
  %2888 = vmatprep.mubr.bf16.mxu0 %v2370
  %2889 = vmatmul.mubr.bf16.gmra.mrb[0].mxu0 %v2369
  %v2890 = vpop.f32.mrb[0].mxu0
  %v2891 = vadd.f32 %v2834, %v2890
  %v2892 = vpop.f32.mrb[0].mxu0
  %v2893 = vpop.f32.mrb[0].mxu0
  %v2894 = vadd.f32 %v2837, %v2893
  %v2895 = vpop.f32.mrb[0].mxu0
  %2896 = vmatprep.mubr.bf16.mxu0 %v2378
  %2897 = vmatmul.mubr.bf16.gmra.mrb[0].mxu0 %v2377
  %v2898 = vpop.f32.mrb[0].mxu0
  %v2899 = vadd.f32 %v2842, %v2898
  %v2900 = vpop.f32.mrb[0].mxu0
  %v2901 = vpop.f32.mrb[0].mxu0
  %v2902 = vadd.f32 %v2845, %v2901
  %v2903 = vpop.f32.mrb[0].mxu0
  %2904 = vmatprep.mubr.bf16.mxu0 %v2386
  %2905 = vmatmul.mubr.bf16.gmra.mrb[0].mxu0 %v2385
  %v2906 = vpop.f32.mrb[0].mxu0
  %v2907 = vadd.f32 %v2850, %v2906
  %v2908 = vpop.f32.mrb[0].mxu0
  %v2909 = vpop.f32.mrb[0].mxu0
  %v2910 = vadd.f32 %v2853, %v2909
  %v2911 = vpop.f32.mrb[0].mxu0
  %2912 = vdwg.mxu0
  %2913 = vmatprep.subr.bf16.mxu0 0
  %2914 = vmatpush1.bf16.msra.mxu0 %v2703
  %2915 = vmatprep.subr.bf16.mxu0 0
  %2916 = vmatpush1.bf16.msra.mxu0 %v2704
  %2917 = vmatprep.subr.bf16.mxu0 0
  %2918 = vmatpush1.bf16.msra.mxu0 %v2705
  %2919 = vmatprep.subr.bf16.mxu0 0
  %2920 = vmatpush1.bf16.msra.mxu0 %v2706
  %2921 = vmatprep.subr.bf16.mxu0 0
  %2922 = vmatpush1.bf16.msra.mxu0 %v2707
  %2923 = vmatprep.subr.bf16.mxu0 0
  %2924 = vmatpush1.bf16.msra.mxu0 %v2708
  %2925 = vmatprep.subr.bf16.mxu0 0
  %2926 = vmatpush1.bf16.msra.mxu0 %v2709
  %2927 = vmatprep.subr.bf16.mxu0 0
  %2928 = vmatpush1.bf16.msra.mxu0 %v2710
  %2929 = vmatprep.subr.bf16.mxu0 0
  %2930 = vmatpush1.bf16.msra.mxu0 %v2711
  %2931 = vmatprep.subr.bf16.mxu0 0
  %2932 = vmatpush1.bf16.msra.mxu0 %v2712
  %2933 = vmatprep.subr.bf16.mxu0 0
  %2934 = vmatpush1.bf16.msra.mxu0 %v2713
  %2935 = vmatprep.subr.bf16.mxu0 0
  %2936 = vmatpush1.bf16.msra.mxu0 %v2714
  %2937 = vmatprep.subr.bf16.mxu0 0
  %2938 = vmatpush1.bf16.msra.mxu0 %v2715
  %2939 = vmatprep.subr.bf16.mxu0 0
  %2940 = vmatpush1.bf16.msra.mxu0 %v2716
  %2941 = vmatprep.subr.bf16.mxu0 0
  %2942 = vmatpush1.bf16.msra.mxu0 %v2717
  %2943 = vmatprep.subr.bf16.mxu0 0
  %2944 = vmatpush1.bf16.msra.mxu0 %v2718
  %2945 = vmatprep.mubr.bf16.mxu0 %v2372
  %2946 = vmatmul.mubr.bf16.gmra.mrb[0].mxu0 %v2371
  %v2947 = vpop.f32.mrb[0].mxu0
  %v2948 = vadd.f32 %v2891, %v2947
  %v2949 = vpop.f32.mrb[0].mxu0
  %v2950 = vpop.f32.mrb[0].mxu0
  %v2951 = vadd.f32 %v2894, %v2950
  %v2952 = vpop.f32.mrb[0].mxu0
  %2953 = vmatprep.mubr.bf16.mxu0 %v2380
  %2954 = vmatmul.mubr.bf16.gmra.mrb[0].mxu0 %v2379
  %v2955 = vpop.f32.mrb[0].mxu0
  %v2956 = vadd.f32 %v2899, %v2955
  %v2957 = vpop.f32.mrb[0].mxu0
  %v2958 = vpop.f32.mrb[0].mxu0
  %v2959 = vadd.f32 %v2902, %v2958
  %v2960 = vpop.f32.mrb[0].mxu0
  %2961 = vmatprep.mubr.bf16.mxu0 %v2388
  %2962 = vmatmul.mubr.bf16.gmra.mrb[0].mxu0 %v2387
  %v2963 = vpop.f32.mrb[0].mxu0
  %v2964 = vadd.f32 %v2907, %v2963
  %v2965 = vpop.f32.mrb[0].mxu0
  %v2966 = vpop.f32.mrb[0].mxu0
  %v2967 = vadd.f32 %v2910, %v2966
  %v2968 = vpop.f32.mrb[0].mxu0
  %2969 = vdwg.mxu0
  %2970 = vmatprep.subr.bf16.mxu0 0
  %2971 = vmatpush1.bf16.msra.mxu0 %v2719
  %2972 = vmatprep.subr.bf16.mxu0 0
  %2973 = vmatpush1.bf16.msra.mxu0 %v2720
  %2974 = vmatprep.subr.bf16.mxu0 0
  %2975 = vmatpush1.bf16.msra.mxu0 %v2721
  %2976 = vmatprep.subr.bf16.mxu0 0
  %2977 = vmatpush1.bf16.msra.mxu0 %v2722
  %2978 = vmatprep.subr.bf16.mxu0 0
  %2979 = vmatpush1.bf16.msra.mxu0 %v2723
  %2980 = vmatprep.subr.bf16.mxu0 0
  %2981 = vmatpush1.bf16.msra.mxu0 %v2724
  %2982 = vmatprep.subr.bf16.mxu0 0
  %2983 = vmatpush1.bf16.msra.mxu0 %v2725
  %2984 = vmatprep.subr.bf16.mxu0 0
  %2985 = vmatpush1.bf16.msra.mxu0 %v2726
  %2986 = vmatprep.subr.bf16.mxu0 0
  %2987 = vmatpush1.bf16.msra.mxu0 %v2727
  %2988 = vmatprep.subr.bf16.mxu0 0
  %2989 = vmatpush1.bf16.msra.mxu0 %v2728
  %2990 = vmatprep.subr.bf16.mxu0 0
  %2991 = vmatpush1.bf16.msra.mxu0 %v2729
  %2992 = vmatprep.subr.bf16.mxu0 0
  %2993 = vmatpush1.bf16.msra.mxu0 %v2730
  %2994 = vmatprep.subr.bf16.mxu0 0
  %2995 = vmatpush1.bf16.msra.mxu0 %v2731
  %2996 = vmatprep.subr.bf16.mxu0 0
  %2997 = vmatpush1.bf16.msra.mxu0 %v2732
  %2998 = vmatprep.subr.bf16.mxu0 0
  %2999 = vmatpush1.bf16.msra.mxu0 %v2733
  %3000 = vmatprep.subr.bf16.mxu0 0
  %3001 = vmatpush1.bf16.msra.mxu0 %v2734
  %3002 = vmatprep.mubr.bf16.mxu0 %v2374
  %3003 = vmatmul.mubr.bf16.gmra.mrb[0].mxu0 %v2373
  %v3004 = vpop.f32.mrb[0].mxu0
  %v3005 = vadd.f32 %v2948, %v3004
  %v3006 = vpop.f32.mrb[0].mxu0
  %v3007 = vpop.f32.mrb[0].mxu0
  %v3008 = vadd.f32 %v2951, %v3007
  %v3009 = vpop.f32.mrb[0].mxu0
  %3010 = vmatprep.mubr.bf16.mxu0 %v2382
  %3011 = vmatmul.mubr.bf16.gmra.mrb[0].mxu0 %v2381
  %v3012 = vpop.f32.mrb[0].mxu0
  %v3013 = vadd.f32 %v2956, %v3012
  %v3014 = vpop.f32.mrb[0].mxu0
  %v3015 = vpop.f32.mrb[0].mxu0
  %v3016 = vadd.f32 %v2959, %v3015
  %v3017 = vpop.f32.mrb[0].mxu0
  %3018 = vmatprep.mubr.bf16.mxu0 %v2390
  %3019 = vmatmul.mubr.bf16.gmra.mrb[0].mxu0 %v2389
  %v3020 = vpop.f32.mrb[0].mxu0
  %v3021 = vadd.f32 %v2964, %v3020
  %v3022 = vpop.f32.mrb[0].mxu0
  %v3023 = vpop.f32.mrb[0].mxu0
  %v3024 = vadd.f32 %v2967, %v3023
  %v3025 = vpop.f32.mrb[0].mxu0
  %3026 = vdwg.mxu0
  %v3027 = vadd.f32 %v1797, %v3005
  %v3028 = vadd.f32 %v1798, %v3008
  %v3029 = vadd.f32 %v1799, %v3013
  %v3030 = vadd.f32 %v1800, %v3016
  %v3031 = vadd.f32 %v1801, %v3021
  %v3032 = vadd.f32 %v1802, %v3024
  %v3033 = vld [vmem:[%s0 + $0x20] sm:$0xff]
  %v3034 = vld [vmem:[%s0 + $0x28] sm:$0xff]
  %v3035 = vld [vmem:[%s0 + $0x30] sm:$0xff]
  %v3036 = vld [vmem:[%s0 + $0x38] sm:$0xff]
  %v3037 = vld [vmem:[%s0 + $0x60] sm:$0x11]
  %v3038 = vld [vmem:[%s0 + $0x68] sm:$0x11]
  %v3039 = vld [vmem:[%s0 + $0x70] sm:$0x11]
  %v3040 = vld [vmem:[%s0 + $0x78] sm:$0x11]
  %v3041 = vld [vmem:[%s0 + $0xa0] sm:$0xff]
  %v3042 = vld [vmem:[%s0 + $0xa8] sm:$0xff]
  %v3043 = vld [vmem:[%s0 + $0xb0] sm:$0xff]
  %v3044 = vld [vmem:[%s0 + $0xb8] sm:$0xff]
  %v3045 = vld [vmem:[%s0 + $0xe0] sm:$0x11]
  %v3046 = vld [vmem:[%s0 + $0xe8] sm:$0x11]
  %v3047 = vld [vmem:[%s0 + $0xf0] sm:$0x11]
  %v3048 = vld [vmem:[%s0 + $0xf8] sm:$0x11]
  %v3049 = vld [vmem:[%s0 + $0x120] sm:$0xff]
  %v3050 = vld [vmem:[%s0 + $0x128] sm:$0xff]
  %v3051 = vld [vmem:[%s0 + $0x130] sm:$0xff]
  %v3052 = vld [vmem:[%s0 + $0x138] sm:$0xff]
  %v3053 = vld [vmem:[%s0 + $0x160] sm:$0x11]
  %v3054 = vld [vmem:[%s0 + $0x168] sm:$0x11]
  %v3055 = vld [vmem:[%s0 + $0x170] sm:$0x11]
  %v3056 = vld [vmem:[%s0 + $0x178] sm:$0x11]
  %v3057 = vld [vmem:[%s0 + $0x1a0] sm:$0xff]
  %v3058 = vld [vmem:[%s0 + $0x1a8] sm:$0xff]
  %v3059 = vld [vmem:[%s0 + $0x1b0] sm:$0xff]
  %v3060 = vld [vmem:[%s0 + $0x1b8] sm:$0xff]
  %v3061 = vld [vmem:[%s0 + $0x1e0] sm:$0x11]
  %v3062 = vld [vmem:[%s0 + $0x1e8] sm:$0x11]
  %v3063 = vld [vmem:[%s0 + $0x1f0] sm:$0x11]
  %v3064 = vld [vmem:[%s0 + $0x1f8] sm:$0x11]
  %v3065 = vld [vmem:[%s0 + $0x220] sm:$0xff]
  %v3066 = vld [vmem:[%s0 + $0x228] sm:$0xff]
  %v3067 = vld [vmem:[%s0 + $0x230] sm:$0xff]
  %v3068 = vld [vmem:[%s0 + $0x238] sm:$0xff]
  %v3069 = vld [vmem:[%s0 + $0x260] sm:$0x11]
  %v3070 = vld [vmem:[%s0 + $0x268] sm:$0x11]
  %v3071 = vld [vmem:[%s0 + $0x270] sm:$0x11]
  %v3072 = vld [vmem:[%s0 + $0x278] sm:$0x11]
  %v3073 = vld [vmem:[%s0 + $0x2a0] sm:$0xff]
  %v3074 = vld [vmem:[%s0 + $0x2a8] sm:$0xff]
  %v3075 = vld [vmem:[%s0 + $0x2b0] sm:$0xff]
  %v3076 = vld [vmem:[%s0 + $0x2b8] sm:$0xff]
  %v3077 = vld [vmem:[%s0 + $0x2e0] sm:$0x11]
  %v3078 = vld [vmem:[%s0 + $0x2e8] sm:$0x11]
  %v3079 = vld [vmem:[%s0 + $0x2f0] sm:$0x11]
  %v3080 = vld [vmem:[%s0 + $0x2f8] sm:$0x11]
  %v3082 = vshrl.u32 %v3033, 16
  %v3084 = vrot.slane %v3082, 4
  %v3085 = vshll.u32 %v3033, 16
  %v3087 = vrot.slane %v3085, 5
  %v3088 = vor.u32 %v3084, %v3087
  %v3089 = vrot.slane %v3088, 4
  %v3091 = vshll.u32 %v3037, 16
  %v3093 = vrot.slane %v3091, 5
  %v3094 = vsel %vm1853, %v3089, %v3093
  %v3096 = vshrl.u32 %v3034, 16
  %v3098 = vrot.slane %v3096, 4
  %v3099 = vshll.u32 %v3034, 16
  %v3101 = vrot.slane %v3099, 5
  %v3102 = vor.u32 %v3098, %v3101
  %v3103 = vrot.slane %v3102, 4
  %v3105 = vshll.u32 %v3038, 16
  %v3107 = vrot.slane %v3105, 5
  %v3108 = vsel %vm1853, %v3103, %v3107
  %v3110 = vshrl.u32 %v3035, 16
  %v3112 = vrot.slane %v3110, 4
  %v3113 = vshll.u32 %v3035, 16
  %v3115 = vrot.slane %v3113, 5
  %v3116 = vor.u32 %v3112, %v3115
  %v3117 = vrot.slane %v3116, 4
  %v3119 = vshll.u32 %v3039, 16
  %v3121 = vrot.slane %v3119, 5
  %v3122 = vsel %vm1853, %v3117, %v3121
  %v3124 = vshrl.u32 %v3036, 16
  %v3126 = vrot.slane %v3124, 4
  %v3127 = vshll.u32 %v3036, 16
  %v3129 = vrot.slane %v3127, 5
  %v3130 = vor.u32 %v3126, %v3129
  %v3131 = vrot.slane %v3130, 4
  %v3133 = vshll.u32 %v3040, 16
  %v3135 = vrot.slane %v3133, 5
  %v3136 = vsel %vm1853, %v3131, %v3135
  %v3138 = vshrl.u32 %v3041, 16
  %v3140 = vrot.slane %v3138, 4
  %v3141 = vshll.u32 %v3041, 16
  %v3143 = vrot.slane %v3141, 5
  %v3144 = vor.u32 %v3140, %v3143
  %v3145 = vrot.slane %v3144, 4
  %v3147 = vshll.u32 %v3045, 16
  %v3149 = vrot.slane %v3147, 5
  %v3150 = vsel %vm1853, %v3145, %v3149
  %v3152 = vshrl.u32 %v3042, 16
  %v3154 = vrot.slane %v3152, 4
  %v3155 = vshll.u32 %v3042, 16
  %v3157 = vrot.slane %v3155, 5
  %v3158 = vor.u32 %v3154, %v3157
  %v3159 = vrot.slane %v3158, 4
  %v3161 = vshll.u32 %v3046, 16
  %v3163 = vrot.slane %v3161, 5
  %v3164 = vsel %vm1853, %v3159, %v3163
  %v3166 = vshrl.u32 %v3043, 16
  %v3168 = vrot.slane %v3166, 4
  %v3169 = vshll.u32 %v3043, 16
  %v3171 = vrot.slane %v3169, 5
  %v3172 = vor.u32 %v3168, %v3171
  %v3173 = vrot.slane %v3172, 4
  %v3175 = vshll.u32 %v3047, 16
  %v3177 = vrot.slane %v3175, 5
  %v3178 = vsel %vm1853, %v3173, %v3177
  %v3180 = vshrl.u32 %v3044, 16
  %v3182 = vrot.slane %v3180, 4
  %v3183 = vshll.u32 %v3044, 16
  %v3185 = vrot.slane %v3183, 5
  %v3186 = vor.u32 %v3182, %v3185
  %v3187 = vrot.slane %v3186, 4
  %v3189 = vshll.u32 %v3048, 16
  %v3191 = vrot.slane %v3189, 5
  %v3192 = vsel %vm1853, %v3187, %v3191
  %v3194 = vshrl.u32 %v3049, 16
  %v3196 = vrot.slane %v3194, 4
  %v3197 = vshll.u32 %v3049, 16
  %v3199 = vrot.slane %v3197, 5
  %v3200 = vor.u32 %v3196, %v3199
  %v3201 = vrot.slane %v3200, 4
  %v3203 = vshll.u32 %v3053, 16
  %v3205 = vrot.slane %v3203, 5
  %v3206 = vsel %vm1853, %v3201, %v3205
  %v3208 = vshrl.u32 %v3050, 16
  %v3210 = vrot.slane %v3208, 4
  %v3211 = vshll.u32 %v3050, 16
  %v3213 = vrot.slane %v3211, 5
  %v3214 = vor.u32 %v3210, %v3213
  %v3215 = vrot.slane %v3214, 4
  %v3217 = vshll.u32 %v3054, 16
  %v3219 = vrot.slane %v3217, 5
  %v3220 = vsel %vm1853, %v3215, %v3219
  %v3222 = vshrl.u32 %v3051, 16
  %v3224 = vrot.slane %v3222, 4
  %v3225 = vshll.u32 %v3051, 16
  %v3227 = vrot.slane %v3225, 5
  %v3228 = vor.u32 %v3224, %v3227
  %v3229 = vrot.slane %v3228, 4
  %v3231 = vshll.u32 %v3055, 16
  %v3233 = vrot.slane %v3231, 5
  %v3234 = vsel %vm1853, %v3229, %v3233
  %v3236 = vshrl.u32 %v3052, 16
  %v3238 = vrot.slane %v3236, 4
  %v3239 = vshll.u32 %v3052, 16
  %v3241 = vrot.slane %v3239, 5
  %v3242 = vor.u32 %v3238, %v3241
  %v3243 = vrot.slane %v3242, 4
  %v3245 = vshll.u32 %v3056, 16
  %v3247 = vrot.slane %v3245, 5
  %v3248 = vsel %vm1853, %v3243, %v3247
  %v3250 = vshrl.u32 %v3057, 16
  %v3252 = vrot.slane %v3250, 4
  %v3253 = vshll.u32 %v3057, 16
  %v3255 = vrot.slane %v3253, 5
  %v3256 = vor.u32 %v3252, %v3255
  %v3257 = vrot.slane %v3256, 4
  %v3259 = vshll.u32 %v3061, 16
  %v3261 = vrot.slane %v3259, 5
  %v3262 = vsel %vm1853, %v3257, %v3261
  %v3264 = vshrl.u32 %v3058, 16
  %v3266 = vrot.slane %v3264, 4
  %v3267 = vshll.u32 %v3058, 16
  %v3269 = vrot.slane %v3267, 5
  %v3270 = vor.u32 %v3266, %v3269
  %v3271 = vrot.slane %v3270, 4
  %v3273 = vshll.u32 %v3062, 16
  %v3275 = vrot.slane %v3273, 5
  %v3276 = vsel %vm1853, %v3271, %v3275
  %v3278 = vshrl.u32 %v3059, 16
  %v3280 = vrot.slane %v3278, 4
  %v3281 = vshll.u32 %v3059, 16
  %v3283 = vrot.slane %v3281, 5
  %v3284 = vor.u32 %v3280, %v3283
  %v3285 = vrot.slane %v3284, 4
  %v3287 = vshll.u32 %v3063, 16
  %v3289 = vrot.slane %v3287, 5
  %v3290 = vsel %vm1853, %v3285, %v3289
  %v3292 = vshrl.u32 %v3060, 16
  %v3294 = vrot.slane %v3292, 4
  %v3295 = vshll.u32 %v3060, 16
  %v3297 = vrot.slane %v3295, 5
  %v3298 = vor.u32 %v3294, %v3297
  %v3299 = vrot.slane %v3298, 4
  %v3301 = vshll.u32 %v3064, 16
  %v3303 = vrot.slane %v3301, 5
  %v3304 = vsel %vm1853, %v3299, %v3303
  %v3306 = vshrl.u32 %v3065, 16
  %v3308 = vrot.slane %v3306, 4
  %v3309 = vshll.u32 %v3065, 16
  %v3311 = vrot.slane %v3309, 5
  %v3312 = vor.u32 %v3308, %v3311
  %v3313 = vrot.slane %v3312, 4
  %v3315 = vshll.u32 %v3069, 16
  %v3317 = vrot.slane %v3315, 5
  %v3318 = vsel %vm1853, %v3313, %v3317
  %v3320 = vshrl.u32 %v3066, 16
  %v3322 = vrot.slane %v3320, 4
  %v3323 = vshll.u32 %v3066, 16
  %v3325 = vrot.slane %v3323, 5
  %v3326 = vor.u32 %v3322, %v3325
  %v3327 = vrot.slane %v3326, 4
  %v3329 = vshll.u32 %v3070, 16
  %v3331 = vrot.slane %v3329, 5
  %v3332 = vsel %vm1853, %v3327, %v3331
  %v3334 = vshrl.u32 %v3067, 16
  %v3336 = vrot.slane %v3334, 4
  %v3337 = vshll.u32 %v3067, 16
  %v3339 = vrot.slane %v3337, 5
  %v3340 = vor.u32 %v3336, %v3339
  %v3341 = vrot.slane %v3340, 4
  %v3343 = vshll.u32 %v3071, 16
  %v3345 = vrot.slane %v3343, 5
  %v3346 = vsel %vm1853, %v3341, %v3345
  %v3348 = vshrl.u32 %v3068, 16
  %v3350 = vrot.slane %v3348, 4
  %v3351 = vshll.u32 %v3068, 16
  %v3353 = vrot.slane %v3351, 5
  %v3354 = vor.u32 %v3350, %v3353
  %v3355 = vrot.slane %v3354, 4
  %v3357 = vshll.u32 %v3072, 16
  %v3359 = vrot.slane %v3357, 5
  %v3360 = vsel %vm1853, %v3355, %v3359
  %v3362 = vshrl.u32 %v3073, 16
  %v3364 = vrot.slane %v3362, 4
  %v3365 = vshll.u32 %v3073, 16
  %v3367 = vrot.slane %v3365, 5
  %v3368 = vor.u32 %v3364, %v3367
  %v3369 = vrot.slane %v3368, 4
  %v3371 = vshll.u32 %v3077, 16
  %v3373 = vrot.slane %v3371, 5
  %v3374 = vsel %vm1853, %v3369, %v3373
  %v3376 = vshrl.u32 %v3074, 16
  %v3378 = vrot.slane %v3376, 4
  %v3379 = vshll.u32 %v3074, 16
  %v3381 = vrot.slane %v3379, 5
  %v3382 = vor.u32 %v3378, %v3381
  %v3383 = vrot.slane %v3382, 4
  %v3385 = vshll.u32 %v3078, 16
  %v3387 = vrot.slane %v3385, 5
  %v3388 = vsel %vm1853, %v3383, %v3387
  %v3390 = vshrl.u32 %v3075, 16
  %v3392 = vrot.slane %v3390, 4
  %v3393 = vshll.u32 %v3075, 16
  %v3395 = vrot.slane %v3393, 5
  %v3396 = vor.u32 %v3392, %v3395
  %v3397 = vrot.slane %v3396, 4
  %v3399 = vshll.u32 %v3079, 16
  %v3401 = vrot.slane %v3399, 5
  %v3402 = vsel %vm1853, %v3397, %v3401
  %v3404 = vshrl.u32 %v3076, 16
  %v3406 = vrot.slane %v3404, 4
  %v3407 = vshll.u32 %v3076, 16
  %v3409 = vrot.slane %v3407, 5
  %v3410 = vor.u32 %v3406, %v3409
  %v3411 = vrot.slane %v3410, 4
  %v3413 = vshll.u32 %v3080, 16
  %v3415 = vrot.slane %v3413, 5
  %v3416 = vsel %vm1853, %v3411, %v3415
  %s3417 = scalar_lea.vmem %s1, 1536
  %v3418 = vld [vmem:[%s3417] sm:$0xf]
  %v3419 = vld [vmem:[%s3417 + $0x4] sm:$0xf]
  %v3420 = vld [vmem:[%s3417 + $0x8] sm:$0xf]
  %v3421 = vld [vmem:[%s3417 + $0xc] sm:$0xf]
  %v3422 = vld [vmem:[%s3417 + $0x10] sm:$0xf]
  %v3423 = vld [vmem:[%s3417 + $0x14] sm:$0xf]
  %v3424 = vld [vmem:[%s3417 + $0x18] sm:$0xf]
  %v3425 = vld [vmem:[%s3417 + $0x1c] sm:$0xf]
  %v3426 = vld [vmem:[%s3417 + $0x20] sm:$0xf]
  %v3427 = vld [vmem:[%s3417 + $0x24] sm:$0xf]
  %v3428 = vld [vmem:[%s3417 + $0x28] sm:$0xf]
  %v3429 = vld [vmem:[%s3417 + $0x2c] sm:$0xf]
  %v3430 = vld [vmem:[%s3417 + $0x30] sm:$0xf]
  %v3431 = vld [vmem:[%s3417 + $0x34] sm:$0xf]
  %v3432 = vld [vmem:[%s3417 + $0x38] sm:$0xf]
  %v3433 = vld [vmem:[%s3417 + $0x3c] sm:$0xf]
  %v3434 = vld [vmem:[%s3417 + $0x40] sm:$0xf]
  %v3435 = vld [vmem:[%s3417 + $0x44] sm:$0xf]
  %v3436 = vld [vmem:[%s3417 + $0x48] sm:$0xf]
  %v3437 = vld [vmem:[%s3417 + $0x4c] sm:$0xf]
  %v3438 = vld [vmem:[%s3417 + $0x50] sm:$0xf]
  %v3439 = vld [vmem:[%s3417 + $0x54] sm:$0xf]
  %v3440 = vld [vmem:[%s3417 + $0x58] sm:$0xf]
  %v3441 = vld [vmem:[%s3417 + $0x5c] sm:$0xf]
  %v3442 = vld [vmem:[%s3417 + $0x60] sm:$0xf]
  %v3443 = vld [vmem:[%s3417 + $0x64] sm:$0xf]
  %v3444 = vld [vmem:[%s3417 + $0x68] sm:$0xf]
  %v3445 = vld [vmem:[%s3417 + $0x6c] sm:$0xf]
  %v3446 = vld [vmem:[%s3417 + $0x70] sm:$0xf]
  %v3447 = vld [vmem:[%s3417 + $0x74] sm:$0xf]
  %v3448 = vld [vmem:[%s3417 + $0x78] sm:$0xf]
  %v3449 = vld [vmem:[%s3417 + $0x7c] sm:$0xf]
  %v3450 = vld [vmem:[%s3417 + $0x80] sm:$0xf]
  %v3451 = vld [vmem:[%s3417 + $0x84] sm:$0xf]
  %v3452 = vld [vmem:[%s3417 + $0x88] sm:$0xf]
  %v3453 = vld [vmem:[%s3417 + $0x8c] sm:$0xf]
  %v3454 = vld [vmem:[%s3417 + $0x90] sm:$0xf]
  %v3455 = vld [vmem:[%s3417 + $0x94] sm:$0xf]
  %v3456 = vld [vmem:[%s3417 + $0x98] sm:$0xf]
  %v3457 = vld [vmem:[%s3417 + $0x9c] sm:$0xf]
  %v3458 = vld [vmem:[%s3417 + $0xa0] sm:$0xf]
  %v3459 = vld [vmem:[%s3417 + $0xa4] sm:$0xf]
  %v3460 = vld [vmem:[%s3417 + $0xa8] sm:$0xf]
  %v3461 = vld [vmem:[%s3417 + $0xac] sm:$0xf]
  %v3462 = vld [vmem:[%s3417 + $0xb0] sm:$0xf]
  %v3463 = vld [vmem:[%s3417 + $0xb4] sm:$0xf]
  %v3464 = vld [vmem:[%s3417 + $0xb8] sm:$0xf]
  %v3465 = vld [vmem:[%s3417 + $0xbc] sm:$0xf]
  %v3466 = vld [vmem:[%s3417 + $0xc0] sm:$0xf]
  %v3467 = vld [vmem:[%s3417 + $0xc4] sm:$0xf]
  %v3468 = vld [vmem:[%s3417 + $0xc8] sm:$0xf]
  %v3469 = vld [vmem:[%s3417 + $0xcc] sm:$0xf]
  %v3470 = vld [vmem:[%s3417 + $0xd0] sm:$0xf]
  %v3471 = vld [vmem:[%s3417 + $0xd4] sm:$0xf]
  %v3472 = vld [vmem:[%s3417 + $0xd8] sm:$0xf]
  %v3473 = vld [vmem:[%s3417 + $0xdc] sm:$0xf]
  %v3474 = vld [vmem:[%s3417 + $0xe0] sm:$0xf]
  %v3475 = vld [vmem:[%s3417 + $0xe4] sm:$0xf]
  %v3476 = vld [vmem:[%s3417 + $0xe8] sm:$0xf]
  %v3477 = vld [vmem:[%s3417 + $0xec] sm:$0xf]
  %v3478 = vld [vmem:[%s3417 + $0xf0] sm:$0xf]
  %v3479 = vld [vmem:[%s3417 + $0xf4] sm:$0xf]
  %v3480 = vld [vmem:[%s3417 + $0xf8] sm:$0xf]
  %v3481 = vld [vmem:[%s3417 + $0xfc] sm:$0xf]
  %v3482 = vld [vmem:[%s3417 + $0x100] sm:$0xf]
  %v3483 = vld [vmem:[%s3417 + $0x104] sm:$0xf]
  %v3484 = vld [vmem:[%s3417 + $0x108] sm:$0xf]
  %v3485 = vld [vmem:[%s3417 + $0x10c] sm:$0xf]
  %v3486 = vld [vmem:[%s3417 + $0x110] sm:$0xf]
  %v3487 = vld [vmem:[%s3417 + $0x114] sm:$0xf]
  %v3488 = vld [vmem:[%s3417 + $0x118] sm:$0xf]
  %v3489 = vld [vmem:[%s3417 + $0x11c] sm:$0xf]
  %v3490 = vld [vmem:[%s3417 + $0x120] sm:$0xf]
  %v3491 = vld [vmem:[%s3417 + $0x124] sm:$0xf]
  %v3492 = vld [vmem:[%s3417 + $0x128] sm:$0xf]
  %v3493 = vld [vmem:[%s3417 + $0x12c] sm:$0xf]
  %v3494 = vld [vmem:[%s3417 + $0x130] sm:$0xf]
  %v3495 = vld [vmem:[%s3417 + $0x134] sm:$0xf]
  %v3496 = vld [vmem:[%s3417 + $0x138] sm:$0xf]
  %v3497 = vld [vmem:[%s3417 + $0x13c] sm:$0xf]
  %v3498 = vld [vmem:[%s3417 + $0x140] sm:$0xf]
  %v3499 = vld [vmem:[%s3417 + $0x144] sm:$0xf]
  %v3500 = vld [vmem:[%s3417 + $0x148] sm:$0xf]
  %v3501 = vld [vmem:[%s3417 + $0x14c] sm:$0xf]
  %v3502 = vld [vmem:[%s3417 + $0x150] sm:$0xf]
  %v3503 = vld [vmem:[%s3417 + $0x154] sm:$0xf]
  %v3504 = vld [vmem:[%s3417 + $0x158] sm:$0xf]
  %v3505 = vld [vmem:[%s3417 + $0x15c] sm:$0xf]
  %v3506 = vld [vmem:[%s3417 + $0x160] sm:$0xf]
  %v3507 = vld [vmem:[%s3417 + $0x164] sm:$0xf]
  %v3508 = vld [vmem:[%s3417 + $0x168] sm:$0xf]
  %v3509 = vld [vmem:[%s3417 + $0x16c] sm:$0xf]
  %v3510 = vld [vmem:[%s3417 + $0x170] sm:$0xf]
  %v3511 = vld [vmem:[%s3417 + $0x174] sm:$0xf]
  %v3512 = vld [vmem:[%s3417 + $0x178] sm:$0xf]
  %v3513 = vld [vmem:[%s3417 + $0x17c] sm:$0xf]
  %v3514 = vld [vmem:[%s3417 + $0x180] sm:$0xf]
  %v3515 = vld [vmem:[%s3417 + $0x184] sm:$0xf]
  %v3516 = vld [vmem:[%s3417 + $0x188] sm:$0xf]
  %v3517 = vld [vmem:[%s3417 + $0x18c] sm:$0xf]
  %v3518 = vld [vmem:[%s3417 + $0x190] sm:$0xf]
  %v3519 = vld [vmem:[%s3417 + $0x194] sm:$0xf]
  %v3520 = vld [vmem:[%s3417 + $0x198] sm:$0xf]
  %v3521 = vld [vmem:[%s3417 + $0x19c] sm:$0xf]
  %v3522 = vld [vmem:[%s3417 + $0x1a0] sm:$0xf]
  %v3523 = vld [vmem:[%s3417 + $0x1a4] sm:$0xf]
  %v3524 = vld [vmem:[%s3417 + $0x1a8] sm:$0xf]
  %v3525 = vld [vmem:[%s3417 + $0x1ac] sm:$0xf]
  %v3526 = vld [vmem:[%s3417 + $0x1b0] sm:$0xf]
  %v3527 = vld [vmem:[%s3417 + $0x1b4] sm:$0xf]
  %v3528 = vld [vmem:[%s3417 + $0x1b8] sm:$0xf]
  %v3529 = vld [vmem:[%s3417 + $0x1bc] sm:$0xf]
  %v3530 = vld [vmem:[%s3417 + $0x1c0] sm:$0xf]
  %v3531 = vld [vmem:[%s3417 + $0x1c4] sm:$0xf]
  %v3532 = vld [vmem:[%s3417 + $0x1c8] sm:$0xf]
  %v3533 = vld [vmem:[%s3417 + $0x1cc] sm:$0xf]
  %v3534 = vld [vmem:[%s3417 + $0x1d0] sm:$0xf]
  %v3535 = vld [vmem:[%s3417 + $0x1d4] sm:$0xf]
  %v3536 = vld [vmem:[%s3417 + $0x1d8] sm:$0xf]
  %v3537 = vld [vmem:[%s3417 + $0x1dc] sm:$0xf]
  %v3538 = vld [vmem:[%s3417 + $0x1e0] sm:$0xf]
  %v3539 = vld [vmem:[%s3417 + $0x1e4] sm:$0xf]
  %v3540 = vld [vmem:[%s3417 + $0x1e8] sm:$0xf]
  %v3541 = vld [vmem:[%s3417 + $0x1ec] sm:$0xf]
  %v3542 = vld [vmem:[%s3417 + $0x1f0] sm:$0xf]
  %v3543 = vld [vmem:[%s3417 + $0x1f4] sm:$0xf]
  %v3544 = vld [vmem:[%s3417 + $0x1f8] sm:$0xf]
  %v3545 = vld [vmem:[%s3417 + $0x1fc] sm:$0xf]
  %v3546 = vunpack.c.l.b16 %v3094
  %v3547 = vunpack.c.h.b16 %v3094
  %v3548 = vunpack.c.l.b16 %v3108
  %v3549 = vunpack.c.h.b16 %v3108
  %v3550 = vunpack.c.l.b16 %v3122
  %v3551 = vunpack.c.h.b16 %v3122
  %v3552 = vunpack.c.l.b16 %v3136
  %v3553 = vunpack.c.h.b16 %v3136
  %v3554 = vunpack.c.l.b16 %v3150
  %v3555 = vunpack.c.h.b16 %v3150
  %v3556 = vunpack.c.l.b16 %v3164
  %v3557 = vunpack.c.h.b16 %v3164
  %v3558 = vunpack.c.l.b16 %v3178
  %v3559 = vunpack.c.h.b16 %v3178
  %v3560 = vunpack.c.l.b16 %v3192
  %v3561 = vunpack.c.h.b16 %v3192
  %v3562 = vunpack.c.l.b16 %v3206
  %v3563 = vunpack.c.h.b16 %v3206
  %v3564 = vunpack.c.l.b16 %v3220
  %v3565 = vunpack.c.h.b16 %v3220
  %v3566 = vunpack.c.l.b16 %v3234
  %v3567 = vunpack.c.h.b16 %v3234
  %v3568 = vunpack.c.l.b16 %v3248
  %v3569 = vunpack.c.h.b16 %v3248
  %v3570 = vunpack.c.l.b16 %v3262
  %v3571 = vunpack.c.h.b16 %v3262
  %v3572 = vunpack.c.l.b16 %v3276
  %v3573 = vunpack.c.h.b16 %v3276
  %v3574 = vunpack.c.l.b16 %v3290
  %v3575 = vunpack.c.h.b16 %v3290
  %v3576 = vunpack.c.l.b16 %v3304
  %v3577 = vunpack.c.h.b16 %v3304
  %v3578 = vunpack.c.l.b16 %v3318
  %v3579 = vunpack.c.h.b16 %v3318
  %v3580 = vunpack.c.l.b16 %v3332
  %v3581 = vunpack.c.h.b16 %v3332
  %v3582 = vunpack.c.l.b16 %v3346
  %v3583 = vunpack.c.h.b16 %v3346
  %v3584 = vunpack.c.l.b16 %v3360
  %v3585 = vunpack.c.h.b16 %v3360
  %v3586 = vunpack.c.l.b16 %v3374
  %v3587 = vunpack.c.h.b16 %v3374
  %v3588 = vunpack.c.l.b16 %v3388
  %v3589 = vunpack.c.h.b16 %v3388
  %v3590 = vunpack.c.l.b16 %v3402
  %v3591 = vunpack.c.h.b16 %v3402
  %v3592 = vunpack.c.l.b16 %v3416
  %v3593 = vunpack.c.h.b16 %v3416
  %v3594 = vpack.c.b16 %v3554, %v3546
  %v3595 = vpack.c.b16 %v3555, %v3547
  %v3596 = vpack.c.b16 %v3556, %v3548
  %v3597 = vpack.c.b16 %v3557, %v3549
  %v3598 = vpack.c.b16 %v3558, %v3550
  %v3599 = vpack.c.b16 %v3559, %v3551
  %v3600 = vpack.c.b16 %v3560, %v3552
  %v3601 = vpack.c.b16 %v3561, %v3553
  %v3602 = vpack.c.b16 %v3570, %v3562
  %v3603 = vpack.c.b16 %v3571, %v3563
  %v3604 = vpack.c.b16 %v3572, %v3564
  %v3605 = vpack.c.b16 %v3573, %v3565
  %v3606 = vpack.c.b16 %v3574, %v3566
  %v3607 = vpack.c.b16 %v3575, %v3567
  %v3608 = vpack.c.b16 %v3576, %v3568
  %v3609 = vpack.c.b16 %v3577, %v3569
  %v3610 = vpack.c.b16 %v3586, %v3578
  %v3611 = vpack.c.b16 %v3587, %v3579
  %v3612 = vpack.c.b16 %v3588, %v3580
  %v3613 = vpack.c.b16 %v3589, %v3581
  %v3614 = vpack.c.b16 %v3590, %v3582
  %v3615 = vpack.c.b16 %v3591, %v3583
  %v3616 = vpack.c.b16 %v3592, %v3584
  %v3617 = vpack.c.b16 %v3593, %v3585
  %v3770 = vunpack.c.l.b16 %v3418
  %v3771 = vunpack.c.l.b16 %v3419
  %v3772 = vunpack.c.l.b16 %v3420
  %v3773 = vunpack.c.l.b16 %v3421
  %v3774 = vunpack.c.l.b16 %v3422
  %v3775 = vunpack.c.l.b16 %v3423
  %v3776 = vunpack.c.l.b16 %v3424
  %v3777 = vunpack.c.l.b16 %v3425
  %v3778 = vunpack.c.l.b16 %v3426
  %v3779 = vunpack.c.l.b16 %v3427
  %v3780 = vunpack.c.l.b16 %v3428
  %v3781 = vunpack.c.l.b16 %v3429
  %v3782 = vunpack.c.l.b16 %v3430
  %v3783 = vunpack.c.l.b16 %v3431
  %v3784 = vunpack.c.l.b16 %v3432
  %v3785 = vunpack.c.l.b16 %v3433
  %v3786 = vunpack.c.l.b16 %v3434
  %v3787 = vunpack.c.l.b16 %v3435
  %v3788 = vunpack.c.l.b16 %v3436
  %v3789 = vunpack.c.l.b16 %v3437
  %v3790 = vunpack.c.l.b16 %v3438
  %v3791 = vunpack.c.l.b16 %v3439
  %v3792 = vunpack.c.l.b16 %v3440
  %v3793 = vunpack.c.l.b16 %v3441
  %v3794 = vunpack.c.l.b16 %v3442
  %v3795 = vunpack.c.l.b16 %v3443
  %v3796 = vunpack.c.l.b16 %v3444
  %v3797 = vunpack.c.l.b16 %v3445
  %v3798 = vunpack.c.l.b16 %v3446
  %v3799 = vunpack.c.l.b16 %v3447
  %v3800 = vunpack.c.l.b16 %v3448
  %v3801 = vunpack.c.l.b16 %v3449
  %v3802 = vunpack.c.l.b16 %v3450
  %v3803 = vunpack.c.l.b16 %v3451
  %v3804 = vunpack.c.l.b16 %v3452
  %v3805 = vunpack.c.l.b16 %v3453
  %v3806 = vunpack.c.l.b16 %v3454
  %v3807 = vunpack.c.l.b16 %v3455
  %v3808 = vunpack.c.l.b16 %v3456
  %v3809 = vunpack.c.l.b16 %v3457
  %v3810 = vunpack.c.l.b16 %v3458
  %v3811 = vunpack.c.l.b16 %v3459
  %v3812 = vunpack.c.l.b16 %v3460
  %v3813 = vunpack.c.l.b16 %v3461
  %v3814 = vunpack.c.l.b16 %v3462
  %v3815 = vunpack.c.l.b16 %v3463
  %v3816 = vunpack.c.l.b16 %v3464
  %v3817 = vunpack.c.l.b16 %v3465
  %v3818 = vunpack.c.l.b16 %v3466
  %v3819 = vunpack.c.l.b16 %v3467
  %v3820 = vunpack.c.l.b16 %v3468
  %v3821 = vunpack.c.l.b16 %v3469
  %v3822 = vunpack.c.l.b16 %v3470
  %v3823 = vunpack.c.l.b16 %v3471
  %v3824 = vunpack.c.l.b16 %v3472
  %v3825 = vunpack.c.l.b16 %v3473
  %v3826 = vunpack.c.l.b16 %v3474
  %v3827 = vunpack.c.l.b16 %v3475
  %v3828 = vunpack.c.l.b16 %v3476
  %v3829 = vunpack.c.l.b16 %v3477
  %v3830 = vunpack.c.l.b16 %v3478
  %v3831 = vunpack.c.l.b16 %v3479
  %v3832 = vunpack.c.l.b16 %v3480
  %v3833 = vunpack.c.l.b16 %v3481
  %v3834 = vunpack.c.l.b16 %v3482
  %v3835 = vunpack.c.l.b16 %v3483
  %v3836 = vunpack.c.l.b16 %v3484
  %v3837 = vunpack.c.l.b16 %v3485
  %v3838 = vunpack.c.l.b16 %v3486
  %v3839 = vunpack.c.l.b16 %v3487
  %v3840 = vunpack.c.l.b16 %v3488
  %v3841 = vunpack.c.l.b16 %v3489
  %v3842 = vunpack.c.l.b16 %v3490
  %v3843 = vunpack.c.l.b16 %v3491
  %v3844 = vunpack.c.l.b16 %v3492
  %v3845 = vunpack.c.l.b16 %v3493
  %v3846 = vunpack.c.l.b16 %v3494
  %v3847 = vunpack.c.l.b16 %v3495
  %v3848 = vunpack.c.l.b16 %v3496
  %v3849 = vunpack.c.l.b16 %v3497
  %v3850 = vunpack.c.l.b16 %v3498
  %v3851 = vunpack.c.l.b16 %v3499
  %v3852 = vunpack.c.l.b16 %v3500
  %v3853 = vunpack.c.l.b16 %v3501
  %v3854 = vunpack.c.l.b16 %v3502
  %v3855 = vunpack.c.l.b16 %v3503
  %v3856 = vunpack.c.l.b16 %v3504
  %v3857 = vunpack.c.l.b16 %v3505
  %v3858 = vunpack.c.l.b16 %v3506
  %v3859 = vunpack.c.l.b16 %v3507
  %v3860 = vunpack.c.l.b16 %v3508
  %v3861 = vunpack.c.l.b16 %v3509
  %v3862 = vunpack.c.l.b16 %v3510
  %v3863 = vunpack.c.l.b16 %v3511
  %v3864 = vunpack.c.l.b16 %v3512
  %v3865 = vunpack.c.l.b16 %v3513
  %v3866 = vunpack.c.l.b16 %v3514
  %v3867 = vunpack.c.l.b16 %v3515
  %v3868 = vunpack.c.l.b16 %v3516
  %v3869 = vunpack.c.l.b16 %v3517
  %v3870 = vunpack.c.l.b16 %v3518
  %v3871 = vunpack.c.l.b16 %v3519
  %v3872 = vunpack.c.l.b16 %v3520
  %v3873 = vunpack.c.l.b16 %v3521
  %v3874 = vunpack.c.l.b16 %v3522
  %v3875 = vunpack.c.l.b16 %v3523
  %v3876 = vunpack.c.l.b16 %v3524
  %v3877 = vunpack.c.l.b16 %v3525
  %v3878 = vunpack.c.l.b16 %v3526
  %v3879 = vunpack.c.l.b16 %v3527
  %v3880 = vunpack.c.l.b16 %v3528
  %v3881 = vunpack.c.l.b16 %v3529
  %v3882 = vunpack.c.l.b16 %v3530
  %v3883 = vunpack.c.l.b16 %v3531
  %v3884 = vunpack.c.l.b16 %v3532
  %v3885 = vunpack.c.l.b16 %v3533
  %v3886 = vunpack.c.l.b16 %v3534
  %v3887 = vunpack.c.l.b16 %v3535
  %v3888 = vunpack.c.l.b16 %v3536
  %v3889 = vunpack.c.l.b16 %v3537
  %v3890 = vunpack.c.l.b16 %v3538
  %v3891 = vunpack.c.l.b16 %v3539
  %v3892 = vunpack.c.l.b16 %v3540
  %v3893 = vunpack.c.l.b16 %v3541
  %v3894 = vunpack.c.l.b16 %v3542
  %v3895 = vunpack.c.l.b16 %v3543
  %v3896 = vunpack.c.l.b16 %v3544
  %v3897 = vunpack.c.l.b16 %v3545
  %v3898 = vpack.c.b16 %v3771, %v3770
  %v3899 = vpack.c.b16 %v3773, %v3772
  %v3900 = vpack.c.b16 %v3775, %v3774
  %v3901 = vpack.c.b16 %v3777, %v3776
  %v3902 = vpack.c.b16 %v3779, %v3778
  %v3903 = vpack.c.b16 %v3781, %v3780
  %v3904 = vpack.c.b16 %v3783, %v3782
  %v3905 = vpack.c.b16 %v3785, %v3784
  %v3906 = vpack.c.b16 %v3787, %v3786
  %v3907 = vpack.c.b16 %v3789, %v3788
  %v3908 = vpack.c.b16 %v3791, %v3790
  %v3909 = vpack.c.b16 %v3793, %v3792
  %v3910 = vpack.c.b16 %v3795, %v3794
  %v3911 = vpack.c.b16 %v3797, %v3796
  %v3912 = vpack.c.b16 %v3799, %v3798
  %v3913 = vpack.c.b16 %v3801, %v3800
  %v3914 = vpack.c.b16 %v3803, %v3802
  %v3915 = vpack.c.b16 %v3805, %v3804
  %v3916 = vpack.c.b16 %v3807, %v3806
  %v3917 = vpack.c.b16 %v3809, %v3808
  %v3918 = vpack.c.b16 %v3811, %v3810
  %v3919 = vpack.c.b16 %v3813, %v3812
  %v3920 = vpack.c.b16 %v3815, %v3814
  %v3921 = vpack.c.b16 %v3817, %v3816
  %v3922 = vpack.c.b16 %v3819, %v3818
  %v3923 = vpack.c.b16 %v3821, %v3820
  %v3924 = vpack.c.b16 %v3823, %v3822
  %v3925 = vpack.c.b16 %v3825, %v3824
  %v3926 = vpack.c.b16 %v3827, %v3826
  %v3927 = vpack.c.b16 %v3829, %v3828
  %v3928 = vpack.c.b16 %v3831, %v3830
  %v3929 = vpack.c.b16 %v3833, %v3832
  %v3930 = vpack.c.b16 %v3835, %v3834
  %v3931 = vpack.c.b16 %v3837, %v3836
  %v3932 = vpack.c.b16 %v3839, %v3838
  %v3933 = vpack.c.b16 %v3841, %v3840
  %v3934 = vpack.c.b16 %v3843, %v3842
  %v3935 = vpack.c.b16 %v3845, %v3844
  %v3936 = vpack.c.b16 %v3847, %v3846
  %v3937 = vpack.c.b16 %v3849, %v3848
  %v3938 = vpack.c.b16 %v3851, %v3850
  %v3939 = vpack.c.b16 %v3853, %v3852
  %v3940 = vpack.c.b16 %v3855, %v3854
  %v3941 = vpack.c.b16 %v3857, %v3856
  %v3942 = vpack.c.b16 %v3859, %v3858
  %v3943 = vpack.c.b16 %v3861, %v3860
  %v3944 = vpack.c.b16 %v3863, %v3862
  %v3945 = vpack.c.b16 %v3865, %v3864
  %v3946 = vpack.c.b16 %v3867, %v3866
  %v3947 = vpack.c.b16 %v3869, %v3868
  %v3948 = vpack.c.b16 %v3871, %v3870
  %v3949 = vpack.c.b16 %v3873, %v3872
  %v3950 = vpack.c.b16 %v3875, %v3874
  %v3951 = vpack.c.b16 %v3877, %v3876
  %v3952 = vpack.c.b16 %v3879, %v3878
  %v3953 = vpack.c.b16 %v3881, %v3880
  %v3954 = vpack.c.b16 %v3883, %v3882
  %v3955 = vpack.c.b16 %v3885, %v3884
  %v3956 = vpack.c.b16 %v3887, %v3886
  %v3957 = vpack.c.b16 %v3889, %v3888
  %v3958 = vpack.c.b16 %v3891, %v3890
  %v3959 = vpack.c.b16 %v3893, %v3892
  %v3960 = vpack.c.b16 %v3895, %v3894
  %v3961 = vpack.c.b16 %v3897, %v3896
  %4026 = vmatprep.subr.bf16.mxu0 0
  %4027 = vmatpush1.bf16.msra.mxu0 %v3898
  %4028 = vmatprep.subr.bf16.mxu0 0
  %4029 = vmatpush1.bf16.msra.mxu0 %v3899
  %4030 = vmatprep.subr.bf16.mxu0 0
  %4031 = vmatpush1.bf16.msra.mxu0 %v3900
  %4032 = vmatprep.subr.bf16.mxu0 0
  %4033 = vmatpush1.bf16.msra.mxu0 %v3901
  %4034 = vmatprep.subr.bf16.mxu0 0
  %4035 = vmatpush1.bf16.msra.mxu0 %v3902
  %4036 = vmatprep.subr.bf16.mxu0 0
  %4037 = vmatpush1.bf16.msra.mxu0 %v3903
  %4038 = vmatprep.subr.bf16.mxu0 0
  %4039 = vmatpush1.bf16.msra.mxu0 %v3904
  %4040 = vmatprep.subr.bf16.mxu0 0
  %4041 = vmatpush1.bf16.msra.mxu0 %v3905
  %4042 = vmatprep.subr.bf16.mxu0 0
  %4043 = vmatpush1.bf16.msra.mxu0 %v3906
  %4044 = vmatprep.subr.bf16.mxu0 0
  %4045 = vmatpush1.bf16.msra.mxu0 %v3907
  %4046 = vmatprep.subr.bf16.mxu0 0
  %4047 = vmatpush1.bf16.msra.mxu0 %v3908
  %4048 = vmatprep.subr.bf16.mxu0 0
  %4049 = vmatpush1.bf16.msra.mxu0 %v3909
  %4050 = vmatprep.subr.bf16.mxu0 0
  %4051 = vmatpush1.bf16.msra.mxu0 %v3910
  %4052 = vmatprep.subr.bf16.mxu0 0
  %4053 = vmatpush1.bf16.msra.mxu0 %v3911
  %4054 = vmatprep.subr.bf16.mxu0 0
  %4055 = vmatpush1.bf16.msra.mxu0 %v3912
  %4056 = vmatprep.subr.bf16.mxu0 0
  %4057 = vmatpush1.bf16.msra.mxu0 %v3913
  %4058 = vmatprep.mubr.bf16.mxu0 %v3595
  %4059 = vmatmul.mubr.bf16.gmra.mrb[0].mxu0 %v3594
  %v4060 = vpop.f32.mrb[0].mxu0
  %v4061 = vadd.f32 0.0, %v4060
  %v4062 = vpop.f32.mrb[0].mxu0
  %v4063 = vpop.f32.mrb[0].mxu0
  %v4064 = vadd.f32 0.0, %v4063
  %v4065 = vpop.f32.mrb[0].mxu0
  %4066 = vmatprep.mubr.bf16.mxu0 %v3603
  %4067 = vmatmul.mubr.bf16.gmra.mrb[0].mxu0 %v3602
  %v4068 = vpop.f32.mrb[0].mxu0
  %v4069 = vadd.f32 0.0, %v4068
  %v4070 = vpop.f32.mrb[0].mxu0
  %v4071 = vpop.f32.mrb[0].mxu0
  %v4072 = vadd.f32 0.0, %v4071
  %v4073 = vpop.f32.mrb[0].mxu0
  %4074 = vmatprep.mubr.bf16.mxu0 %v3611
  %4075 = vmatmul.mubr.bf16.gmra.mrb[0].mxu0 %v3610
  %v4076 = vpop.f32.mrb[0].mxu0
  %v4077 = vadd.f32 0.0, %v4076
  %v4078 = vpop.f32.mrb[0].mxu0
  %v4079 = vpop.f32.mrb[0].mxu0
  %v4080 = vadd.f32 0.0, %v4079
  %v4081 = vpop.f32.mrb[0].mxu0
  %4082 = vdwg.mxu0
  %4083 = vmatprep.subr.bf16.mxu0 0
  %4084 = vmatpush1.bf16.msra.mxu0 %v3914
  %4085 = vmatprep.subr.bf16.mxu0 0
  %4086 = vmatpush1.bf16.msra.mxu0 %v3915
  %4087 = vmatprep.subr.bf16.mxu0 0
  %4088 = vmatpush1.bf16.msra.mxu0 %v3916
  %4089 = vmatprep.subr.bf16.mxu0 0
  %4090 = vmatpush1.bf16.msra.mxu0 %v3917
  %4091 = vmatprep.subr.bf16.mxu0 0
  %4092 = vmatpush1.bf16.msra.mxu0 %v3918
  %4093 = vmatprep.subr.bf16.mxu0 0
  %4094 = vmatpush1.bf16.msra.mxu0 %v3919
  %4095 = vmatprep.subr.bf16.mxu0 0
  %4096 = vmatpush1.bf16.msra.mxu0 %v3920
  %4097 = vmatprep.subr.bf16.mxu0 0
  %4098 = vmatpush1.bf16.msra.mxu0 %v3921
  %4099 = vmatprep.subr.bf16.mxu0 0
  %4100 = vmatpush1.bf16.msra.mxu0 %v3922
  %4101 = vmatprep.subr.bf16.mxu0 0
  %4102 = vmatpush1.bf16.msra.mxu0 %v3923
  %4103 = vmatprep.subr.bf16.mxu0 0
  %4104 = vmatpush1.bf16.msra.mxu0 %v3924
  %4105 = vmatprep.subr.bf16.mxu0 0
  %4106 = vmatpush1.bf16.msra.mxu0 %v3925
  %4107 = vmatprep.subr.bf16.mxu0 0
  %4108 = vmatpush1.bf16.msra.mxu0 %v3926
  %4109 = vmatprep.subr.bf16.mxu0 0
  %4110 = vmatpush1.bf16.msra.mxu0 %v3927
  %4111 = vmatprep.subr.bf16.mxu0 0
  %4112 = vmatpush1.bf16.msra.mxu0 %v3928
  %4113 = vmatprep.subr.bf16.mxu0 0
  %4114 = vmatpush1.bf16.msra.mxu0 %v3929
  %4115 = vmatprep.mubr.bf16.mxu0 %v3597
  %4116 = vmatmul.mubr.bf16.gmra.mrb[0].mxu0 %v3596
  %v4117 = vpop.f32.mrb[0].mxu0
  %v4118 = vadd.f32 %v4061, %v4117
  %v4119 = vpop.f32.mrb[0].mxu0
  %v4120 = vpop.f32.mrb[0].mxu0
  %v4121 = vadd.f32 %v4064, %v4120
  %v4122 = vpop.f32.mrb[0].mxu0
  %4123 = vmatprep.mubr.bf16.mxu0 %v3605
  %4124 = vmatmul.mubr.bf16.gmra.mrb[0].mxu0 %v3604
  %v4125 = vpop.f32.mrb[0].mxu0
  %v4126 = vadd.f32 %v4069, %v4125
  %v4127 = vpop.f32.mrb[0].mxu0
  %v4128 = vpop.f32.mrb[0].mxu0
  %v4129 = vadd.f32 %v4072, %v4128
  %v4130 = vpop.f32.mrb[0].mxu0
  %4131 = vmatprep.mubr.bf16.mxu0 %v3613
  %4132 = vmatmul.mubr.bf16.gmra.mrb[0].mxu0 %v3612
  %v4133 = vpop.f32.mrb[0].mxu0
  %v4134 = vadd.f32 %v4077, %v4133
  %v4135 = vpop.f32.mrb[0].mxu0
  %v4136 = vpop.f32.mrb[0].mxu0
  %v4137 = vadd.f32 %v4080, %v4136
  %v4138 = vpop.f32.mrb[0].mxu0
  %4139 = vdwg.mxu0
  %4140 = vmatprep.subr.bf16.mxu0 0
  %4141 = vmatpush1.bf16.msra.mxu0 %v3930
  %4142 = vmatprep.subr.bf16.mxu0 0
  %4143 = vmatpush1.bf16.msra.mxu0 %v3931
  %4144 = vmatprep.subr.bf16.mxu0 0
  %4145 = vmatpush1.bf16.msra.mxu0 %v3932
  %4146 = vmatprep.subr.bf16.mxu0 0
  %4147 = vmatpush1.bf16.msra.mxu0 %v3933
  %4148 = vmatprep.subr.bf16.mxu0 0
  %4149 = vmatpush1.bf16.msra.mxu0 %v3934
  %4150 = vmatprep.subr.bf16.mxu0 0
  %4151 = vmatpush1.bf16.msra.mxu0 %v3935
  %4152 = vmatprep.subr.bf16.mxu0 0
  %4153 = vmatpush1.bf16.msra.mxu0 %v3936
  %4154 = vmatprep.subr.bf16.mxu0 0
  %4155 = vmatpush1.bf16.msra.mxu0 %v3937
  %4156 = vmatprep.subr.bf16.mxu0 0
  %4157 = vmatpush1.bf16.msra.mxu0 %v3938
  %4158 = vmatprep.subr.bf16.mxu0 0
  %4159 = vmatpush1.bf16.msra.mxu0 %v3939
  %4160 = vmatprep.subr.bf16.mxu0 0
  %4161 = vmatpush1.bf16.msra.mxu0 %v3940
  %4162 = vmatprep.subr.bf16.mxu0 0
  %4163 = vmatpush1.bf16.msra.mxu0 %v3941
  %4164 = vmatprep.subr.bf16.mxu0 0
  %4165 = vmatpush1.bf16.msra.mxu0 %v3942
  %4166 = vmatprep.subr.bf16.mxu0 0
  %4167 = vmatpush1.bf16.msra.mxu0 %v3943
  %4168 = vmatprep.subr.bf16.mxu0 0
  %4169 = vmatpush1.bf16.msra.mxu0 %v3944
  %4170 = vmatprep.subr.bf16.mxu0 0
  %4171 = vmatpush1.bf16.msra.mxu0 %v3945
  %4172 = vmatprep.mubr.bf16.mxu0 %v3599
  %4173 = vmatmul.mubr.bf16.gmra.mrb[0].mxu0 %v3598
  %v4174 = vpop.f32.mrb[0].mxu0
  %v4175 = vadd.f32 %v4118, %v4174
  %v4176 = vpop.f32.mrb[0].mxu0
  %v4177 = vpop.f32.mrb[0].mxu0
  %v4178 = vadd.f32 %v4121, %v4177
  %v4179 = vpop.f32.mrb[0].mxu0
  %4180 = vmatprep.mubr.bf16.mxu0 %v3607
  %4181 = vmatmul.mubr.bf16.gmra.mrb[0].mxu0 %v3606
  %v4182 = vpop.f32.mrb[0].mxu0
  %v4183 = vadd.f32 %v4126, %v4182
  %v4184 = vpop.f32.mrb[0].mxu0
  %v4185 = vpop.f32.mrb[0].mxu0
  %v4186 = vadd.f32 %v4129, %v4185
  %v4187 = vpop.f32.mrb[0].mxu0
  %4188 = vmatprep.mubr.bf16.mxu0 %v3615
  %4189 = vmatmul.mubr.bf16.gmra.mrb[0].mxu0 %v3614
  %v4190 = vpop.f32.mrb[0].mxu0
  %v4191 = vadd.f32 %v4134, %v4190
  %v4192 = vpop.f32.mrb[0].mxu0
  %v4193 = vpop.f32.mrb[0].mxu0
  %v4194 = vadd.f32 %v4137, %v4193
  %v4195 = vpop.f32.mrb[0].mxu0
  %4196 = vdwg.mxu0
  %4197 = vmatprep.subr.bf16.mxu0 0
  %4198 = vmatpush1.bf16.msra.mxu0 %v3946
  %4199 = vmatprep.subr.bf16.mxu0 0
  %4200 = vmatpush1.bf16.msra.mxu0 %v3947
  %4201 = vmatprep.subr.bf16.mxu0 0
  %4202 = vmatpush1.bf16.msra.mxu0 %v3948
  %4203 = vmatprep.subr.bf16.mxu0 0
  %4204 = vmatpush1.bf16.msra.mxu0 %v3949
  %4205 = vmatprep.subr.bf16.mxu0 0
  %4206 = vmatpush1.bf16.msra.mxu0 %v3950
  %4207 = vmatprep.subr.bf16.mxu0 0
  %4208 = vmatpush1.bf16.msra.mxu0 %v3951
  %4209 = vmatprep.subr.bf16.mxu0 0
  %4210 = vmatpush1.bf16.msra.mxu0 %v3952
  %4211 = vmatprep.subr.bf16.mxu0 0
  %4212 = vmatpush1.bf16.msra.mxu0 %v3953
  %4213 = vmatprep.subr.bf16.mxu0 0
  %4214 = vmatpush1.bf16.msra.mxu0 %v3954
  %4215 = vmatprep.subr.bf16.mxu0 0
  %4216 = vmatpush1.bf16.msra.mxu0 %v3955
  %4217 = vmatprep.subr.bf16.mxu0 0
  %4218 = vmatpush1.bf16.msra.mxu0 %v3956
  %4219 = vmatprep.subr.bf16.mxu0 0
  %4220 = vmatpush1.bf16.msra.mxu0 %v3957
  %4221 = vmatprep.subr.bf16.mxu0 0
  %4222 = vmatpush1.bf16.msra.mxu0 %v3958
  %4223 = vmatprep.subr.bf16.mxu0 0
  %4224 = vmatpush1.bf16.msra.mxu0 %v3959
  %4225 = vmatprep.subr.bf16.mxu0 0
  %4226 = vmatpush1.bf16.msra.mxu0 %v3960
  %4227 = vmatprep.subr.bf16.mxu0 0
  %4228 = vmatpush1.bf16.msra.mxu0 %v3961
  %4229 = vmatprep.mubr.bf16.mxu0 %v3601
  %4230 = vmatmul.mubr.bf16.gmra.mrb[0].mxu0 %v3600
  %v4231 = vpop.f32.mrb[0].mxu0
  %v4232 = vadd.f32 %v4175, %v4231
  %v4233 = vpop.f32.mrb[0].mxu0
  %v4234 = vpop.f32.mrb[0].mxu0
  %v4235 = vadd.f32 %v4178, %v4234
  %v4236 = vpop.f32.mrb[0].mxu0
  %4237 = vmatprep.mubr.bf16.mxu0 %v3609
  %4238 = vmatmul.mubr.bf16.gmra.mrb[0].mxu0 %v3608
  %v4239 = vpop.f32.mrb[0].mxu0
  %v4240 = vadd.f32 %v4183, %v4239
  %v4241 = vpop.f32.mrb[0].mxu0
  %v4242 = vpop.f32.mrb[0].mxu0
  %v4243 = vadd.f32 %v4186, %v4242
  %v4244 = vpop.f32.mrb[0].mxu0
  %4245 = vmatprep.mubr.bf16.mxu0 %v3617
  %4246 = vmatmul.mubr.bf16.gmra.mrb[0].mxu0 %v3616
  %v4247 = vpop.f32.mrb[0].mxu0
  %v4248 = vadd.f32 %v4191, %v4247
  %v4249 = vpop.f32.mrb[0].mxu0
  %v4250 = vpop.f32.mrb[0].mxu0
  %v4251 = vadd.f32 %v4194, %v4250
  %v4252 = vpop.f32.mrb[0].mxu0
  %4253 = vdwg.mxu0
  %v4254 = vadd.f32 %v3027, %v4232
  %v4255 = vadd.f32 %v3028, %v4235
  %v4256 = vadd.f32 %v3029, %v4240
  %v4257 = vadd.f32 %v3030, %v4243
  %v4258 = vadd.f32 %v3031, %v4248
  %v4259 = vadd.f32 %v3032, %v4251
  %4260 = vst [vmem:[%s3] sm:$0xff] %v4254
  %4261 = vst [vmem:[%s3 + $0x8] sm:$0xff] %v4255
  %4262 = vst [vmem:[%s3 + $0x10] sm:$0xff] %v4256
  %4263 = vst [vmem:[%s3 + $0x18] sm:$0xff] %v4257
  %4264 = vst [vmem:[%s3 + $0x20] sm:$0xff] %v4258
  %4265 = vst [vmem:[%s3 + $0x28] sm:$0xff] %v4259
  // Predicated region
  $region14: #{cat_embedding_forward.1} parent=0 // pred_check
    _
  $region15: #{cat_embedding_forward.1} parent=0 // pred_check_branch
    %4267 = sbr.rel (0) target = $region17
  $region16: #{cat_embedding_forward.1} parent=0 // pred_region
    _
  $region17: #{cat_embedding_forward.1} parent=0 // pred_fallthru
    _
  // Predicated region
  $region18: #{cat_embedding_forward.1} parent=0 // pred_check
    _
  $region19: #{cat_embedding_forward.1} parent=0 // pred_check_branch
    %4269 = sbr.rel (0) target = $region21
  $region20: #{cat_embedding_forward.1} parent=0 // pred_region
    _
  $region21: #{cat_embedding_forward.1} parent=0 // pred_fallthru
    _

</llo_original>
